<compile_context>
chip_gen: v7x
topology: tpu7x:2x2x1
jax: 0.10.0
libtpu: 0.0.40
codegen_flags: <defaults>
</compile_context>

<pallas_src>
import numpy as np
import jax
import jax.numpy as jnp
from jax.experimental import pallas as pl
from jax.experimental.pallas import tpu as pltpu


# ------------------------- fused MaxPool + DoubleConv kernel -------------------------
def down_fused_kernel(x_ref, w1_ref, g1_ref, b1_ref, w2_ref, g2_ref, b2_ref, o_ref):
    # x_ref: (H, W, N, Cin) f32   w*: (9*Ci, Co)   g/b: (1, Co)   o_ref: (Cout, Hp*Wp*N)
    H, W, N, Cin = x_ref.shape
    Hp, Wp = H // 2, W // 2
    M = Hp * Wp * N
    Cmid = w1_ref.shape[-1]

    # ---- MaxPool2d(2): pool axes are untiled leading dims -> pure vreg max ----
    x = x_ref[...]
    xh = x.reshape(Hp, 2, W, N, Cin)                   # split H (leading dim, no relayout)
    rmax = jnp.maximum(xh[:, 0], xh[:, 1])             # (Hp, W, N, Cin)
    xw = rmax.reshape(Hp, Wp, 2, N, Cin)               # split W (leading dim, no relayout)
    pooled = jnp.maximum(xw[:, :, 0], xw[:, :, 1])     # (Hp, Wp, N, Cin)

    def conv3x3_bn_relu(xin, w_ref, g_ref, b_ref):
        # xin: (Hp, Wp, N, Ci) -> (M, Co) after conv + BN(train stats) + ReLU
        ci = xin.shape[-1]
        # zero "padding=1" built in registers via leading-dim concats (no scratch)
        zr = jnp.zeros((1, Wp, N, ci), jnp.float32)
        ph = jnp.concatenate([zr, xin, zr], axis=0)                # (Hp+2, Wp, N, Ci)
        zc = jnp.zeros((Hp + 2, 1, N, ci), jnp.float32)
        padded = jnp.concatenate([zc, ph, zc], axis=1)             # (Hp+2, Wp+2, N, Ci)
        # im2col: 9 shifted windows concatenated on the channel axis -> ONE matmul
        taps = [padded[dy:dy + Hp, dx:dx + Wp]
                for dy in range(3) for dx in range(3)]
        patches = jnp.concatenate(taps, axis=-1)                   # (Hp, Wp, N, 9*Ci)
        patches = patches.reshape(M, 9 * ci)
        acc = jnp.dot(patches, w_ref[...],
                      preferred_element_type=jnp.float32)          # (M, Co)
        # BatchNorm: one-pass batch stats over N*H*W (biased var), affine, ReLU
        inv_m = 1.0 / M
        s = jnp.sum(acc, axis=0, keepdims=True)
        ss = jnp.sum(acc * acc, axis=0, keepdims=True)
        mean = s * inv_m
        var = ss * inv_m - mean * mean
        scale = jax.lax.rsqrt(var + 1e-5) * g_ref[...]
        return jnp.maximum((acc - mean) * scale + b_ref[...], 0.0)  # (M, Co)

    y1 = conv3x3_bn_relu(pooled, w1_ref, g1_ref, b1_ref)            # (M, Cmid)
    y2 = conv3x3_bn_relu(y1.reshape(Hp, Wp, N, Cmid),
                         w2_ref, g2_ref, b2_ref)                    # (M, Cout)
    # lane-dense store: (Cout, Hp*Wp*N)
    o_ref[...] = y2.T


# --------------------------------------- wrapper ---------------------------------------
def down_forward(x_nchw, params):
    """Down(in_ch, out_ch).forward.  x_nchw: (N, Cin, H, W) -> (N, Cout, H/2, W/2)."""
    w1, g1, b1, w2, g2, b2 = params        # w: (3,3,ci,co) HWIO ; g/b: (1, co)
    N, Cin, H, W = x_nchw.shape
    Hp, Wp = H // 2, W // 2
    Cmid, Cout = w1.shape[-1], w2.shape[-1]
    M = Hp * Wp * N

    # single cheap layout op: put the pooling axes (H, W) on the leading dims
    x_hwnc = jnp.transpose(x_nchw, (2, 3, 0, 1)).astype(jnp.float32)
    w1r = w1.reshape(9 * Cin, Cmid)        # row = (dy*3+dx)*Cin + ci
    w2r = w2.reshape(9 * Cmid, Cout)

    vmem = pl.BlockSpec(memory_space=pltpu.MemorySpace.VMEM)
    out2d = pl.pallas_call(
        down_fused_kernel,
        out_shape=jax.ShapeDtypeStruct((Cout, M), jnp.float32),
        in_specs=[vmem] * 7,
        out_specs=vmem,
        compiler_params=pltpu.CompilerParams(vmem_limit_bytes=32 * 1024 * 1024),
    )(x_hwnc, w1r, g1, b1, w2r, g2, b2)

    # (Cout, Hp*Wp*N) -> (Cout, Hp, Wp, N) -> NCHW
    return jnp.transpose(out2d.reshape(Cout, Hp, Wp, N), (3, 0, 1, 2))


# ----------------------------------- pure-JAX reference -----------------------------------
def ref_down(x_nchw, params):
    w1, g1, b1, w2, g2, b2 = params
    x = jnp.transpose(x_nchw, (0, 2, 3, 1))                          # NHWC
    pooled = jax.lax.reduce_window(x, -jnp.inf, jax.lax.max,
                                   (1, 2, 2, 1), (1, 2, 2, 1), 'VALID')

    def conv_bn_relu(xin, w, g, b):
        y = jax.lax.conv_general_dilated(
            xin, w, (1, 1), 'SAME',
            dimension_numbers=('NHWC', 'HWIO', 'NHWC'),
            precision=jax.lax.Precision.HIGHEST)
        mean = jnp.mean(y, axis=(0, 1, 2), keepdims=True)
        var = jnp.mean(jnp.square(y - mean), axis=(0, 1, 2), keepdims=True)
        yh = (y - mean) * jax.lax.rsqrt(var + 1e-5)
        return jnp.maximum(yh * g.reshape(1, 1, 1, -1) + b.reshape(1, 1, 1, -1), 0.0)

    y = conv_bn_relu(pooled, w1, g1, b1)
    y = conv_bn_relu(y, w2, g2, b2)
    return jnp.transpose(y, (0, 3, 1, 2))


# --------------------------------------------- main ---------------------------------------------
if __name__ == "__main__":
    N, Cin, H, W = 2, 4, 16, 16            # Down(in_channels=4, out_channels=8)
    Cmid = Cout = 8

    key = jax.random.PRNGKey(0)
    kx, k1, k2 = jax.random.split(key, 3)
    x = jax.random.normal(kx, (N, Cin, H, W), jnp.float32)

    # conv weights: uniform kaiming-like bound; BN: gamma=1, beta=0 (PyTorch default init)
    bw1 = 1.0 / (Cin * 9) ** 0.5
    bw2 = 1.0 / (Cmid * 9) ** 0.5
    w1 = jax.random.uniform(k1, (3, 3, Cin, Cmid), jnp.float32, -bw1, bw1)   # HWIO
    w2 = jax.random.uniform(k2, (3, 3, Cmid, Cout), jnp.float32, -bw2, bw2)  # HWIO
    g1 = jnp.ones((1, Cmid), jnp.float32)
    b1 = jnp.zeros((1, Cmid), jnp.float32)
    g2 = jnp.ones((1, Cout), jnp.float32)
    b2 = jnp.zeros((1, Cout), jnp.float32)
    params = (w1, g1, b1, w2, g2, b2)

    out = jax.block_until_ready(down_forward(x, params))
    ref = jax.block_until_ready(ref_down(x, params))

    assert out.shape == (N, Cout, H // 2, W // 2), out.shape
    np.testing.assert_allclose(np.asarray(out), np.asarray(ref), atol=2e-2, rtol=2e-2)
    print("KERNEL_OK")
</pallas_src>

<mosaic_0001>
module attributes {stable_mosaic.version = 11 : i64} {
  func.func @down_fused_kernel(%arg0: memref<16x16x2x4xf32, #tpu.memory_space<vmem>>, %arg1: memref<36x8xf32, #tpu.memory_space<vmem>>, %arg2: memref<1x8xf32, #tpu.memory_space<vmem>>, %arg3: memref<1x8xf32, #tpu.memory_space<vmem>>, %arg4: memref<72x8xf32, #tpu.memory_space<vmem>>, %arg5: memref<1x8xf32, #tpu.memory_space<vmem>>, %arg6: memref<1x8xf32, #tpu.memory_space<vmem>>, %arg7: memref<8x128xf32, #tpu.memory_space<vmem>>) attributes {dimension_semantics = [], scalar_prefetch = 0 : i64, scratch_operands = 0 : i64, tpu.core_type = #tpu.core_type<tc>} {
    %c0 = arith.constant 0 : index
    %c0_0 = arith.constant 0 : index
    %c0_1 = arith.constant 0 : index
    %c0_2 = arith.constant 0 : index
    %0 = vector.load %arg0[%c0, %c0_0, %c0_1, %c0_2] : memref<16x16x2x4xf32, #tpu.memory_space<vmem>>, vector<16x16x2x4xf32>
    %1 = vector.shape_cast %0 : vector<16x16x2x4xf32> to vector<8x2x16x2x4xf32>
    %2 = vector.extract_strided_slice %1 {offsets = [0, 0, 0, 0, 0], sizes = [8, 1, 16, 2, 4], strides = [1, 1, 1, 1, 1]} : vector<8x2x16x2x4xf32> to vector<8x1x16x2x4xf32>
    %3 = vector.shape_cast %2 : vector<8x1x16x2x4xf32> to vector<8x16x2x4xf32>
    %4 = vector.extract_strided_slice %1 {offsets = [0, 1, 0, 0, 0], sizes = [8, 1, 16, 2, 4], strides = [1, 1, 1, 1, 1]} : vector<8x2x16x2x4xf32> to vector<8x1x16x2x4xf32>
    %5 = vector.shape_cast %4 : vector<8x1x16x2x4xf32> to vector<8x16x2x4xf32>
    %6 = arith.maximumf %3, %5 : vector<8x16x2x4xf32>
    %7 = vector.shape_cast %6 : vector<8x16x2x4xf32> to vector<8x8x2x2x4xf32>
    %8 = vector.extract_strided_slice %7 {offsets = [0, 0, 0, 0, 0], sizes = [8, 8, 1, 2, 4], strides = [1, 1, 1, 1, 1]} : vector<8x8x2x2x4xf32> to vector<8x8x1x2x4xf32>
    %9 = vector.shape_cast %8 : vector<8x8x1x2x4xf32> to vector<8x8x2x4xf32>
    %10 = vector.extract_strided_slice %7 {offsets = [0, 0, 1, 0, 0], sizes = [8, 8, 1, 2, 4], strides = [1, 1, 1, 1, 1]} : vector<8x8x2x2x4xf32> to vector<8x8x1x2x4xf32>
    %11 = vector.shape_cast %10 : vector<8x8x1x2x4xf32> to vector<8x8x2x4xf32>
    %12 = arith.maximumf %9, %11 : vector<8x8x2x4xf32>
    %cst = arith.constant 0.000000e+00 : f32
    %13 = vector.broadcast %cst : f32 to vector<1x8x2x4xf32>
    %14 = tpu.concatenate %13, %12, %13 in 0 : vector<1x8x2x4xf32>, vector<8x8x2x4xf32>, vector<1x8x2x4xf32> -> vector<10x8x2x4xf32>
    %cst_3 = arith.constant 0.000000e+00 : f32
    %15 = vector.broadcast %cst_3 : f32 to vector<10x1x2x4xf32>
    %16 = tpu.concatenate %15, %14, %15 in 1 : vector<10x1x2x4xf32>, vector<10x8x2x4xf32>, vector<10x1x2x4xf32> -> vector<10x10x2x4xf32>
    %17 = vector.extract_strided_slice %16 {offsets = [0, 0, 0, 0], sizes = [8, 8, 2, 4], strides = [1, 1, 1, 1]} : vector<10x10x2x4xf32> to vector<8x8x2x4xf32>
    %18 = vector.extract_strided_slice %16 {offsets = [0, 1, 0, 0], sizes = [8, 8, 2, 4], strides = [1, 1, 1, 1]} : vector<10x10x2x4xf32> to vector<8x8x2x4xf32>
    %19 = vector.extract_strided_slice %16 {offsets = [0, 2, 0, 0], sizes = [8, 8, 2, 4], strides = [1, 1, 1, 1]} : vector<10x10x2x4xf32> to vector<8x8x2x4xf32>
    %20 = vector.extract_strided_slice %16 {offsets = [1, 0, 0, 0], sizes = [8, 8, 2, 4], strides = [1, 1, 1, 1]} : vector<10x10x2x4xf32> to vector<8x8x2x4xf32>
    %21 = vector.extract_strided_slice %16 {offsets = [1, 1, 0, 0], sizes = [8, 8, 2, 4], strides = [1, 1, 1, 1]} : vector<10x10x2x4xf32> to vector<8x8x2x4xf32>
    %22 = vector.extract_strided_slice %16 {offsets = [1, 2, 0, 0], sizes = [8, 8, 2, 4], strides = [1, 1, 1, 1]} : vector<10x10x2x4xf32> to vector<8x8x2x4xf32>
    %23 = vector.extract_strided_slice %16 {offsets = [2, 0, 0, 0], sizes = [8, 8, 2, 4], strides = [1, 1, 1, 1]} : vector<10x10x2x4xf32> to vector<8x8x2x4xf32>
    %24 = vector.extract_strided_slice %16 {offsets = [2, 1, 0, 0], sizes = [8, 8, 2, 4], strides = [1, 1, 1, 1]} : vector<10x10x2x4xf32> to vector<8x8x2x4xf32>
    %25 = vector.extract_strided_slice %16 {offsets = [2, 2, 0, 0], sizes = [8, 8, 2, 4], strides = [1, 1, 1, 1]} : vector<10x10x2x4xf32> to vector<8x8x2x4xf32>
    %26 = tpu.concatenate %17, %18, %19, %20, %21, %22, %23, %24, %25 in 3 : vector<8x8x2x4xf32>, vector<8x8x2x4xf32>, vector<8x8x2x4xf32>, vector<8x8x2x4xf32>, vector<8x8x2x4xf32>, vector<8x8x2x4xf32>, vector<8x8x2x4xf32>, vector<8x8x2x4xf32>, vector<8x8x2x4xf32> -> vector<8x8x2x36xf32>
    %27 = vector.shape_cast %26 : vector<8x8x2x36xf32> to vector<128x36xf32>
    %c0_4 = arith.constant 0 : index
    %c0_5 = arith.constant 0 : index
    %28 = vector.load %arg1[%c0_4, %c0_5] : memref<36x8xf32, #tpu.memory_space<vmem>>, vector<36x8xf32>
    %cst_6 = arith.constant dense<0.000000e+00> : vector<128x8xf32>
    %29 = tpu.matmul %27, %28, %cst_6 {dimension_numbers = #tpu.dot_dimension_numbers<[1], [0], [0], [1], [0, 0, 1, 1], [], []>} : vector<128x36xf32>, vector<36x8xf32>, vector<128x8xf32> -> vector<128x8xf32>
    %cst_7 = arith.constant dense<0.000000e+00> : vector<8xf32>
    %30 = vector.multi_reduction <add>, %29, %cst_7 [0] : vector<128x8xf32> to vector<8xf32>
    %31 = vector.shape_cast %30 : vector<8xf32> to vector<1x8xf32>
    %32 = arith.mulf %29, %29 : vector<128x8xf32>
    %cst_8 = arith.constant dense<0.000000e+00> : vector<8xf32>
    %33 = vector.multi_reduction <add>, %32, %cst_8 [0] : vector<128x8xf32> to vector<8xf32>
    %34 = vector.shape_cast %33 : vector<8xf32> to vector<1x8xf32>
    %cst_9 = arith.constant 7.812500e-03 : f32
    %35 = vector.broadcast %cst_9 : f32 to vector<1x8xf32>
    %36 = arith.mulf %31, %35 : vector<1x8xf32>
    %cst_10 = arith.constant 7.812500e-03 : f32
    %37 = vector.broadcast %cst_10 : f32 to vector<1x8xf32>
    %38 = arith.mulf %34, %37 : vector<1x8xf32>
    %39 = arith.mulf %36, %36 : vector<1x8xf32>
    %40 = arith.subf %38, %39 : vector<1x8xf32>
    %cst_11 = arith.constant 9.99999974E-6 : f32
    %41 = vector.broadcast %cst_11 : f32 to vector<1x8xf32>
    %42 = arith.addf %40, %41 : vector<1x8xf32>
    %43 = math.rsqrt %42 : vector<1x8xf32>
    %c0_12 = arith.constant 0 : index
    %c0_13 = arith.constant 0 : index
    %44 = vector.load %arg2[%c0_12, %c0_13] : memref<1x8xf32, #tpu.memory_space<vmem>>, vector<1x8xf32>
    %45 = arith.mulf %43, %44 : vector<1x8xf32>
    %46 = vector.broadcast %36 : vector<1x8xf32> to vector<128x8xf32>
    %47 = arith.subf %29, %46 : vector<128x8xf32>
    %48 = vector.broadcast %45 : vector<1x8xf32> to vector<128x8xf32>
    %49 = arith.mulf %47, %48 : vector<128x8xf32>
    %c0_14 = arith.constant 0 : index
    %c0_15 = arith.constant 0 : index
    %50 = vector.load %arg3[%c0_14, %c0_15] : memref<1x8xf32, #tpu.memory_space<vmem>>, vector<1x8xf32>
    %51 = vector.broadcast %50 : vector<1x8xf32> to vector<128x8xf32>
    %52 = arith.addf %49, %51 : vector<128x8xf32>
    %cst_16 = arith.constant 0.000000e+00 : f32
    %53 = vector.broadcast %cst_16 : f32 to vector<128x8xf32>
    %54 = arith.maximumf %52, %53 : vector<128x8xf32>
    %55 = vector.shape_cast %54 : vector<128x8xf32> to vector<8x8x2x8xf32>
    %cst_17 = arith.constant 0.000000e+00 : f32
    %56 = vector.broadcast %cst_17 : f32 to vector<1x8x2x8xf32>
    %57 = tpu.concatenate %56, %55, %56 in 0 : vector<1x8x2x8xf32>, vector<8x8x2x8xf32>, vector<1x8x2x8xf32> -> vector<10x8x2x8xf32>
    %cst_18 = arith.constant 0.000000e+00 : f32
    %58 = vector.broadcast %cst_18 : f32 to vector<10x1x2x8xf32>
    %59 = tpu.concatenate %58, %57, %58 in 1 : vector<10x1x2x8xf32>, vector<10x8x2x8xf32>, vector<10x1x2x8xf32> -> vector<10x10x2x8xf32>
    %60 = vector.extract_strided_slice %59 {offsets = [0, 0, 0, 0], sizes = [8, 8, 2, 8], strides = [1, 1, 1, 1]} : vector<10x10x2x8xf32> to vector<8x8x2x8xf32>
    %61 = vector.extract_strided_slice %59 {offsets = [0, 1, 0, 0], sizes = [8, 8, 2, 8], strides = [1, 1, 1, 1]} : vector<10x10x2x8xf32> to vector<8x8x2x8xf32>
    %62 = vector.extract_strided_slice %59 {offsets = [0, 2, 0, 0], sizes = [8, 8, 2, 8], strides = [1, 1, 1, 1]} : vector<10x10x2x8xf32> to vector<8x8x2x8xf32>
    %63 = vector.extract_strided_slice %59 {offsets = [1, 0, 0, 0], sizes = [8, 8, 2, 8], strides = [1, 1, 1, 1]} : vector<10x10x2x8xf32> to vector<8x8x2x8xf32>
    %64 = vector.extract_strided_slice %59 {offsets = [1, 1, 0, 0], sizes = [8, 8, 2, 8], strides = [1, 1, 1, 1]} : vector<10x10x2x8xf32> to vector<8x8x2x8xf32>
    %65 = vector.extract_strided_slice %59 {offsets = [1, 2, 0, 0], sizes = [8, 8, 2, 8], strides = [1, 1, 1, 1]} : vector<10x10x2x8xf32> to vector<8x8x2x8xf32>
    %66 = vector.extract_strided_slice %59 {offsets = [2, 0, 0, 0], sizes = [8, 8, 2, 8], strides = [1, 1, 1, 1]} : vector<10x10x2x8xf32> to vector<8x8x2x8xf32>
    %67 = vector.extract_strided_slice %59 {offsets = [2, 1, 0, 0], sizes = [8, 8, 2, 8], strides = [1, 1, 1, 1]} : vector<10x10x2x8xf32> to vector<8x8x2x8xf32>
    %68 = vector.extract_strided_slice %59 {offsets = [2, 2, 0, 0], sizes = [8, 8, 2, 8], strides = [1, 1, 1, 1]} : vector<10x10x2x8xf32> to vector<8x8x2x8xf32>
    %69 = tpu.concatenate %60, %61, %62, %63, %64, %65, %66, %67, %68 in 3 : vector<8x8x2x8xf32>, vector<8x8x2x8xf32>, vector<8x8x2x8xf32>, vector<8x8x2x8xf32>, vector<8x8x2x8xf32>, vector<8x8x2x8xf32>, vector<8x8x2x8xf32>, vector<8x8x2x8xf32>, vector<8x8x2x8xf32> -> vector<8x8x2x72xf32>
    %70 = vector.shape_cast %69 : vector<8x8x2x72xf32> to vector<128x72xf32>
    %c0_19 = arith.constant 0 : index
    %c0_20 = arith.constant 0 : index
    %71 = vector.load %arg4[%c0_19, %c0_20] : memref<72x8xf32, #tpu.memory_space<vmem>>, vector<72x8xf32>
    %cst_21 = arith.constant dense<0.000000e+00> : vector<128x8xf32>
    %72 = tpu.matmul %70, %71, %cst_21 {dimension_numbers = #tpu.dot_dimension_numbers<[1], [0], [0], [1], [0, 0, 1, 1], [], []>} : vector<128x72xf32>, vector<72x8xf32>, vector<128x8xf32> -> vector<128x8xf32>
    %cst_22 = arith.constant dense<0.000000e+00> : vector<8xf32>
    %73 = vector.multi_reduction <add>, %72, %cst_22 [0] : vector<128x8xf32> to vector<8xf32>
    %74 = vector.shape_cast %73 : vector<8xf32> to vector<1x8xf32>
    %75 = arith.mulf %72, %72 : vector<128x8xf32>
    %cst_23 = arith.constant dense<0.000000e+00> : vector<8xf32>
    %76 = vector.multi_reduction <add>, %75, %cst_23 [0] : vector<128x8xf32> to vector<8xf32>
    %77 = vector.shape_cast %76 : vector<8xf32> to vector<1x8xf32>
    %cst_24 = arith.constant 7.812500e-03 : f32
    %78 = vector.broadcast %cst_24 : f32 to vector<1x8xf32>
    %79 = arith.mulf %74, %78 : vector<1x8xf32>
    %cst_25 = arith.constant 7.812500e-03 : f32
    %80 = vector.broadcast %cst_25 : f32 to vector<1x8xf32>
    %81 = arith.mulf %77, %80 : vector<1x8xf32>
    %82 = arith.mulf %79, %79 : vector<1x8xf32>
    %83 = arith.subf %81, %82 : vector<1x8xf32>
    %cst_26 = arith.constant 9.99999974E-6 : f32
    %84 = vector.broadcast %cst_26 : f32 to vector<1x8xf32>
    %85 = arith.addf %83, %84 : vector<1x8xf32>
    %86 = math.rsqrt %85 : vector<1x8xf32>
    %c0_27 = arith.constant 0 : index
    %c0_28 = arith.constant 0 : index
    %87 = vector.load %arg5[%c0_27, %c0_28] : memref<1x8xf32, #tpu.memory_space<vmem>>, vector<1x8xf32>
    %88 = arith.mulf %86, %87 : vector<1x8xf32>
    %89 = vector.broadcast %79 : vector<1x8xf32> to vector<128x8xf32>
    %90 = arith.subf %72, %89 : vector<128x8xf32>
    %91 = vector.broadcast %88 : vector<1x8xf32> to vector<128x8xf32>
    %92 = arith.mulf %90, %91 : vector<128x8xf32>
    %c0_29 = arith.constant 0 : index
    %c0_30 = arith.constant 0 : index
    %93 = vector.load %arg6[%c0_29, %c0_30] : memref<1x8xf32, #tpu.memory_space<vmem>>, vector<1x8xf32>
    %94 = vector.broadcast %93 : vector<1x8xf32> to vector<128x8xf32>
    %95 = arith.addf %92, %94 : vector<128x8xf32>
    %cst_31 = arith.constant 0.000000e+00 : f32
    %96 = vector.broadcast %cst_31 : f32 to vector<128x8xf32>
    %97 = arith.maximumf %95, %96 : vector<128x8xf32>
    %98 = tpu.transpose %97, [1, 0] : vector<128x8xf32> -> vector<8x128xf32>
    %c0_32 = arith.constant 0 : index
    %c0_33 = arith.constant 0 : index
    %99 = vector.load %arg7[%c0_32, %c0_33] : memref<8x128xf32, #tpu.memory_space<vmem>>, vector<8x128xf32>
    tpu.vector_store %arg7[%c0_32, %c0_33], %98 {strides = array<i32>} : memref<8x128xf32, #tpu.memory_space<vmem>>, vector<8x128xf32>,
    return
  }
}

</mosaic_0001>

<llo_original>
// kernel: tpu_custom_call.1
$region0: #{tpu_custom_call.1}
  #allocation0 [shape = 'u32[]', space=smem, size = 0x4, offset = 0x4, fixed_abs, tag = 'smem constant byte address 0x4 - core index']
  #allocation1 [shape = 'u32[144,128]{1,0:T(1,128)}', space=vmem, size = 0x12000, scoped, tag = 'internal scratch']
  %s0 = inlined_call_operand.vmem [shape: f32[16,16,2,4], index: 0, kind: input, shape index: {}]
  %s1 = inlined_call_operand.vmem [shape: f32[36,8], index: 1, kind: input, shape index: {}]
  %s2 = inlined_call_operand.vmem [shape: f32[1,8], index: 2, kind: input, shape index: {}]
  %s3 = inlined_call_operand.vmem [shape: f32[1,8], index: 3, kind: input, shape index: {}]
  %s4 = inlined_call_operand.vmem [shape: f32[72,8], index: 4, kind: input, shape index: {}]
  %s5 = inlined_call_operand.vmem [shape: f32[1,8], index: 5, kind: input, shape index: {}]
  %s6 = inlined_call_operand.vmem [shape: f32[1,8], index: 6, kind: input, shape index: {}]
  %s7 = inlined_call_operand.hbm [shape: f32[8,128], index: 7, kind: output, shape index: {}]
  %s8 = sld [smem:[#allocation0]]
  $region38: #{tpu_custom_call.1} parent=0
    _
  %s10 = ssub.s32 1, %s8
  %s11 = scalar_select 0, %s10, %s8
  $region1: #{tpu_custom_call.1} parent=0
    #allocation2 [shape = 'u8[4096]{0}', space=vmem, size = 0x1000, scoped, tag = 'output window, operand 0, single buffered']
    #allocation3 [shape = 's32[1]{0}', space=sflag, size = 0x4, scoped, tag = 'scoped memory for tpu_custom_call.1']
    %12 = vsyncpa [#allocation3], 0
    // Predicated region
    $region2: #{tpu_custom_call.1} parent=1 // pred_check
      _
    $region3: #{tpu_custom_call.1} parent=1 // pred_check_branch
      %14 = sbr.rel (0) target = $region5
    $region4: #{tpu_custom_call.1} parent=1 // pred_region
      _
    $region5: #{tpu_custom_call.1} parent=1 // pred_fallthru
      _
    // Predicated region
    $region6: #{tpu_custom_call.1} parent=1 // pred_check
      _
    $region7: #{tpu_custom_call.1} parent=1 // pred_check_branch
      %16 = sbr.rel (0) target = $region9
    $region8: #{tpu_custom_call.1} parent=1 // pred_region
      _
    $region9: #{tpu_custom_call.1} parent=1 // pred_fallthru
      _
    // Predicated region
    $region10: #{tpu_custom_call.1} parent=1 // pred_check
      _
    $region11: #{tpu_custom_call.1} parent=1 // pred_check_branch
      %18 = sbr.rel (0) target = $region13
    $region12: #{tpu_custom_call.1} parent=1 // pred_region
      _
    $region13: #{tpu_custom_call.1} parent=1 // pred_fallthru
      _
    // Predicated region
    $region14: #{tpu_custom_call.1} parent=1 // pred_check
      _
    $region15: #{tpu_custom_call.1} parent=1 // pred_check_branch
      %20 = sbr.rel (0) target = $region17
    $region16: #{tpu_custom_call.1} parent=1 // pred_region
      _
    $region17: #{tpu_custom_call.1} parent=1 // pred_fallthru
      _
    // Predicated region
    $region18: #{tpu_custom_call.1} parent=1 // pred_check
      _
    $region19: #{tpu_custom_call.1} parent=1 // pred_check_branch
      %22 = sbr.rel (0) target = $region21
    $region20: #{tpu_custom_call.1} parent=1 // pred_region
      _
    $region21: #{tpu_custom_call.1} parent=1 // pred_fallthru
      _
    // Predicated region
    $region22: #{tpu_custom_call.1} parent=1 // pred_check
      _
    $region23: #{tpu_custom_call.1} parent=1 // pred_check_branch
      %24 = sbr.rel (0) target = $region25
    $region24: #{tpu_custom_call.1} parent=1 // pred_region
      _
    $region25: #{tpu_custom_call.1} parent=1 // pred_fallthru
      _
    // Predicated region
    $region26: #{tpu_custom_call.1} parent=1 // pred_check
      _
    $region27: #{tpu_custom_call.1} parent=1 // pred_check_branch
      %26 = sbr.rel (0) target = $region29
    $region28: #{tpu_custom_call.1} parent=1 // pred_region
      _
    $region29: #{tpu_custom_call.1} parent=1 // pred_fallthru
      _
    %v27 = vld [vmem:[%s0] sm:$0x3]
    %v28 = vld [vmem:[%s0 + $0x2] sm:$0x3]
    %v29 = vld [vmem:[%s0 + $0x4] sm:$0x3]
    %v30 = vld [vmem:[%s0 + $0x6] sm:$0x3]
    %v31 = vld [vmem:[%s0 + $0x8] sm:$0x3]
    %v32 = vld [vmem:[%s0 + $0xa] sm:$0x3]
    %v33 = vld [vmem:[%s0 + $0xc] sm:$0x3]
    %v34 = vld [vmem:[%s0 + $0xe] sm:$0x3]
    %v35 = vld [vmem:[%s0 + $0x10] sm:$0x3]
    %v36 = vld [vmem:[%s0 + $0x12] sm:$0x3]
    %v37 = vld [vmem:[%s0 + $0x14] sm:$0x3]
    %v38 = vld [vmem:[%s0 + $0x16] sm:$0x3]
    %v39 = vld [vmem:[%s0 + $0x18] sm:$0x3]
    %v40 = vld [vmem:[%s0 + $0x1a] sm:$0x3]
    %v41 = vld [vmem:[%s0 + $0x1c] sm:$0x3]
    %v42 = vld [vmem:[%s0 + $0x1e] sm:$0x3]
    %v43 = vld [vmem:[%s0 + $0x20] sm:$0x3]
    %v44 = vld [vmem:[%s0 + $0x22] sm:$0x3]
    %v45 = vld [vmem:[%s0 + $0x24] sm:$0x3]
    %v46 = vld [vmem:[%s0 + $0x26] sm:$0x3]
    %v47 = vld [vmem:[%s0 + $0x28] sm:$0x3]
    %v48 = vld [vmem:[%s0 + $0x2a] sm:$0x3]
    %v49 = vld [vmem:[%s0 + $0x2c] sm:$0x3]
    %v50 = vld [vmem:[%s0 + $0x2e] sm:$0x3]
    %v51 = vld [vmem:[%s0 + $0x30] sm:$0x3]
    %v52 = vld [vmem:[%s0 + $0x32] sm:$0x3]
    %v53 = vld [vmem:[%s0 + $0x34] sm:$0x3]
    %v54 = vld [vmem:[%s0 + $0x36] sm:$0x3]
    %v55 = vld [vmem:[%s0 + $0x38] sm:$0x3]
    %v56 = vld [vmem:[%s0 + $0x3a] sm:$0x3]
    %v57 = vld [vmem:[%s0 + $0x3c] sm:$0x3]
    %v58 = vld [vmem:[%s0 + $0x3e] sm:$0x3]
    %v59 = vld [vmem:[%s0 + $0x40] sm:$0x3]
    %v60 = vld [vmem:[%s0 + $0x42] sm:$0x3]
    %v61 = vld [vmem:[%s0 + $0x44] sm:$0x3]
    %v62 = vld [vmem:[%s0 + $0x46] sm:$0x3]
    %v63 = vld [vmem:[%s0 + $0x48] sm:$0x3]
    %v64 = vld [vmem:[%s0 + $0x4a] sm:$0x3]
    %v65 = vld [vmem:[%s0 + $0x4c] sm:$0x3]
    %v66 = vld [vmem:[%s0 + $0x4e] sm:$0x3]
    %v67 = vld [vmem:[%s0 + $0x50] sm:$0x3]
    %v68 = vld [vmem:[%s0 + $0x52] sm:$0x3]
    %v69 = vld [vmem:[%s0 + $0x54] sm:$0x3]
    %v70 = vld [vmem:[%s0 + $0x56] sm:$0x3]
    %v71 = vld [vmem:[%s0 + $0x58] sm:$0x3]
    %v72 = vld [vmem:[%s0 + $0x5a] sm:$0x3]
    %v73 = vld [vmem:[%s0 + $0x5c] sm:$0x3]
    %v74 = vld [vmem:[%s0 + $0x5e] sm:$0x3]
    %v75 = vld [vmem:[%s0 + $0x60] sm:$0x3]
    %v76 = vld [vmem:[%s0 + $0x62] sm:$0x3]
    %v77 = vld [vmem:[%s0 + $0x64] sm:$0x3]
    %v78 = vld [vmem:[%s0 + $0x66] sm:$0x3]
    %v79 = vld [vmem:[%s0 + $0x68] sm:$0x3]
    %v80 = vld [vmem:[%s0 + $0x6a] sm:$0x3]
    %v81 = vld [vmem:[%s0 + $0x6c] sm:$0x3]
    %v82 = vld [vmem:[%s0 + $0x6e] sm:$0x3]
    %v83 = vld [vmem:[%s0 + $0x70] sm:$0x3]
    %v84 = vld [vmem:[%s0 + $0x72] sm:$0x3]
    %v85 = vld [vmem:[%s0 + $0x74] sm:$0x3]
    %v86 = vld [vmem:[%s0 + $0x76] sm:$0x3]
    %v87 = vld [vmem:[%s0 + $0x78] sm:$0x3]
    %v88 = vld [vmem:[%s0 + $0x7a] sm:$0x3]
    %v89 = vld [vmem:[%s0 + $0x7c] sm:$0x3]
    %v90 = vld [vmem:[%s0 + $0x7e] sm:$0x3]
    %v91 = vld [vmem:[%s0 + $0x80] sm:$0x3]
    %v92 = vld [vmem:[%s0 + $0x82] sm:$0x3]
    %v93 = vld [vmem:[%s0 + $0x84] sm:$0x3]
    %v94 = vld [vmem:[%s0 + $0x86] sm:$0x3]
    %v95 = vld [vmem:[%s0 + $0x88] sm:$0x3]
    %v96 = vld [vmem:[%s0 + $0x8a] sm:$0x3]
    %v97 = vld [vmem:[%s0 + $0x8c] sm:$0x3]
    %v98 = vld [vmem:[%s0 + $0x8e] sm:$0x3]
    %v99 = vld [vmem:[%s0 + $0x90] sm:$0x3]
    %v100 = vld [vmem:[%s0 + $0x92] sm:$0x3]
    %v101 = vld [vmem:[%s0 + $0x94] sm:$0x3]
    %v102 = vld [vmem:[%s0 + $0x96] sm:$0x3]
    %v103 = vld [vmem:[%s0 + $0x98] sm:$0x3]
    %v104 = vld [vmem:[%s0 + $0x9a] sm:$0x3]
    %v105 = vld [vmem:[%s0 + $0x9c] sm:$0x3]
    %v106 = vld [vmem:[%s0 + $0x9e] sm:$0x3]
    %v107 = vld [vmem:[%s0 + $0xa0] sm:$0x3]
    %v108 = vld [vmem:[%s0 + $0xa2] sm:$0x3]
    %v109 = vld [vmem:[%s0 + $0xa4] sm:$0x3]
    %v110 = vld [vmem:[%s0 + $0xa6] sm:$0x3]
    %v111 = vld [vmem:[%s0 + $0xa8] sm:$0x3]
    %v112 = vld [vmem:[%s0 + $0xaa] sm:$0x3]
    %v113 = vld [vmem:[%s0 + $0xac] sm:$0x3]
    %v114 = vld [vmem:[%s0 + $0xae] sm:$0x3]
    %v115 = vld [vmem:[%s0 + $0xb0] sm:$0x3]
    %v116 = vld [vmem:[%s0 + $0xb2] sm:$0x3]
    %v117 = vld [vmem:[%s0 + $0xb4] sm:$0x3]
    %v118 = vld [vmem:[%s0 + $0xb6] sm:$0x3]
    %v119 = vld [vmem:[%s0 + $0xb8] sm:$0x3]
    %v120 = vld [vmem:[%s0 + $0xba] sm:$0x3]
    %v121 = vld [vmem:[%s0 + $0xbc] sm:$0x3]
    %v122 = vld [vmem:[%s0 + $0xbe] sm:$0x3]
    %v123 = vld [vmem:[%s0 + $0xc0] sm:$0x3]
    %v124 = vld [vmem:[%s0 + $0xc2] sm:$0x3]
    %v125 = vld [vmem:[%s0 + $0xc4] sm:$0x3]
    %v126 = vld [vmem:[%s0 + $0xc6] sm:$0x3]
    %v127 = vld [vmem:[%s0 + $0xc8] sm:$0x3]
    %v128 = vld [vmem:[%s0 + $0xca] sm:$0x3]
    %v129 = vld [vmem:[%s0 + $0xcc] sm:$0x3]
    %v130 = vld [vmem:[%s0 + $0xce] sm:$0x3]
    %v131 = vld [vmem:[%s0 + $0xd0] sm:$0x3]
    %v132 = vld [vmem:[%s0 + $0xd2] sm:$0x3]
    %v133 = vld [vmem:[%s0 + $0xd4] sm:$0x3]
    %v134 = vld [vmem:[%s0 + $0xd6] sm:$0x3]
    %v135 = vld [vmem:[%s0 + $0xd8] sm:$0x3]
    %v136 = vld [vmem:[%s0 + $0xda] sm:$0x3]
    %v137 = vld [vmem:[%s0 + $0xdc] sm:$0x3]
    %v138 = vld [vmem:[%s0 + $0xde] sm:$0x3]
    %v139 = vld [vmem:[%s0 + $0xe0] sm:$0x3]
    %v140 = vld [vmem:[%s0 + $0xe2] sm:$0x3]
    %v141 = vld [vmem:[%s0 + $0xe4] sm:$0x3]
    %v142 = vld [vmem:[%s0 + $0xe6] sm:$0x3]
    %v143 = vld [vmem:[%s0 + $0xe8] sm:$0x3]
    %v144 = vld [vmem:[%s0 + $0xea] sm:$0x3]
    %v145 = vld [vmem:[%s0 + $0xec] sm:$0x3]
    %v146 = vld [vmem:[%s0 + $0xee] sm:$0x3]
    %v147 = vld [vmem:[%s0 + $0xf0] sm:$0x3]
    %v148 = vld [vmem:[%s0 + $0xf2] sm:$0x3]
    %v149 = vld [vmem:[%s0 + $0xf4] sm:$0x3]
    %v150 = vld [vmem:[%s0 + $0xf6] sm:$0x3]
    %v151 = vld [vmem:[%s0 + $0xf8] sm:$0x3]
    %v152 = vld [vmem:[%s0 + $0xfa] sm:$0x3]
    %v153 = vld [vmem:[%s0 + $0xfc] sm:$0x3]
    %v154 = vld [vmem:[%s0 + $0xfe] sm:$0x3]
    %v155 = vld [vmem:[%s0 + $0x100] sm:$0x3]
    %v156 = vld [vmem:[%s0 + $0x102] sm:$0x3]
    %v157 = vld [vmem:[%s0 + $0x104] sm:$0x3]
    %v158 = vld [vmem:[%s0 + $0x106] sm:$0x3]
    %v159 = vld [vmem:[%s0 + $0x108] sm:$0x3]
    %v160 = vld [vmem:[%s0 + $0x10a] sm:$0x3]
    %v161 = vld [vmem:[%s0 + $0x10c] sm:$0x3]
    %v162 = vld [vmem:[%s0 + $0x10e] sm:$0x3]
    %v163 = vld [vmem:[%s0 + $0x110] sm:$0x3]
    %v164 = vld [vmem:[%s0 + $0x112] sm:$0x3]
    %v165 = vld [vmem:[%s0 + $0x114] sm:$0x3]
    %v166 = vld [vmem:[%s0 + $0x116] sm:$0x3]
    %v167 = vld [vmem:[%s0 + $0x118] sm:$0x3]
    %v168 = vld [vmem:[%s0 + $0x11a] sm:$0x3]
    %v169 = vld [vmem:[%s0 + $0x11c] sm:$0x3]
    %v170 = vld [vmem:[%s0 + $0x11e] sm:$0x3]
    %v171 = vld [vmem:[%s0 + $0x120] sm:$0x3]
    %v172 = vld [vmem:[%s0 + $0x122] sm:$0x3]
    %v173 = vld [vmem:[%s0 + $0x124] sm:$0x3]
    %v174 = vld [vmem:[%s0 + $0x126] sm:$0x3]
    %v175 = vld [vmem:[%s0 + $0x128] sm:$0x3]
    %v176 = vld [vmem:[%s0 + $0x12a] sm:$0x3]
    %v177 = vld [vmem:[%s0 + $0x12c] sm:$0x3]
    %v178 = vld [vmem:[%s0 + $0x12e] sm:$0x3]
    %v179 = vld [vmem:[%s0 + $0x130] sm:$0x3]
    %v180 = vld [vmem:[%s0 + $0x132] sm:$0x3]
    %v181 = vld [vmem:[%s0 + $0x134] sm:$0x3]
    %v182 = vld [vmem:[%s0 + $0x136] sm:$0x3]
    %v183 = vld [vmem:[%s0 + $0x138] sm:$0x3]
    %v184 = vld [vmem:[%s0 + $0x13a] sm:$0x3]
    %v185 = vld [vmem:[%s0 + $0x13c] sm:$0x3]
    %v186 = vld [vmem:[%s0 + $0x13e] sm:$0x3]
    %v187 = vld [vmem:[%s0 + $0x140] sm:$0x3]
    %v188 = vld [vmem:[%s0 + $0x142] sm:$0x3]
    %v189 = vld [vmem:[%s0 + $0x144] sm:$0x3]
    %v190 = vld [vmem:[%s0 + $0x146] sm:$0x3]
    %v191 = vld [vmem:[%s0 + $0x148] sm:$0x3]
    %v192 = vld [vmem:[%s0 + $0x14a] sm:$0x3]
    %v193 = vld [vmem:[%s0 + $0x14c] sm:$0x3]
    %v194 = vld [vmem:[%s0 + $0x14e] sm:$0x3]
    %v195 = vld [vmem:[%s0 + $0x150] sm:$0x3]
    %v196 = vld [vmem:[%s0 + $0x152] sm:$0x3]
    %v197 = vld [vmem:[%s0 + $0x154] sm:$0x3]
    %v198 = vld [vmem:[%s0 + $0x156] sm:$0x3]
    %v199 = vld [vmem:[%s0 + $0x158] sm:$0x3]
    %v200 = vld [vmem:[%s0 + $0x15a] sm:$0x3]
    %v201 = vld [vmem:[%s0 + $0x15c] sm:$0x3]
    %v202 = vld [vmem:[%s0 + $0x15e] sm:$0x3]
    %v203 = vld [vmem:[%s0 + $0x160] sm:$0x3]
    %v204 = vld [vmem:[%s0 + $0x162] sm:$0x3]
    %v205 = vld [vmem:[%s0 + $0x164] sm:$0x3]
    %v206 = vld [vmem:[%s0 + $0x166] sm:$0x3]
    %v207 = vld [vmem:[%s0 + $0x168] sm:$0x3]
    %v208 = vld [vmem:[%s0 + $0x16a] sm:$0x3]
    %v209 = vld [vmem:[%s0 + $0x16c] sm:$0x3]
    %v210 = vld [vmem:[%s0 + $0x16e] sm:$0x3]
    %v211 = vld [vmem:[%s0 + $0x170] sm:$0x3]
    %v212 = vld [vmem:[%s0 + $0x172] sm:$0x3]
    %v213 = vld [vmem:[%s0 + $0x174] sm:$0x3]
    %v214 = vld [vmem:[%s0 + $0x176] sm:$0x3]
    %v215 = vld [vmem:[%s0 + $0x178] sm:$0x3]
    %v216 = vld [vmem:[%s0 + $0x17a] sm:$0x3]
    %v217 = vld [vmem:[%s0 + $0x17c] sm:$0x3]
    %v218 = vld [vmem:[%s0 + $0x17e] sm:$0x3]
    %v219 = vld [vmem:[%s0 + $0x180] sm:$0x3]
    %v220 = vld [vmem:[%s0 + $0x182] sm:$0x3]
    %v221 = vld [vmem:[%s0 + $0x184] sm:$0x3]
    %v222 = vld [vmem:[%s0 + $0x186] sm:$0x3]
    %v223 = vld [vmem:[%s0 + $0x188] sm:$0x3]
    %v224 = vld [vmem:[%s0 + $0x18a] sm:$0x3]
    %v225 = vld [vmem:[%s0 + $0x18c] sm:$0x3]
    %v226 = vld [vmem:[%s0 + $0x18e] sm:$0x3]
    %v227 = vld [vmem:[%s0 + $0x190] sm:$0x3]
    %v228 = vld [vmem:[%s0 + $0x192] sm:$0x3]
    %v229 = vld [vmem:[%s0 + $0x194] sm:$0x3]
    %v230 = vld [vmem:[%s0 + $0x196] sm:$0x3]
    %v231 = vld [vmem:[%s0 + $0x198] sm:$0x3]
    %v232 = vld [vmem:[%s0 + $0x19a] sm:$0x3]
    %v233 = vld [vmem:[%s0 + $0x19c] sm:$0x3]
    %v234 = vld [vmem:[%s0 + $0x19e] sm:$0x3]
    %v235 = vld [vmem:[%s0 + $0x1a0] sm:$0x3]
    %v236 = vld [vmem:[%s0 + $0x1a2] sm:$0x3]
    %v237 = vld [vmem:[%s0 + $0x1a4] sm:$0x3]
    %v238 = vld [vmem:[%s0 + $0x1a6] sm:$0x3]
    %v239 = vld [vmem:[%s0 + $0x1a8] sm:$0x3]
    %v240 = vld [vmem:[%s0 + $0x1aa] sm:$0x3]
    %v241 = vld [vmem:[%s0 + $0x1ac] sm:$0x3]
    %v242 = vld [vmem:[%s0 + $0x1ae] sm:$0x3]
    %v243 = vld [vmem:[%s0 + $0x1b0] sm:$0x3]
    %v244 = vld [vmem:[%s0 + $0x1b2] sm:$0x3]
    %v245 = vld [vmem:[%s0 + $0x1b4] sm:$0x3]
    %v246 = vld [vmem:[%s0 + $0x1b6] sm:$0x3]
    %v247 = vld [vmem:[%s0 + $0x1b8] sm:$0x3]
    %v248 = vld [vmem:[%s0 + $0x1ba] sm:$0x3]
    %v249 = vld [vmem:[%s0 + $0x1bc] sm:$0x3]
    %v250 = vld [vmem:[%s0 + $0x1be] sm:$0x3]
    %v251 = vld [vmem:[%s0 + $0x1c0] sm:$0x3]
    %v252 = vld [vmem:[%s0 + $0x1c2] sm:$0x3]
    %v253 = vld [vmem:[%s0 + $0x1c4] sm:$0x3]
    %v254 = vld [vmem:[%s0 + $0x1c6] sm:$0x3]
    %v255 = vld [vmem:[%s0 + $0x1c8] sm:$0x3]
    %v256 = vld [vmem:[%s0 + $0x1ca] sm:$0x3]
    %v257 = vld [vmem:[%s0 + $0x1cc] sm:$0x3]
    %v258 = vld [vmem:[%s0 + $0x1ce] sm:$0x3]
    %v259 = vld [vmem:[%s0 + $0x1d0] sm:$0x3]
    %v260 = vld [vmem:[%s0 + $0x1d2] sm:$0x3]
    %v261 = vld [vmem:[%s0 + $0x1d4] sm:$0x3]
    %v262 = vld [vmem:[%s0 + $0x1d6] sm:$0x3]
    %v263 = vld [vmem:[%s0 + $0x1d8] sm:$0x3]
    %v264 = vld [vmem:[%s0 + $0x1da] sm:$0x3]
    %v265 = vld [vmem:[%s0 + $0x1dc] sm:$0x3]
    %v266 = vld [vmem:[%s0 + $0x1de] sm:$0x3]
    %v267 = vld [vmem:[%s0 + $0x1e0] sm:$0x3]
    %v268 = vld [vmem:[%s0 + $0x1e2] sm:$0x3]
    %v269 = vld [vmem:[%s0 + $0x1e4] sm:$0x3]
    %v270 = vld [vmem:[%s0 + $0x1e6] sm:$0x3]
    %v271 = vld [vmem:[%s0 + $0x1e8] sm:$0x3]
    %v272 = vld [vmem:[%s0 + $0x1ea] sm:$0x3]
    %v273 = vld [vmem:[%s0 + $0x1ec] sm:$0x3]
    %v274 = vld [vmem:[%s0 + $0x1ee] sm:$0x3]
    %v275 = vld [vmem:[%s0 + $0x1f0] sm:$0x3]
    %v276 = vld [vmem:[%s0 + $0x1f2] sm:$0x3]
    %v277 = vld [vmem:[%s0 + $0x1f4] sm:$0x3]
    %v278 = vld [vmem:[%s0 + $0x1f6] sm:$0x3]
    %v279 = vld [vmem:[%s0 + $0x1f8] sm:$0x3]
    %v280 = vld [vmem:[%s0 + $0x1fa] sm:$0x3]
    %v281 = vld [vmem:[%s0 + $0x1fc] sm:$0x3]
    %v282 = vld [vmem:[%s0 + $0x1fe] sm:$0x3]
    %v283 = vmax.f32 %v27, %v43
    %v284 = vmax.f32 %v28, %v44
    %v285 = vmax.f32 %v29, %v45
    %v286 = vmax.f32 %v30, %v46
    %v287 = vmax.f32 %v31, %v47
    %v288 = vmax.f32 %v32, %v48
    %v289 = vmax.f32 %v33, %v49
    %v290 = vmax.f32 %v34, %v50
    %v291 = vmax.f32 %v35, %v51
    %v292 = vmax.f32 %v36, %v52
    %v293 = vmax.f32 %v37, %v53
    %v294 = vmax.f32 %v38, %v54
    %v295 = vmax.f32 %v39, %v55
    %v296 = vmax.f32 %v40, %v56
    %v297 = vmax.f32 %v41, %v57
    %v298 = vmax.f32 %v42, %v58
    %v299 = vmax.f32 %v59, %v75
    %v300 = vmax.f32 %v60, %v76
    %v301 = vmax.f32 %v61, %v77
    %v302 = vmax.f32 %v62, %v78
    %v303 = vmax.f32 %v63, %v79
    %v304 = vmax.f32 %v64, %v80
    %v305 = vmax.f32 %v65, %v81
    %v306 = vmax.f32 %v66, %v82
    %v307 = vmax.f32 %v67, %v83
    %v308 = vmax.f32 %v68, %v84
    %v309 = vmax.f32 %v69, %v85
    %v310 = vmax.f32 %v70, %v86
    %v311 = vmax.f32 %v71, %v87
    %v312 = vmax.f32 %v72, %v88
    %v313 = vmax.f32 %v73, %v89
    %v314 = vmax.f32 %v74, %v90
    %v315 = vmax.f32 %v91, %v107
    %v316 = vmax.f32 %v92, %v108
    %v317 = vmax.f32 %v93, %v109
    %v318 = vmax.f32 %v94, %v110
    %v319 = vmax.f32 %v95, %v111
    %v320 = vmax.f32 %v96, %v112
    %v321 = vmax.f32 %v97, %v113
    %v322 = vmax.f32 %v98, %v114
    %v323 = vmax.f32 %v99, %v115
    %v324 = vmax.f32 %v100, %v116
    %v325 = vmax.f32 %v101, %v117
    %v326 = vmax.f32 %v102, %v118
    %v327 = vmax.f32 %v103, %v119
    %v328 = vmax.f32 %v104, %v120
    %v329 = vmax.f32 %v105, %v121
    %v330 = vmax.f32 %v106, %v122
    %v331 = vmax.f32 %v123, %v139
    %v332 = vmax.f32 %v124, %v140
    %v333 = vmax.f32 %v125, %v141
    %v334 = vmax.f32 %v126, %v142
    %v335 = vmax.f32 %v127, %v143
    %v336 = vmax.f32 %v128, %v144
    %v337 = vmax.f32 %v129, %v145
    %v338 = vmax.f32 %v130, %v146
    %v339 = vmax.f32 %v131, %v147
    %v340 = vmax.f32 %v132, %v148
    %v341 = vmax.f32 %v133, %v149
    %v342 = vmax.f32 %v134, %v150
    %v343 = vmax.f32 %v135, %v151
    %v344 = vmax.f32 %v136, %v152
    %v345 = vmax.f32 %v137, %v153
    %v346 = vmax.f32 %v138, %v154
    %v347 = vmax.f32 %v155, %v171
    %v348 = vmax.f32 %v156, %v172
    %v349 = vmax.f32 %v157, %v173
    %v350 = vmax.f32 %v158, %v174
    %v351 = vmax.f32 %v159, %v175
    %v352 = vmax.f32 %v160, %v176
    %v353 = vmax.f32 %v161, %v177
    %v354 = vmax.f32 %v162, %v178
    %v355 = vmax.f32 %v163, %v179
    %v356 = vmax.f32 %v164, %v180
    %v357 = vmax.f32 %v165, %v181
    %v358 = vmax.f32 %v166, %v182
    %v359 = vmax.f32 %v167, %v183
    %v360 = vmax.f32 %v168, %v184
    %v361 = vmax.f32 %v169, %v185
    %v362 = vmax.f32 %v170, %v186
    %v363 = vmax.f32 %v187, %v203
    %v364 = vmax.f32 %v188, %v204
    %v365 = vmax.f32 %v189, %v205
    %v366 = vmax.f32 %v190, %v206
    %v367 = vmax.f32 %v191, %v207
    %v368 = vmax.f32 %v192, %v208
    %v369 = vmax.f32 %v193, %v209
    %v370 = vmax.f32 %v194, %v210
    %v371 = vmax.f32 %v195, %v211
    %v372 = vmax.f32 %v196, %v212
    %v373 = vmax.f32 %v197, %v213
    %v374 = vmax.f32 %v198, %v214
    %v375 = vmax.f32 %v199, %v215
    %v376 = vmax.f32 %v200, %v216
    %v377 = vmax.f32 %v201, %v217
    %v378 = vmax.f32 %v202, %v218
    %v379 = vmax.f32 %v219, %v235
    %v380 = vmax.f32 %v220, %v236
    %v381 = vmax.f32 %v221, %v237
    %v382 = vmax.f32 %v222, %v238
    %v383 = vmax.f32 %v223, %v239
    %v384 = vmax.f32 %v224, %v240
    %v385 = vmax.f32 %v225, %v241
    %v386 = vmax.f32 %v226, %v242
    %v387 = vmax.f32 %v227, %v243
    %v388 = vmax.f32 %v228, %v244
    %v389 = vmax.f32 %v229, %v245
    %v390 = vmax.f32 %v230, %v246
    %v391 = vmax.f32 %v231, %v247
    %v392 = vmax.f32 %v232, %v248
    %v393 = vmax.f32 %v233, %v249
    %v394 = vmax.f32 %v234, %v250
    %v395 = vmax.f32 %v251, %v267
    %v396 = vmax.f32 %v252, %v268
    %v397 = vmax.f32 %v253, %v269
    %v398 = vmax.f32 %v254, %v270
    %v399 = vmax.f32 %v255, %v271
    %v400 = vmax.f32 %v256, %v272
    %v401 = vmax.f32 %v257, %v273
    %v402 = vmax.f32 %v258, %v274
    %v403 = vmax.f32 %v259, %v275
    %v404 = vmax.f32 %v260, %v276
    %v405 = vmax.f32 %v261, %v277
    %v406 = vmax.f32 %v262, %v278
    %v407 = vmax.f32 %v263, %v279
    %v408 = vmax.f32 %v264, %v280
    %v409 = vmax.f32 %v265, %v281
    %v410 = vmax.f32 %v266, %v282
    %v411 = vmax.f32 %v283, %v284
    %v412 = vmax.f32 %v285, %v286
    %v413 = vmax.f32 %v287, %v288
    %v414 = vmax.f32 %v289, %v290
    %v415 = vmax.f32 %v291, %v292
    %v416 = vmax.f32 %v293, %v294
    %v417 = vmax.f32 %v295, %v296
    %v418 = vmax.f32 %v297, %v298
    %v419 = vmax.f32 %v299, %v300
    %v420 = vmax.f32 %v301, %v302
    %v421 = vmax.f32 %v303, %v304
    %v422 = vmax.f32 %v305, %v306
    %v423 = vmax.f32 %v307, %v308
    %v424 = vmax.f32 %v309, %v310
    %v425 = vmax.f32 %v311, %v312
    %v426 = vmax.f32 %v313, %v314
    %v427 = vmax.f32 %v315, %v316
    %v428 = vmax.f32 %v317, %v318
    %v429 = vmax.f32 %v319, %v320
    %v430 = vmax.f32 %v321, %v322
    %v431 = vmax.f32 %v323, %v324
    %v432 = vmax.f32 %v325, %v326
    %v433 = vmax.f32 %v327, %v328
    %v434 = vmax.f32 %v329, %v330
    %v435 = vmax.f32 %v331, %v332
    %v436 = vmax.f32 %v333, %v334
    %v437 = vmax.f32 %v335, %v336
    %v438 = vmax.f32 %v337, %v338
    %v439 = vmax.f32 %v339, %v340
    %v440 = vmax.f32 %v341, %v342
    %v441 = vmax.f32 %v343, %v344
    %v442 = vmax.f32 %v345, %v346
    %v443 = vmax.f32 %v347, %v348
    %v444 = vmax.f32 %v349, %v350
    %v445 = vmax.f32 %v351, %v352
    %v446 = vmax.f32 %v353, %v354
    %v447 = vmax.f32 %v355, %v356
    %v448 = vmax.f32 %v357, %v358
    %v449 = vmax.f32 %v359, %v360
    %v450 = vmax.f32 %v361, %v362
    %v451 = vmax.f32 %v363, %v364
    %v452 = vmax.f32 %v365, %v366
    %v453 = vmax.f32 %v367, %v368
    %v454 = vmax.f32 %v369, %v370
    %v455 = vmax.f32 %v371, %v372
    %v456 = vmax.f32 %v373, %v374
    %v457 = vmax.f32 %v375, %v376
    %v458 = vmax.f32 %v377, %v378
    %v459 = vmax.f32 %v379, %v380
    %v460 = vmax.f32 %v381, %v382
    %v461 = vmax.f32 %v383, %v384
    %v462 = vmax.f32 %v385, %v386
    %v463 = vmax.f32 %v387, %v388
    %v464 = vmax.f32 %v389, %v390
    %v465 = vmax.f32 %v391, %v392
    %v466 = vmax.f32 %v393, %v394
    %v467 = vmax.f32 %v395, %v396
    %v468 = vmax.f32 %v397, %v398
    %v469 = vmax.f32 %v399, %v400
    %v470 = vmax.f32 %v401, %v402
    %v471 = vmax.f32 %v403, %v404
    %v472 = vmax.f32 %v405, %v406
    %v473 = vmax.f32 %v407, %v408
    %v474 = vmax.f32 %v409, %v410
    %532 = vrot.lane.b32.xlu0 0.0, 4
    %v533 = vpop.permute.xlu0 %532
    %534 = vrot.lane.b32.xlu0 %v411, 4
    %v535 = vpop.permute.xlu0 %534
    %536 = vrot.lane.b32.xlu0 %v412, 4
    %v537 = vpop.permute.xlu0 %536
    %538 = vrot.lane.b32.xlu0 %v413, 4
    %v539 = vpop.permute.xlu0 %538
    %540 = vrot.lane.b32.xlu0 %v414, 4
    %v541 = vpop.permute.xlu0 %540
    %542 = vrot.lane.b32.xlu0 %v415, 4
    %v543 = vpop.permute.xlu0 %542
    %544 = vrot.lane.b32.xlu0 %v416, 4
    %v545 = vpop.permute.xlu0 %544
    %546 = vrot.lane.b32.xlu0 %v417, 4
    %v547 = vpop.permute.xlu0 %546
    %548 = vrot.lane.b32.xlu0 %v418, 4
    %v549 = vpop.permute.xlu0 %548
    %550 = vrot.lane.b32.xlu0 %v419, 4
    %v551 = vpop.permute.xlu0 %550
    %552 = vrot.lane.b32.xlu0 %v420, 4
    %v553 = vpop.permute.xlu0 %552
    %554 = vrot.lane.b32.xlu0 %v421, 4
    %v555 = vpop.permute.xlu0 %554
    %556 = vrot.lane.b32.xlu0 %v422, 4
    %v557 = vpop.permute.xlu0 %556
    %558 = vrot.lane.b32.xlu0 %v423, 4
    %v559 = vpop.permute.xlu0 %558
    %560 = vrot.lane.b32.xlu0 %v424, 4
    %v561 = vpop.permute.xlu0 %560
    %562 = vrot.lane.b32.xlu0 %v425, 4
    %v563 = vpop.permute.xlu0 %562
    %564 = vrot.lane.b32.xlu0 %v426, 4
    %v565 = vpop.permute.xlu0 %564
    %566 = vrot.lane.b32.xlu0 %v427, 4
    %v567 = vpop.permute.xlu0 %566
    %568 = vrot.lane.b32.xlu0 %v428, 4
    %v569 = vpop.permute.xlu0 %568
    %570 = vrot.lane.b32.xlu0 %v429, 4
    %v571 = vpop.permute.xlu0 %570
    %572 = vrot.lane.b32.xlu0 %v430, 4
    %v573 = vpop.permute.xlu0 %572
    %574 = vrot.lane.b32.xlu0 %v431, 4
    %v575 = vpop.permute.xlu0 %574
    %576 = vrot.lane.b32.xlu0 %v432, 4
    %v577 = vpop.permute.xlu0 %576
    %578 = vrot.lane.b32.xlu0 %v433, 4
    %v579 = vpop.permute.xlu0 %578
    %580 = vrot.lane.b32.xlu0 %v434, 4
    %v581 = vpop.permute.xlu0 %580
    %582 = vrot.lane.b32.xlu0 %v435, 4
    %v583 = vpop.permute.xlu0 %582
    %584 = vrot.lane.b32.xlu0 %v436, 4
    %v585 = vpop.permute.xlu0 %584
    %586 = vrot.lane.b32.xlu0 %v437, 4
    %v587 = vpop.permute.xlu0 %586
    %588 = vrot.lane.b32.xlu0 %v438, 4
    %v589 = vpop.permute.xlu0 %588
    %590 = vrot.lane.b32.xlu0 %v439, 4
    %v591 = vpop.permute.xlu0 %590
    %592 = vrot.lane.b32.xlu0 %v440, 4
    %v593 = vpop.permute.xlu0 %592
    %594 = vrot.lane.b32.xlu0 %v441, 4
    %v595 = vpop.permute.xlu0 %594
    %596 = vrot.lane.b32.xlu0 %v442, 4
    %v597 = vpop.permute.xlu0 %596
    %598 = vrot.lane.b32.xlu0 %v443, 4
    %v599 = vpop.permute.xlu0 %598
    %600 = vrot.lane.b32.xlu0 %v444, 4
    %v601 = vpop.permute.xlu0 %600
    %602 = vrot.lane.b32.xlu0 %v445, 4
    %v603 = vpop.permute.xlu0 %602
    %604 = vrot.lane.b32.xlu0 %v446, 4
    %v605 = vpop.permute.xlu0 %604
    %606 = vrot.lane.b32.xlu0 %v447, 4
    %v607 = vpop.permute.xlu0 %606
    %608 = vrot.lane.b32.xlu0 %v448, 4
    %v609 = vpop.permute.xlu0 %608
    %610 = vrot.lane.b32.xlu0 %v449, 4
    %v611 = vpop.permute.xlu0 %610
    %612 = vrot.lane.b32.xlu0 %v450, 4
    %v613 = vpop.permute.xlu0 %612
    %614 = vrot.lane.b32.xlu0 %v451, 4
    %v615 = vpop.permute.xlu0 %614
    %616 = vrot.lane.b32.xlu0 %v452, 4
    %v617 = vpop.permute.xlu0 %616
    %618 = vrot.lane.b32.xlu0 %v453, 4
    %v619 = vpop.permute.xlu0 %618
    %620 = vrot.lane.b32.xlu0 %v454, 4
    %v621 = vpop.permute.xlu0 %620
    %622 = vrot.lane.b32.xlu0 %v455, 4
    %v623 = vpop.permute.xlu0 %622
    %624 = vrot.lane.b32.xlu0 %v456, 4
    %v625 = vpop.permute.xlu0 %624
    %626 = vrot.lane.b32.xlu0 %v457, 4
    %v627 = vpop.permute.xlu0 %626
    %628 = vrot.lane.b32.xlu0 %v458, 4
    %v629 = vpop.permute.xlu0 %628
    %630 = vrot.lane.b32.xlu0 %v459, 4
    %v631 = vpop.permute.xlu0 %630
    %632 = vrot.lane.b32.xlu0 %v460, 4
    %v633 = vpop.permute.xlu0 %632
    %634 = vrot.lane.b32.xlu0 %v461, 4
    %v635 = vpop.permute.xlu0 %634
    %636 = vrot.lane.b32.xlu0 %v462, 4
    %v637 = vpop.permute.xlu0 %636
    %638 = vrot.lane.b32.xlu0 %v463, 4
    %v639 = vpop.permute.xlu0 %638
    %640 = vrot.lane.b32.xlu0 %v464, 4
    %v641 = vpop.permute.xlu0 %640
    %642 = vrot.lane.b32.xlu0 %v465, 4
    %v643 = vpop.permute.xlu0 %642
    %644 = vrot.lane.b32.xlu0 %v466, 4
    %v645 = vpop.permute.xlu0 %644
    %703 = vrot.lane.b32.xlu0 0.0, 8
    %v704 = vpop.permute.xlu0 %703
    %705 = vrot.lane.b32.xlu0 %v412, 8
    %v706 = vpop.permute.xlu0 %705
    %707 = vrot.lane.b32.xlu0 %v413, 8
    %v708 = vpop.permute.xlu0 %707
    %709 = vrot.lane.b32.xlu0 %v414, 8
    %v710 = vpop.permute.xlu0 %709
    %711 = vrot.lane.b32.xlu0 %v415, 8
    %v712 = vpop.permute.xlu0 %711
    %713 = vrot.lane.b32.xlu0 %v416, 8
    %v714 = vpop.permute.xlu0 %713
    %715 = vrot.lane.b32.xlu0 %v417, 8
    %v716 = vpop.permute.xlu0 %715
    %717 = vrot.lane.b32.xlu0 %v418, 8
    %v718 = vpop.permute.xlu0 %717
    %719 = vrot.lane.b32.xlu0 %v420, 8
    %v720 = vpop.permute.xlu0 %719
    %721 = vrot.lane.b32.xlu0 %v421, 8
    %v722 = vpop.permute.xlu0 %721
    %723 = vrot.lane.b32.xlu0 %v422, 8
    %v724 = vpop.permute.xlu0 %723
    %725 = vrot.lane.b32.xlu0 %v423, 8
    %v726 = vpop.permute.xlu0 %725
    %727 = vrot.lane.b32.xlu0 %v424, 8
    %v728 = vpop.permute.xlu0 %727
    %729 = vrot.lane.b32.xlu0 %v425, 8
    %v730 = vpop.permute.xlu0 %729
    %731 = vrot.lane.b32.xlu0 %v426, 8
    %v732 = vpop.permute.xlu0 %731
    %733 = vrot.lane.b32.xlu0 %v428, 8
    %v734 = vpop.permute.xlu0 %733
    %735 = vrot.lane.b32.xlu0 %v429, 8
    %v736 = vpop.permute.xlu0 %735
    %737 = vrot.lane.b32.xlu0 %v430, 8
    %v738 = vpop.permute.xlu0 %737
    %739 = vrot.lane.b32.xlu0 %v431, 8
    %v740 = vpop.permute.xlu0 %739
    %741 = vrot.lane.b32.xlu0 %v432, 8
    %v742 = vpop.permute.xlu0 %741
    %743 = vrot.lane.b32.xlu0 %v433, 8
    %v744 = vpop.permute.xlu0 %743
    %745 = vrot.lane.b32.xlu0 %v434, 8
    %v746 = vpop.permute.xlu0 %745
    %747 = vrot.lane.b32.xlu0 %v436, 8
    %v748 = vpop.permute.xlu0 %747
    %749 = vrot.lane.b32.xlu0 %v437, 8
    %v750 = vpop.permute.xlu0 %749
    %751 = vrot.lane.b32.xlu0 %v438, 8
    %v752 = vpop.permute.xlu0 %751
    %753 = vrot.lane.b32.xlu0 %v439, 8
    %v754 = vpop.permute.xlu0 %753
    %755 = vrot.lane.b32.xlu0 %v440, 8
    %v756 = vpop.permute.xlu0 %755
    %757 = vrot.lane.b32.xlu0 %v441, 8
    %v758 = vpop.permute.xlu0 %757
    %759 = vrot.lane.b32.xlu0 %v442, 8
    %v760 = vpop.permute.xlu0 %759
    %761 = vrot.lane.b32.xlu0 %v444, 8
    %v762 = vpop.permute.xlu0 %761
    %763 = vrot.lane.b32.xlu0 %v445, 8
    %v764 = vpop.permute.xlu0 %763
    %765 = vrot.lane.b32.xlu0 %v446, 8
    %v766 = vpop.permute.xlu0 %765
    %767 = vrot.lane.b32.xlu0 %v447, 8
    %v768 = vpop.permute.xlu0 %767
    %769 = vrot.lane.b32.xlu0 %v448, 8
    %v770 = vpop.permute.xlu0 %769
    %771 = vrot.lane.b32.xlu0 %v449, 8
    %v772 = vpop.permute.xlu0 %771
    %773 = vrot.lane.b32.xlu0 %v450, 8
    %v774 = vpop.permute.xlu0 %773
    %775 = vrot.lane.b32.xlu0 %v452, 8
    %v776 = vpop.permute.xlu0 %775
    %777 = vrot.lane.b32.xlu0 %v453, 8
    %v778 = vpop.permute.xlu0 %777
    %779 = vrot.lane.b32.xlu0 %v454, 8
    %v780 = vpop.permute.xlu0 %779
    %781 = vrot.lane.b32.xlu0 %v455, 8
    %v782 = vpop.permute.xlu0 %781
    %783 = vrot.lane.b32.xlu0 %v456, 8
    %v784 = vpop.permute.xlu0 %783
    %785 = vrot.lane.b32.xlu0 %v457, 8
    %v786 = vpop.permute.xlu0 %785
    %787 = vrot.lane.b32.xlu0 %v458, 8
    %v788 = vpop.permute.xlu0 %787
    %789 = vrot.lane.b32.xlu0 %v460, 8
    %v790 = vpop.permute.xlu0 %789
    %791 = vrot.lane.b32.xlu0 %v461, 8
    %v792 = vpop.permute.xlu0 %791
    %793 = vrot.lane.b32.xlu0 %v462, 8
    %v794 = vpop.permute.xlu0 %793
    %795 = vrot.lane.b32.xlu0 %v463, 8
    %v796 = vpop.permute.xlu0 %795
    %797 = vrot.lane.b32.xlu0 %v464, 8
    %v798 = vpop.permute.xlu0 %797
    %799 = vrot.lane.b32.xlu0 %v465, 8
    %v800 = vpop.permute.xlu0 %799
    %801 = vrot.lane.b32.xlu0 %v466, 8
    %v802 = vpop.permute.xlu0 %801
    %860 = vrot.lane.b32.xlu0 0.0, 12
    %v861 = vpop.permute.xlu0 %860
    %862 = vrot.lane.b32.xlu0 %v411, 12
    %v863 = vpop.permute.xlu0 %862
    %864 = vrot.lane.b32.xlu0 %v412, 12
    %v865 = vpop.permute.xlu0 %864
    %866 = vrot.lane.b32.xlu0 %v413, 12
    %v867 = vpop.permute.xlu0 %866
    %868 = vrot.lane.b32.xlu0 %v414, 12
    %v869 = vpop.permute.xlu0 %868
    %870 = vrot.lane.b32.xlu0 %v415, 12
    %v871 = vpop.permute.xlu0 %870
    %872 = vrot.lane.b32.xlu0 %v416, 12
    %v873 = vpop.permute.xlu0 %872
    %874 = vrot.lane.b32.xlu0 %v417, 12
    %v875 = vpop.permute.xlu0 %874
    %876 = vrot.lane.b32.xlu0 %v419, 12
    %v877 = vpop.permute.xlu0 %876
    %878 = vrot.lane.b32.xlu0 %v420, 12
    %v879 = vpop.permute.xlu0 %878
    %880 = vrot.lane.b32.xlu0 %v421, 12
    %v881 = vpop.permute.xlu0 %880
    %882 = vrot.lane.b32.xlu0 %v422, 12
    %v883 = vpop.permute.xlu0 %882
    %884 = vrot.lane.b32.xlu0 %v423, 12
    %v885 = vpop.permute.xlu0 %884
    %886 = vrot.lane.b32.xlu0 %v424, 12
    %v887 = vpop.permute.xlu0 %886
    %888 = vrot.lane.b32.xlu0 %v425, 12
    %v889 = vpop.permute.xlu0 %888
    %890 = vrot.lane.b32.xlu0 %v427, 12
    %v891 = vpop.permute.xlu0 %890
    %892 = vrot.lane.b32.xlu0 %v428, 12
    %v893 = vpop.permute.xlu0 %892
    %894 = vrot.lane.b32.xlu0 %v429, 12
    %v895 = vpop.permute.xlu0 %894
    %896 = vrot.lane.b32.xlu0 %v430, 12
    %v897 = vpop.permute.xlu0 %896
    %898 = vrot.lane.b32.xlu0 %v431, 12
    %v899 = vpop.permute.xlu0 %898
    %900 = vrot.lane.b32.xlu0 %v432, 12
    %v901 = vpop.permute.xlu0 %900
    %902 = vrot.lane.b32.xlu0 %v433, 12
    %v903 = vpop.permute.xlu0 %902
    %904 = vrot.lane.b32.xlu0 %v435, 12
    %v905 = vpop.permute.xlu0 %904
    %906 = vrot.lane.b32.xlu0 %v436, 12
    %v907 = vpop.permute.xlu0 %906
    %908 = vrot.lane.b32.xlu0 %v437, 12
    %v909 = vpop.permute.xlu0 %908
    %910 = vrot.lane.b32.xlu0 %v438, 12
    %v911 = vpop.permute.xlu0 %910
    %912 = vrot.lane.b32.xlu0 %v439, 12
    %v913 = vpop.permute.xlu0 %912
    %914 = vrot.lane.b32.xlu0 %v440, 12
    %v915 = vpop.permute.xlu0 %914
    %916 = vrot.lane.b32.xlu0 %v441, 12
    %v917 = vpop.permute.xlu0 %916
    %918 = vrot.lane.b32.xlu0 %v443, 12
    %v919 = vpop.permute.xlu0 %918
    %920 = vrot.lane.b32.xlu0 %v444, 12
    %v921 = vpop.permute.xlu0 %920
    %922 = vrot.lane.b32.xlu0 %v445, 12
    %v923 = vpop.permute.xlu0 %922
    %924 = vrot.lane.b32.xlu0 %v446, 12
    %v925 = vpop.permute.xlu0 %924
    %926 = vrot.lane.b32.xlu0 %v447, 12
    %v927 = vpop.permute.xlu0 %926
    %928 = vrot.lane.b32.xlu0 %v448, 12
    %v929 = vpop.permute.xlu0 %928
    %930 = vrot.lane.b32.xlu0 %v449, 12
    %v931 = vpop.permute.xlu0 %930
    %932 = vrot.lane.b32.xlu0 %v451, 12
    %v933 = vpop.permute.xlu0 %932
    %934 = vrot.lane.b32.xlu0 %v452, 12
    %v935 = vpop.permute.xlu0 %934
    %936 = vrot.lane.b32.xlu0 %v453, 12
    %v937 = vpop.permute.xlu0 %936
    %938 = vrot.lane.b32.xlu0 %v454, 12
    %v939 = vpop.permute.xlu0 %938
    %940 = vrot.lane.b32.xlu0 %v455, 12
    %v941 = vpop.permute.xlu0 %940
    %942 = vrot.lane.b32.xlu0 %v456, 12
    %v943 = vpop.permute.xlu0 %942
    %944 = vrot.lane.b32.xlu0 %v457, 12
    %v945 = vpop.permute.xlu0 %944
    %946 = vrot.lane.b32.xlu0 %v459, 12
    %v947 = vpop.permute.xlu0 %946
    %948 = vrot.lane.b32.xlu0 %v460, 12
    %v949 = vpop.permute.xlu0 %948
    %950 = vrot.lane.b32.xlu0 %v461, 12
    %v951 = vpop.permute.xlu0 %950
    %952 = vrot.lane.b32.xlu0 %v462, 12
    %v953 = vpop.permute.xlu0 %952
    %954 = vrot.lane.b32.xlu0 %v463, 12
    %v955 = vpop.permute.xlu0 %954
    %956 = vrot.lane.b32.xlu0 %v464, 12
    %v957 = vpop.permute.xlu0 %956
    %958 = vrot.lane.b32.xlu0 %v465, 12
    %v959 = vpop.permute.xlu0 %958
    %960 = vrot.lane.b32.xlu0 %v467, 12
    %v961 = vpop.permute.xlu0 %960
    %962 = vrot.lane.b32.xlu0 %v468, 12
    %v963 = vpop.permute.xlu0 %962
    %964 = vrot.lane.b32.xlu0 %v469, 12
    %v965 = vpop.permute.xlu0 %964
    %966 = vrot.lane.b32.xlu0 %v470, 12
    %v967 = vpop.permute.xlu0 %966
    %968 = vrot.lane.b32.xlu0 %v471, 12
    %v969 = vpop.permute.xlu0 %968
    %970 = vrot.lane.b32.xlu0 %v472, 12
    %v971 = vpop.permute.xlu0 %970
    %972 = vrot.lane.b32.xlu0 %v473, 12
    %v973 = vpop.permute.xlu0 %972
    %1032 = vrot.lane.b32.xlu0 %v411, 16
    %v1033 = vpop.permute.xlu0 %1032
    %1034 = vrot.lane.b32.xlu0 %v412, 16
    %v1035 = vpop.permute.xlu0 %1034
    %1036 = vrot.lane.b32.xlu0 %v413, 16
    %v1037 = vpop.permute.xlu0 %1036
    %1038 = vrot.lane.b32.xlu0 %v414, 16
    %v1039 = vpop.permute.xlu0 %1038
    %1040 = vrot.lane.b32.xlu0 %v415, 16
    %v1041 = vpop.permute.xlu0 %1040
    %1042 = vrot.lane.b32.xlu0 %v416, 16
    %v1043 = vpop.permute.xlu0 %1042
    %1044 = vrot.lane.b32.xlu0 %v417, 16
    %v1045 = vpop.permute.xlu0 %1044
    %1046 = vrot.lane.b32.xlu0 %v418, 16
    %v1047 = vpop.permute.xlu0 %1046
    %1048 = vrot.lane.b32.xlu0 %v419, 16
    %v1049 = vpop.permute.xlu0 %1048
    %1050 = vrot.lane.b32.xlu0 %v420, 16
    %v1051 = vpop.permute.xlu0 %1050
    %1052 = vrot.lane.b32.xlu0 %v421, 16
    %v1053 = vpop.permute.xlu0 %1052
    %1054 = vrot.lane.b32.xlu0 %v422, 16
    %v1055 = vpop.permute.xlu0 %1054
    %1056 = vrot.lane.b32.xlu0 %v423, 16
    %v1057 = vpop.permute.xlu0 %1056
    %1058 = vrot.lane.b32.xlu0 %v424, 16
    %v1059 = vpop.permute.xlu0 %1058
    %1060 = vrot.lane.b32.xlu0 %v425, 16
    %v1061 = vpop.permute.xlu0 %1060
    %1062 = vrot.lane.b32.xlu0 %v426, 16
    %v1063 = vpop.permute.xlu0 %1062
    %1064 = vrot.lane.b32.xlu0 %v427, 16
    %v1065 = vpop.permute.xlu0 %1064
    %1066 = vrot.lane.b32.xlu0 %v428, 16
    %v1067 = vpop.permute.xlu0 %1066
    %1068 = vrot.lane.b32.xlu0 %v429, 16
    %v1069 = vpop.permute.xlu0 %1068
    %1070 = vrot.lane.b32.xlu0 %v430, 16
    %v1071 = vpop.permute.xlu0 %1070
    %1072 = vrot.lane.b32.xlu0 %v431, 16
    %v1073 = vpop.permute.xlu0 %1072
    %1074 = vrot.lane.b32.xlu0 %v432, 16
    %v1075 = vpop.permute.xlu0 %1074
    %1076 = vrot.lane.b32.xlu0 %v433, 16
    %v1077 = vpop.permute.xlu0 %1076
    %1078 = vrot.lane.b32.xlu0 %v434, 16
    %v1079 = vpop.permute.xlu0 %1078
    %1080 = vrot.lane.b32.xlu0 %v435, 16
    %v1081 = vpop.permute.xlu0 %1080
    %1082 = vrot.lane.b32.xlu0 %v436, 16
    %v1083 = vpop.permute.xlu0 %1082
    %1084 = vrot.lane.b32.xlu0 %v437, 16
    %v1085 = vpop.permute.xlu0 %1084
    %1086 = vrot.lane.b32.xlu0 %v438, 16
    %v1087 = vpop.permute.xlu0 %1086
    %1088 = vrot.lane.b32.xlu0 %v439, 16
    %v1089 = vpop.permute.xlu0 %1088
    %1090 = vrot.lane.b32.xlu0 %v440, 16
    %v1091 = vpop.permute.xlu0 %1090
    %1092 = vrot.lane.b32.xlu0 %v441, 16
    %v1093 = vpop.permute.xlu0 %1092
    %1094 = vrot.lane.b32.xlu0 %v442, 16
    %v1095 = vpop.permute.xlu0 %1094
    %1096 = vrot.lane.b32.xlu0 %v443, 16
    %v1097 = vpop.permute.xlu0 %1096
    %1098 = vrot.lane.b32.xlu0 %v444, 16
    %v1099 = vpop.permute.xlu0 %1098
    %1100 = vrot.lane.b32.xlu0 %v445, 16
    %v1101 = vpop.permute.xlu0 %1100
    %1102 = vrot.lane.b32.xlu0 %v446, 16
    %v1103 = vpop.permute.xlu0 %1102
    %1104 = vrot.lane.b32.xlu0 %v447, 16
    %v1105 = vpop.permute.xlu0 %1104
    %1106 = vrot.lane.b32.xlu0 %v448, 16
    %v1107 = vpop.permute.xlu0 %1106
    %1108 = vrot.lane.b32.xlu0 %v449, 16
    %v1109 = vpop.permute.xlu0 %1108
    %1110 = vrot.lane.b32.xlu0 %v450, 16
    %v1111 = vpop.permute.xlu0 %1110
    %1112 = vrot.lane.b32.xlu0 %v451, 16
    %v1113 = vpop.permute.xlu0 %1112
    %1114 = vrot.lane.b32.xlu0 %v452, 16
    %v1115 = vpop.permute.xlu0 %1114
    %1116 = vrot.lane.b32.xlu0 %v453, 16
    %v1117 = vpop.permute.xlu0 %1116
    %1118 = vrot.lane.b32.xlu0 %v454, 16
    %v1119 = vpop.permute.xlu0 %1118
    %1120 = vrot.lane.b32.xlu0 %v455, 16
    %v1121 = vpop.permute.xlu0 %1120
    %1122 = vrot.lane.b32.xlu0 %v456, 16
    %v1123 = vpop.permute.xlu0 %1122
    %1124 = vrot.lane.b32.xlu0 %v457, 16
    %v1125 = vpop.permute.xlu0 %1124
    %1126 = vrot.lane.b32.xlu0 %v458, 16
    %v1127 = vpop.permute.xlu0 %1126
    %1128 = vrot.lane.b32.xlu0 %v459, 16
    %v1129 = vpop.permute.xlu0 %1128
    %1130 = vrot.lane.b32.xlu0 %v460, 16
    %v1131 = vpop.permute.xlu0 %1130
    %1132 = vrot.lane.b32.xlu0 %v461, 16
    %v1133 = vpop.permute.xlu0 %1132
    %1134 = vrot.lane.b32.xlu0 %v462, 16
    %v1135 = vpop.permute.xlu0 %1134
    %1136 = vrot.lane.b32.xlu0 %v463, 16
    %v1137 = vpop.permute.xlu0 %1136
    %1138 = vrot.lane.b32.xlu0 %v464, 16
    %v1139 = vpop.permute.xlu0 %1138
    %1140 = vrot.lane.b32.xlu0 %v465, 16
    %v1141 = vpop.permute.xlu0 %1140
    %1142 = vrot.lane.b32.xlu0 %v466, 16
    %v1143 = vpop.permute.xlu0 %1142
    %1144 = vrot.lane.b32.xlu0 %v467, 16
    %v1145 = vpop.permute.xlu0 %1144
    %1146 = vrot.lane.b32.xlu0 %v468, 16
    %v1147 = vpop.permute.xlu0 %1146
    %1148 = vrot.lane.b32.xlu0 %v469, 16
    %v1149 = vpop.permute.xlu0 %1148
    %1150 = vrot.lane.b32.xlu0 %v470, 16
    %v1151 = vpop.permute.xlu0 %1150
    %1152 = vrot.lane.b32.xlu0 %v471, 16
    %v1153 = vpop.permute.xlu0 %1152
    %1154 = vrot.lane.b32.xlu0 %v472, 16
    %v1155 = vpop.permute.xlu0 %1154
    %1156 = vrot.lane.b32.xlu0 %v473, 16
    %v1157 = vpop.permute.xlu0 %1156
    %1158 = vrot.lane.b32.xlu0 %v474, 16
    %v1159 = vpop.permute.xlu0 %1158
    %1224 = vrot.lane.b32.xlu0 %v412, 20
    %v1225 = vpop.permute.xlu0 %1224
    %1226 = vrot.lane.b32.xlu0 %v413, 20
    %v1227 = vpop.permute.xlu0 %1226
    %1228 = vrot.lane.b32.xlu0 %v414, 20
    %v1229 = vpop.permute.xlu0 %1228
    %1230 = vrot.lane.b32.xlu0 %v415, 20
    %v1231 = vpop.permute.xlu0 %1230
    %1232 = vrot.lane.b32.xlu0 %v416, 20
    %v1233 = vpop.permute.xlu0 %1232
    %1234 = vrot.lane.b32.xlu0 %v417, 20
    %v1235 = vpop.permute.xlu0 %1234
    %1236 = vrot.lane.b32.xlu0 %v418, 20
    %v1237 = vpop.permute.xlu0 %1236
    %1238 = vrot.lane.b32.xlu0 0.0, 20
    %v1239 = vpop.permute.xlu0 %1238
    %1240 = vrot.lane.b32.xlu0 %v420, 20
    %v1241 = vpop.permute.xlu0 %1240
    %1242 = vrot.lane.b32.xlu0 %v421, 20
    %v1243 = vpop.permute.xlu0 %1242
    %1244 = vrot.lane.b32.xlu0 %v422, 20
    %v1245 = vpop.permute.xlu0 %1244
    %1246 = vrot.lane.b32.xlu0 %v423, 20
    %v1247 = vpop.permute.xlu0 %1246
    %1248 = vrot.lane.b32.xlu0 %v424, 20
    %v1249 = vpop.permute.xlu0 %1248
    %1250 = vrot.lane.b32.xlu0 %v425, 20
    %v1251 = vpop.permute.xlu0 %1250
    %1252 = vrot.lane.b32.xlu0 %v426, 20
    %v1253 = vpop.permute.xlu0 %1252
    %1254 = vrot.lane.b32.xlu0 %v428, 20
    %v1255 = vpop.permute.xlu0 %1254
    %1256 = vrot.lane.b32.xlu0 %v429, 20
    %v1257 = vpop.permute.xlu0 %1256
    %1258 = vrot.lane.b32.xlu0 %v430, 20
    %v1259 = vpop.permute.xlu0 %1258
    %1260 = vrot.lane.b32.xlu0 %v431, 20
    %v1261 = vpop.permute.xlu0 %1260
    %1262 = vrot.lane.b32.xlu0 %v432, 20
    %v1263 = vpop.permute.xlu0 %1262
    %1264 = vrot.lane.b32.xlu0 %v433, 20
    %v1265 = vpop.permute.xlu0 %1264
    %1266 = vrot.lane.b32.xlu0 %v434, 20
    %v1267 = vpop.permute.xlu0 %1266
    %1268 = vrot.lane.b32.xlu0 %v436, 20
    %v1269 = vpop.permute.xlu0 %1268
    %1270 = vrot.lane.b32.xlu0 %v437, 20
    %v1271 = vpop.permute.xlu0 %1270
    %1272 = vrot.lane.b32.xlu0 %v438, 20
    %v1273 = vpop.permute.xlu0 %1272
    %1274 = vrot.lane.b32.xlu0 %v439, 20
    %v1275 = vpop.permute.xlu0 %1274
    %1276 = vrot.lane.b32.xlu0 %v440, 20
    %v1277 = vpop.permute.xlu0 %1276
    %1278 = vrot.lane.b32.xlu0 %v441, 20
    %v1279 = vpop.permute.xlu0 %1278
    %1280 = vrot.lane.b32.xlu0 %v442, 20
    %v1281 = vpop.permute.xlu0 %1280
    %1282 = vrot.lane.b32.xlu0 %v444, 20
    %v1283 = vpop.permute.xlu0 %1282
    %1284 = vrot.lane.b32.xlu0 %v445, 20
    %v1285 = vpop.permute.xlu0 %1284
    %1286 = vrot.lane.b32.xlu0 %v446, 20
    %v1287 = vpop.permute.xlu0 %1286
    %1288 = vrot.lane.b32.xlu0 %v447, 20
    %v1289 = vpop.permute.xlu0 %1288
    %1290 = vrot.lane.b32.xlu0 %v448, 20
    %v1291 = vpop.permute.xlu0 %1290
    %1292 = vrot.lane.b32.xlu0 %v449, 20
    %v1293 = vpop.permute.xlu0 %1292
    %1294 = vrot.lane.b32.xlu0 %v450, 20
    %v1295 = vpop.permute.xlu0 %1294
    %1296 = vrot.lane.b32.xlu0 %v452, 20
    %v1297 = vpop.permute.xlu0 %1296
    %1298 = vrot.lane.b32.xlu0 %v453, 20
    %v1299 = vpop.permute.xlu0 %1298
    %1300 = vrot.lane.b32.xlu0 %v454, 20
    %v1301 = vpop.permute.xlu0 %1300
    %1302 = vrot.lane.b32.xlu0 %v455, 20
    %v1303 = vpop.permute.xlu0 %1302
    %1304 = vrot.lane.b32.xlu0 %v456, 20
    %v1305 = vpop.permute.xlu0 %1304
    %1306 = vrot.lane.b32.xlu0 %v457, 20
    %v1307 = vpop.permute.xlu0 %1306
    %1308 = vrot.lane.b32.xlu0 %v458, 20
    %v1309 = vpop.permute.xlu0 %1308
    %1310 = vrot.lane.b32.xlu0 %v460, 20
    %v1311 = vpop.permute.xlu0 %1310
    %1312 = vrot.lane.b32.xlu0 %v461, 20
    %v1313 = vpop.permute.xlu0 %1312
    %1314 = vrot.lane.b32.xlu0 %v462, 20
    %v1315 = vpop.permute.xlu0 %1314
    %1316 = vrot.lane.b32.xlu0 %v463, 20
    %v1317 = vpop.permute.xlu0 %1316
    %1318 = vrot.lane.b32.xlu0 %v464, 20
    %v1319 = vpop.permute.xlu0 %1318
    %1320 = vrot.lane.b32.xlu0 %v465, 20
    %v1321 = vpop.permute.xlu0 %1320
    %1322 = vrot.lane.b32.xlu0 %v466, 20
    %v1323 = vpop.permute.xlu0 %1322
    %1324 = vrot.lane.b32.xlu0 %v468, 20
    %v1325 = vpop.permute.xlu0 %1324
    %1326 = vrot.lane.b32.xlu0 %v469, 20
    %v1327 = vpop.permute.xlu0 %1326
    %1328 = vrot.lane.b32.xlu0 %v470, 20
    %v1329 = vpop.permute.xlu0 %1328
    %1330 = vrot.lane.b32.xlu0 %v471, 20
    %v1331 = vpop.permute.xlu0 %1330
    %1332 = vrot.lane.b32.xlu0 %v472, 20
    %v1333 = vpop.permute.xlu0 %1332
    %1334 = vrot.lane.b32.xlu0 %v473, 20
    %v1335 = vpop.permute.xlu0 %1334
    %1336 = vrot.lane.b32.xlu0 %v474, 20
    %v1337 = vpop.permute.xlu0 %1336
    %1395 = vrot.lane.b32.xlu0 0.0, 24
    %v1396 = vpop.permute.xlu0 %1395
    %1397 = vrot.lane.b32.xlu0 %v419, 24
    %v1398 = vpop.permute.xlu0 %1397
    %1399 = vrot.lane.b32.xlu0 %v420, 24
    %v1400 = vpop.permute.xlu0 %1399
    %1401 = vrot.lane.b32.xlu0 %v421, 24
    %v1402 = vpop.permute.xlu0 %1401
    %1403 = vrot.lane.b32.xlu0 %v422, 24
    %v1404 = vpop.permute.xlu0 %1403
    %1405 = vrot.lane.b32.xlu0 %v423, 24
    %v1406 = vpop.permute.xlu0 %1405
    %1407 = vrot.lane.b32.xlu0 %v424, 24
    %v1408 = vpop.permute.xlu0 %1407
    %1409 = vrot.lane.b32.xlu0 %v425, 24
    %v1410 = vpop.permute.xlu0 %1409
    %1411 = vrot.lane.b32.xlu0 %v427, 24
    %v1412 = vpop.permute.xlu0 %1411
    %1413 = vrot.lane.b32.xlu0 %v428, 24
    %v1414 = vpop.permute.xlu0 %1413
    %1415 = vrot.lane.b32.xlu0 %v429, 24
    %v1416 = vpop.permute.xlu0 %1415
    %1417 = vrot.lane.b32.xlu0 %v430, 24
    %v1418 = vpop.permute.xlu0 %1417
    %1419 = vrot.lane.b32.xlu0 %v431, 24
    %v1420 = vpop.permute.xlu0 %1419
    %1421 = vrot.lane.b32.xlu0 %v432, 24
    %v1422 = vpop.permute.xlu0 %1421
    %1423 = vrot.lane.b32.xlu0 %v433, 24
    %v1424 = vpop.permute.xlu0 %1423
    %1425 = vrot.lane.b32.xlu0 %v435, 24
    %v1426 = vpop.permute.xlu0 %1425
    %1427 = vrot.lane.b32.xlu0 %v436, 24
    %v1428 = vpop.permute.xlu0 %1427
    %1429 = vrot.lane.b32.xlu0 %v437, 24
    %v1430 = vpop.permute.xlu0 %1429
    %1431 = vrot.lane.b32.xlu0 %v438, 24
    %v1432 = vpop.permute.xlu0 %1431
    %1433 = vrot.lane.b32.xlu0 %v439, 24
    %v1434 = vpop.permute.xlu0 %1433
    %1435 = vrot.lane.b32.xlu0 %v440, 24
    %v1436 = vpop.permute.xlu0 %1435
    %1437 = vrot.lane.b32.xlu0 %v441, 24
    %v1438 = vpop.permute.xlu0 %1437
    %1439 = vrot.lane.b32.xlu0 %v443, 24
    %v1440 = vpop.permute.xlu0 %1439
    %1441 = vrot.lane.b32.xlu0 %v444, 24
    %v1442 = vpop.permute.xlu0 %1441
    %1443 = vrot.lane.b32.xlu0 %v445, 24
    %v1444 = vpop.permute.xlu0 %1443
    %1445 = vrot.lane.b32.xlu0 %v446, 24
    %v1446 = vpop.permute.xlu0 %1445
    %1447 = vrot.lane.b32.xlu0 %v447, 24
    %v1448 = vpop.permute.xlu0 %1447
    %1449 = vrot.lane.b32.xlu0 %v448, 24
    %v1450 = vpop.permute.xlu0 %1449
    %1451 = vrot.lane.b32.xlu0 %v449, 24
    %v1452 = vpop.permute.xlu0 %1451
    %1453 = vrot.lane.b32.xlu0 %v451, 24
    %v1454 = vpop.permute.xlu0 %1453
    %1455 = vrot.lane.b32.xlu0 %v452, 24
    %v1456 = vpop.permute.xlu0 %1455
    %1457 = vrot.lane.b32.xlu0 %v453, 24
    %v1458 = vpop.permute.xlu0 %1457
    %1459 = vrot.lane.b32.xlu0 %v454, 24
    %v1460 = vpop.permute.xlu0 %1459
    %1461 = vrot.lane.b32.xlu0 %v455, 24
    %v1462 = vpop.permute.xlu0 %1461
    %1463 = vrot.lane.b32.xlu0 %v456, 24
    %v1464 = vpop.permute.xlu0 %1463
    %1465 = vrot.lane.b32.xlu0 %v457, 24
    %v1466 = vpop.permute.xlu0 %1465
    %1467 = vrot.lane.b32.xlu0 %v459, 24
    %v1468 = vpop.permute.xlu0 %1467
    %1469 = vrot.lane.b32.xlu0 %v460, 24
    %v1470 = vpop.permute.xlu0 %1469
    %1471 = vrot.lane.b32.xlu0 %v461, 24
    %v1472 = vpop.permute.xlu0 %1471
    %1473 = vrot.lane.b32.xlu0 %v462, 24
    %v1474 = vpop.permute.xlu0 %1473
    %1475 = vrot.lane.b32.xlu0 %v463, 24
    %v1476 = vpop.permute.xlu0 %1475
    %1477 = vrot.lane.b32.xlu0 %v464, 24
    %v1478 = vpop.permute.xlu0 %1477
    %1479 = vrot.lane.b32.xlu0 %v465, 24
    %v1480 = vpop.permute.xlu0 %1479
    %1481 = vrot.lane.b32.xlu0 %v467, 24
    %v1482 = vpop.permute.xlu0 %1481
    %1483 = vrot.lane.b32.xlu0 %v468, 24
    %v1484 = vpop.permute.xlu0 %1483
    %1485 = vrot.lane.b32.xlu0 %v469, 24
    %v1486 = vpop.permute.xlu0 %1485
    %1487 = vrot.lane.b32.xlu0 %v470, 24
    %v1488 = vpop.permute.xlu0 %1487
    %1489 = vrot.lane.b32.xlu0 %v471, 24
    %v1490 = vpop.permute.xlu0 %1489
    %1491 = vrot.lane.b32.xlu0 %v472, 24
    %v1492 = vpop.permute.xlu0 %1491
    %1493 = vrot.lane.b32.xlu0 %v473, 24
    %v1494 = vpop.permute.xlu0 %1493
    %1545 = vrot.lane.b32.xlu0 %v419, 28
    %v1546 = vpop.permute.xlu0 %1545
    %1547 = vrot.lane.b32.xlu0 %v420, 28
    %v1548 = vpop.permute.xlu0 %1547
    %1549 = vrot.lane.b32.xlu0 %v421, 28
    %v1550 = vpop.permute.xlu0 %1549
    %1551 = vrot.lane.b32.xlu0 %v422, 28
    %v1552 = vpop.permute.xlu0 %1551
    %1553 = vrot.lane.b32.xlu0 %v423, 28
    %v1554 = vpop.permute.xlu0 %1553
    %1555 = vrot.lane.b32.xlu0 %v424, 28
    %v1556 = vpop.permute.xlu0 %1555
    %1557 = vrot.lane.b32.xlu0 %v425, 28
    %v1558 = vpop.permute.xlu0 %1557
    %1559 = vrot.lane.b32.xlu0 %v426, 28
    %v1560 = vpop.permute.xlu0 %1559
    %1561 = vrot.lane.b32.xlu0 %v427, 28
    %v1562 = vpop.permute.xlu0 %1561
    %1563 = vrot.lane.b32.xlu0 %v428, 28
    %v1564 = vpop.permute.xlu0 %1563
    %1565 = vrot.lane.b32.xlu0 %v429, 28
    %v1566 = vpop.permute.xlu0 %1565
    %1567 = vrot.lane.b32.xlu0 %v430, 28
    %v1568 = vpop.permute.xlu0 %1567
    %1569 = vrot.lane.b32.xlu0 %v431, 28
    %v1570 = vpop.permute.xlu0 %1569
    %1571 = vrot.lane.b32.xlu0 %v432, 28
    %v1572 = vpop.permute.xlu0 %1571
    %1573 = vrot.lane.b32.xlu0 %v433, 28
    %v1574 = vpop.permute.xlu0 %1573
    %1575 = vrot.lane.b32.xlu0 %v434, 28
    %v1576 = vpop.permute.xlu0 %1575
    %1577 = vrot.lane.b32.xlu0 %v435, 28
    %v1578 = vpop.permute.xlu0 %1577
    %1579 = vrot.lane.b32.xlu0 %v436, 28
    %v1580 = vpop.permute.xlu0 %1579
    %1581 = vrot.lane.b32.xlu0 %v437, 28
    %v1582 = vpop.permute.xlu0 %1581
    %1583 = vrot.lane.b32.xlu0 %v438, 28
    %v1584 = vpop.permute.xlu0 %1583
    %1585 = vrot.lane.b32.xlu0 %v439, 28
    %v1586 = vpop.permute.xlu0 %1585
    %1587 = vrot.lane.b32.xlu0 %v440, 28
    %v1588 = vpop.permute.xlu0 %1587
    %1589 = vrot.lane.b32.xlu0 %v441, 28
    %v1590 = vpop.permute.xlu0 %1589
    %1591 = vrot.lane.b32.xlu0 %v442, 28
    %v1592 = vpop.permute.xlu0 %1591
    %1593 = vrot.lane.b32.xlu0 %v443, 28
    %v1594 = vpop.permute.xlu0 %1593
    %1595 = vrot.lane.b32.xlu0 %v444, 28
    %v1596 = vpop.permute.xlu0 %1595
    %1597 = vrot.lane.b32.xlu0 %v445, 28
    %v1598 = vpop.permute.xlu0 %1597
    %1599 = vrot.lane.b32.xlu0 %v446, 28
    %v1600 = vpop.permute.xlu0 %1599
    %1601 = vrot.lane.b32.xlu0 %v447, 28
    %v1602 = vpop.permute.xlu0 %1601
    %1603 = vrot.lane.b32.xlu0 %v448, 28
    %v1604 = vpop.permute.xlu0 %1603
    %1605 = vrot.lane.b32.xlu0 %v449, 28
    %v1606 = vpop.permute.xlu0 %1605
    %1607 = vrot.lane.b32.xlu0 %v450, 28
    %v1608 = vpop.permute.xlu0 %1607
    %1609 = vrot.lane.b32.xlu0 %v451, 28
    %v1610 = vpop.permute.xlu0 %1609
    %1611 = vrot.lane.b32.xlu0 %v452, 28
    %v1612 = vpop.permute.xlu0 %1611
    %1613 = vrot.lane.b32.xlu0 %v453, 28
    %v1614 = vpop.permute.xlu0 %1613
    %1615 = vrot.lane.b32.xlu0 %v454, 28
    %v1616 = vpop.permute.xlu0 %1615
    %1617 = vrot.lane.b32.xlu0 %v455, 28
    %v1618 = vpop.permute.xlu0 %1617
    %1619 = vrot.lane.b32.xlu0 %v456, 28
    %v1620 = vpop.permute.xlu0 %1619
    %1621 = vrot.lane.b32.xlu0 %v457, 28
    %v1622 = vpop.permute.xlu0 %1621
    %1623 = vrot.lane.b32.xlu0 %v458, 28
    %v1624 = vpop.permute.xlu0 %1623
    %1625 = vrot.lane.b32.xlu0 %v459, 28
    %v1626 = vpop.permute.xlu0 %1625
    %1627 = vrot.lane.b32.xlu0 %v460, 28
    %v1628 = vpop.permute.xlu0 %1627
    %1629 = vrot.lane.b32.xlu0 %v461, 28
    %v1630 = vpop.permute.xlu0 %1629
    %1631 = vrot.lane.b32.xlu0 %v462, 28
    %v1632 = vpop.permute.xlu0 %1631
    %1633 = vrot.lane.b32.xlu0 %v463, 28
    %v1634 = vpop.permute.xlu0 %1633
    %1635 = vrot.lane.b32.xlu0 %v464, 28
    %v1636 = vpop.permute.xlu0 %1635
    %1637 = vrot.lane.b32.xlu0 %v465, 28
    %v1638 = vpop.permute.xlu0 %1637
    %1639 = vrot.lane.b32.xlu0 %v466, 28
    %v1640 = vpop.permute.xlu0 %1639
    %1641 = vrot.lane.b32.xlu0 %v467, 28
    %v1642 = vpop.permute.xlu0 %1641
    %1643 = vrot.lane.b32.xlu0 %v468, 28
    %v1644 = vpop.permute.xlu0 %1643
    %1645 = vrot.lane.b32.xlu0 %v469, 28
    %v1646 = vpop.permute.xlu0 %1645
    %1647 = vrot.lane.b32.xlu0 %v470, 28
    %v1648 = vpop.permute.xlu0 %1647
    %1649 = vrot.lane.b32.xlu0 %v471, 28
    %v1650 = vpop.permute.xlu0 %1649
    %1651 = vrot.lane.b32.xlu0 %v472, 28
    %v1652 = vpop.permute.xlu0 %1651
    %1653 = vrot.lane.b32.xlu0 %v473, 28
    %v1654 = vpop.permute.xlu0 %1653
    %1655 = vrot.lane.b32.xlu0 %v474, 28
    %v1656 = vpop.permute.xlu0 %1655
    %1657 = vrot.lane.b32.xlu0 0.0, 28
    %v1658 = vpop.permute.xlu0 %1657
    %1716 = vrot.lane.b32.xlu0 %v420, 32
    %v1717 = vpop.permute.xlu0 %1716
    %1718 = vrot.lane.b32.xlu0 %v421, 32
    %v1719 = vpop.permute.xlu0 %1718
    %1720 = vrot.lane.b32.xlu0 %v422, 32
    %v1721 = vpop.permute.xlu0 %1720
    %1722 = vrot.lane.b32.xlu0 %v423, 32
    %v1723 = vpop.permute.xlu0 %1722
    %1724 = vrot.lane.b32.xlu0 %v424, 32
    %v1725 = vpop.permute.xlu0 %1724
    %1726 = vrot.lane.b32.xlu0 %v425, 32
    %v1727 = vpop.permute.xlu0 %1726
    %1728 = vrot.lane.b32.xlu0 %v426, 32
    %v1729 = vpop.permute.xlu0 %1728
    %1730 = vrot.lane.b32.xlu0 0.0, 32
    %v1731 = vpop.permute.xlu0 %1730
    %1732 = vrot.lane.b32.xlu0 %v428, 32
    %v1733 = vpop.permute.xlu0 %1732
    %1734 = vrot.lane.b32.xlu0 %v429, 32
    %v1735 = vpop.permute.xlu0 %1734
    %1736 = vrot.lane.b32.xlu0 %v430, 32
    %v1737 = vpop.permute.xlu0 %1736
    %1738 = vrot.lane.b32.xlu0 %v431, 32
    %v1739 = vpop.permute.xlu0 %1738
    %1740 = vrot.lane.b32.xlu0 %v432, 32
    %v1741 = vpop.permute.xlu0 %1740
    %1742 = vrot.lane.b32.xlu0 %v433, 32
    %v1743 = vpop.permute.xlu0 %1742
    %1744 = vrot.lane.b32.xlu0 %v434, 32
    %v1745 = vpop.permute.xlu0 %1744
    %1746 = vrot.lane.b32.xlu0 %v436, 32
    %v1747 = vpop.permute.xlu0 %1746
    %1748 = vrot.lane.b32.xlu0 %v437, 32
    %v1749 = vpop.permute.xlu0 %1748
    %1750 = vrot.lane.b32.xlu0 %v438, 32
    %v1751 = vpop.permute.xlu0 %1750
    %1752 = vrot.lane.b32.xlu0 %v439, 32
    %v1753 = vpop.permute.xlu0 %1752
    %1754 = vrot.lane.b32.xlu0 %v440, 32
    %v1755 = vpop.permute.xlu0 %1754
    %1756 = vrot.lane.b32.xlu0 %v441, 32
    %v1757 = vpop.permute.xlu0 %1756
    %1758 = vrot.lane.b32.xlu0 %v442, 32
    %v1759 = vpop.permute.xlu0 %1758
    %1760 = vrot.lane.b32.xlu0 %v444, 32
    %v1761 = vpop.permute.xlu0 %1760
    %1762 = vrot.lane.b32.xlu0 %v445, 32
    %v1763 = vpop.permute.xlu0 %1762
    %1764 = vrot.lane.b32.xlu0 %v446, 32
    %v1765 = vpop.permute.xlu0 %1764
    %1766 = vrot.lane.b32.xlu0 %v447, 32
    %v1767 = vpop.permute.xlu0 %1766
    %1768 = vrot.lane.b32.xlu0 %v448, 32
    %v1769 = vpop.permute.xlu0 %1768
    %1770 = vrot.lane.b32.xlu0 %v449, 32
    %v1771 = vpop.permute.xlu0 %1770
    %1772 = vrot.lane.b32.xlu0 %v450, 32
    %v1773 = vpop.permute.xlu0 %1772
    %1774 = vrot.lane.b32.xlu0 %v452, 32
    %v1775 = vpop.permute.xlu0 %1774
    %1776 = vrot.lane.b32.xlu0 %v453, 32
    %v1777 = vpop.permute.xlu0 %1776
    %1778 = vrot.lane.b32.xlu0 %v454, 32
    %v1779 = vpop.permute.xlu0 %1778
    %1780 = vrot.lane.b32.xlu0 %v455, 32
    %v1781 = vpop.permute.xlu0 %1780
    %1782 = vrot.lane.b32.xlu0 %v456, 32
    %v1783 = vpop.permute.xlu0 %1782
    %1784 = vrot.lane.b32.xlu0 %v457, 32
    %v1785 = vpop.permute.xlu0 %1784
    %1786 = vrot.lane.b32.xlu0 %v458, 32
    %v1787 = vpop.permute.xlu0 %1786
    %1788 = vrot.lane.b32.xlu0 %v460, 32
    %v1789 = vpop.permute.xlu0 %1788
    %1790 = vrot.lane.b32.xlu0 %v461, 32
    %v1791 = vpop.permute.xlu0 %1790
    %1792 = vrot.lane.b32.xlu0 %v462, 32
    %v1793 = vpop.permute.xlu0 %1792
    %1794 = vrot.lane.b32.xlu0 %v463, 32
    %v1795 = vpop.permute.xlu0 %1794
    %1796 = vrot.lane.b32.xlu0 %v464, 32
    %v1797 = vpop.permute.xlu0 %1796
    %1798 = vrot.lane.b32.xlu0 %v465, 32
    %v1799 = vpop.permute.xlu0 %1798
    %1800 = vrot.lane.b32.xlu0 %v466, 32
    %v1801 = vpop.permute.xlu0 %1800
    %1802 = vrot.lane.b32.xlu0 %v468, 32
    %v1803 = vpop.permute.xlu0 %1802
    %1804 = vrot.lane.b32.xlu0 %v469, 32
    %v1805 = vpop.permute.xlu0 %1804
    %1806 = vrot.lane.b32.xlu0 %v470, 32
    %v1807 = vpop.permute.xlu0 %1806
    %1808 = vrot.lane.b32.xlu0 %v471, 32
    %v1809 = vpop.permute.xlu0 %1808
    %1810 = vrot.lane.b32.xlu0 %v472, 32
    %v1811 = vpop.permute.xlu0 %1810
    %1812 = vrot.lane.b32.xlu0 %v473, 32
    %v1813 = vpop.permute.xlu0 %1812
    %1814 = vrot.lane.b32.xlu0 %v474, 32
    %v1815 = vpop.permute.xlu0 %1814
    %vm1866 = vcmask 31744
    %v1867 = vsel %vm1866, 0.0, %v533
    %v1868 = vsel %vm1866, 0.0, %v535
    %v1869 = vsel %vm1866, %v411, %v537
    %v1870 = vsel %vm1866, %v412, %v539
    %v1871 = vsel %vm1866, %v413, %v541
    %v1872 = vsel %vm1866, %v414, %v543
    %v1873 = vsel %vm1866, %v415, %v545
    %v1874 = vsel %vm1866, %v416, %v547
    %v1875 = vsel %vm1866, %v417, %v549
    %v1876 = vsel %vm1866, 0.0, %v551
    %v1877 = vsel %vm1866, %v419, %v553
    %v1878 = vsel %vm1866, %v420, %v555
    %v1879 = vsel %vm1866, %v421, %v557
    %v1880 = vsel %vm1866, %v422, %v559
    %v1881 = vsel %vm1866, %v423, %v561
    %v1882 = vsel %vm1866, %v424, %v563
    %v1883 = vsel %vm1866, %v425, %v565
    %v1884 = vsel %vm1866, 0.0, %v567
    %v1885 = vsel %vm1866, %v427, %v569
    %v1886 = vsel %vm1866, %v428, %v571
    %v1887 = vsel %vm1866, %v429, %v573
    %v1888 = vsel %vm1866, %v430, %v575
    %v1889 = vsel %vm1866, %v431, %v577
    %v1890 = vsel %vm1866, %v432, %v579
    %v1891 = vsel %vm1866, %v433, %v581
    %v1892 = vsel %vm1866, 0.0, %v583
    %v1893 = vsel %vm1866, %v435, %v585
    %v1894 = vsel %vm1866, %v436, %v587
    %v1895 = vsel %vm1866, %v437, %v589
    %v1896 = vsel %vm1866, %v438, %v591
    %v1897 = vsel %vm1866, %v439, %v593
    %v1898 = vsel %vm1866, %v440, %v595
    %v1899 = vsel %vm1866, %v441, %v597
    %v1900 = vsel %vm1866, 0.0, %v599
    %v1901 = vsel %vm1866, %v443, %v601
    %v1902 = vsel %vm1866, %v444, %v603
    %v1903 = vsel %vm1866, %v445, %v605
    %v1904 = vsel %vm1866, %v446, %v607
    %v1905 = vsel %vm1866, %v447, %v609
    %v1906 = vsel %vm1866, %v448, %v611
    %v1907 = vsel %vm1866, %v449, %v613
    %v1908 = vsel %vm1866, 0.0, %v615
    %v1909 = vsel %vm1866, %v451, %v617
    %v1910 = vsel %vm1866, %v452, %v619
    %v1911 = vsel %vm1866, %v453, %v621
    %v1912 = vsel %vm1866, %v454, %v623
    %v1913 = vsel %vm1866, %v455, %v625
    %v1914 = vsel %vm1866, %v456, %v627
    %v1915 = vsel %vm1866, %v457, %v629
    %v1916 = vsel %vm1866, 0.0, %v631
    %v1917 = vsel %vm1866, %v459, %v633
    %v1918 = vsel %vm1866, %v460, %v635
    %v1919 = vsel %vm1866, %v461, %v637
    %v1920 = vsel %vm1866, %v462, %v639
    %v1921 = vsel %vm1866, %v463, %v641
    %v1922 = vsel %vm1866, %v464, %v643
    %v1923 = vsel %vm1866, %v465, %v645
    %vm1924 = vcmask 64512
    %v1925 = vsel %vm1924, %v1867, %v704
    %v1926 = vsel %vm1924, %v1868, %v706
    %v1927 = vsel %vm1924, %v1869, %v708
    %v1928 = vsel %vm1924, %v1870, %v710
    %v1929 = vsel %vm1924, %v1871, %v712
    %v1930 = vsel %vm1924, %v1872, %v714
    %v1931 = vsel %vm1924, %v1873, %v716
    %v1932 = vsel %vm1924, %v1874, %v718
    %v1933 = vsel %vm1924, %v1875, %v704
    %v1934 = vsel %vm1924, %v1876, %v720
    %v1935 = vsel %vm1924, %v1877, %v722
    %v1936 = vsel %vm1924, %v1878, %v724
    %v1937 = vsel %vm1924, %v1879, %v726
    %v1938 = vsel %vm1924, %v1880, %v728
    %v1939 = vsel %vm1924, %v1881, %v730
    %v1940 = vsel %vm1924, %v1882, %v732
    %v1941 = vsel %vm1924, %v1883, %v704
    %v1942 = vsel %vm1924, %v1884, %v734
    %v1943 = vsel %vm1924, %v1885, %v736
    %v1944 = vsel %vm1924, %v1886, %v738
    %v1945 = vsel %vm1924, %v1887, %v740
    %v1946 = vsel %vm1924, %v1888, %v742
    %v1947 = vsel %vm1924, %v1889, %v744
    %v1948 = vsel %vm1924, %v1890, %v746
    %v1949 = vsel %vm1924, %v1891, %v704
    %v1950 = vsel %vm1924, %v1892, %v748
    %v1951 = vsel %vm1924, %v1893, %v750
    %v1952 = vsel %vm1924, %v1894, %v752
    %v1953 = vsel %vm1924, %v1895, %v754
    %v1954 = vsel %vm1924, %v1896, %v756
    %v1955 = vsel %vm1924, %v1897, %v758
    %v1956 = vsel %vm1924, %v1898, %v760
    %v1957 = vsel %vm1924, %v1899, %v704
    %v1958 = vsel %vm1924, %v1900, %v762
    %v1959 = vsel %vm1924, %v1901, %v764
    %v1960 = vsel %vm1924, %v1902, %v766
    %v1961 = vsel %vm1924, %v1903, %v768
    %v1962 = vsel %vm1924, %v1904, %v770
    %v1963 = vsel %vm1924, %v1905, %v772
    %v1964 = vsel %vm1924, %v1906, %v774
    %v1965 = vsel %vm1924, %v1907, %v704
    %v1966 = vsel %vm1924, %v1908, %v776
    %v1967 = vsel %vm1924, %v1909, %v778
    %v1968 = vsel %vm1924, %v1910, %v780
    %v1969 = vsel %vm1924, %v1911, %v782
    %v1970 = vsel %vm1924, %v1912, %v784
    %v1971 = vsel %vm1924, %v1913, %v786
    %v1972 = vsel %vm1924, %v1914, %v788
    %v1973 = vsel %vm1924, %v1915, %v704
    %v1974 = vsel %vm1924, %v1916, %v790
    %v1975 = vsel %vm1924, %v1917, %v792
    %v1976 = vsel %vm1924, %v1918, %v794
    %v1977 = vsel %vm1924, %v1919, %v796
    %v1978 = vsel %vm1924, %v1920, %v798
    %v1979 = vsel %vm1924, %v1921, %v800
    %v1980 = vsel %vm1924, %v1922, %v802
    %v1981 = vsel %vm1924, %v1923, %v704
    %vm1982 = vcmask 97280
    %v1983 = vsel %vm1982, %v1925, %v861
    %v1984 = vsel %vm1982, %v1925, %v863
    %v1985 = vsel %vm1982, %v1925, %v865
    %v1986 = vsel %vm1982, %v1925, %v867
    %v1987 = vsel %vm1982, %v1925, %v869
    %v1988 = vsel %vm1982, %v1925, %v871
    %v1989 = vsel %vm1982, %v1925, %v873
    %v1990 = vsel %vm1982, %v1925, %v875
    %v1991 = vsel %vm1982, %v1926, %v861
    %v1992 = vsel %vm1982, %v1927, %v877
    %v1993 = vsel %vm1982, %v1928, %v879
    %v1994 = vsel %vm1982, %v1929, %v881
    %v1995 = vsel %vm1982, %v1930, %v883
    %v1996 = vsel %vm1982, %v1931, %v885
    %v1997 = vsel %vm1982, %v1932, %v887
    %v1998 = vsel %vm1982, %v1933, %v889
    %v1999 = vsel %vm1982, %v1934, %v861
    %v2000 = vsel %vm1982, %v1935, %v891
    %v2001 = vsel %vm1982, %v1936, %v893
    %v2002 = vsel %vm1982, %v1937, %v895
    %v2003 = vsel %vm1982, %v1938, %v897
    %v2004 = vsel %vm1982, %v1939, %v899
    %v2005 = vsel %vm1982, %v1940, %v901
    %v2006 = vsel %vm1982, %v1941, %v903
    %v2007 = vsel %vm1982, %v1942, %v861
    %v2008 = vsel %vm1982, %v1943, %v905
    %v2009 = vsel %vm1982, %v1944, %v907
    %v2010 = vsel %vm1982, %v1945, %v909
    %v2011 = vsel %vm1982, %v1946, %v911
    %v2012 = vsel %vm1982, %v1947, %v913
    %v2013 = vsel %vm1982, %v1948, %v915
    %v2014 = vsel %vm1982, %v1949, %v917
    %v2015 = vsel %vm1982, %v1950, %v861
    %v2016 = vsel %vm1982, %v1951, %v919
    %v2017 = vsel %vm1982, %v1952, %v921
    %v2018 = vsel %vm1982, %v1953, %v923
    %v2019 = vsel %vm1982, %v1954, %v925
    %v2020 = vsel %vm1982, %v1955, %v927
    %v2021 = vsel %vm1982, %v1956, %v929
    %v2022 = vsel %vm1982, %v1957, %v931
    %v2023 = vsel %vm1982, %v1958, %v861
    %v2024 = vsel %vm1982, %v1959, %v933
    %v2025 = vsel %vm1982, %v1960, %v935
    %v2026 = vsel %vm1982, %v1961, %v937
    %v2027 = vsel %vm1982, %v1962, %v939
    %v2028 = vsel %vm1982, %v1963, %v941
    %v2029 = vsel %vm1982, %v1964, %v943
    %v2030 = vsel %vm1982, %v1965, %v945
    %v2031 = vsel %vm1982, %v1966, %v861
    %v2032 = vsel %vm1982, %v1967, %v947
    %v2033 = vsel %vm1982, %v1968, %v949
    %v2034 = vsel %vm1982, %v1969, %v951
    %v2035 = vsel %vm1982, %v1970, %v953
    %v2036 = vsel %vm1982, %v1971, %v955
    %v2037 = vsel %vm1982, %v1972, %v957
    %v2038 = vsel %vm1982, %v1973, %v959
    %v2039 = vsel %vm1982, %v1974, %v861
    %v2040 = vsel %vm1982, %v1975, %v961
    %v2041 = vsel %vm1982, %v1976, %v963
    %v2042 = vsel %vm1982, %v1977, %v965
    %v2043 = vsel %vm1982, %v1978, %v967
    %v2044 = vsel %vm1982, %v1979, %v969
    %v2045 = vsel %vm1982, %v1980, %v971
    %v2046 = vsel %vm1982, %v1981, %v973
    %vm2047 = vcmask 130048
    %v2048 = vsel %vm2047, %v1983, %v1033
    %v2049 = vsel %vm2047, %v1984, %v1035
    %v2050 = vsel %vm2047, %v1985, %v1037
    %v2051 = vsel %vm2047, %v1986, %v1039
    %v2052 = vsel %vm2047, %v1987, %v1041
    %v2053 = vsel %vm2047, %v1988, %v1043
    %v2054 = vsel %vm2047, %v1989, %v1045
    %v2055 = vsel %vm2047, %v1990, %v1047
    %v2056 = vsel %vm2047, %v1991, %v1049
    %v2057 = vsel %vm2047, %v1992, %v1051
    %v2058 = vsel %vm2047, %v1993, %v1053
    %v2059 = vsel %vm2047, %v1994, %v1055
    %v2060 = vsel %vm2047, %v1995, %v1057
    %v2061 = vsel %vm2047, %v1996, %v1059
    %v2062 = vsel %vm2047, %v1997, %v1061
    %v2063 = vsel %vm2047, %v1998, %v1063
    %v2064 = vsel %vm2047, %v1999, %v1065
    %v2065 = vsel %vm2047, %v2000, %v1067
    %v2066 = vsel %vm2047, %v2001, %v1069
    %v2067 = vsel %vm2047, %v2002, %v1071
    %v2068 = vsel %vm2047, %v2003, %v1073
    %v2069 = vsel %vm2047, %v2004, %v1075
    %v2070 = vsel %vm2047, %v2005, %v1077
    %v2071 = vsel %vm2047, %v2006, %v1079
    %v2072 = vsel %vm2047, %v2007, %v1081
    %v2073 = vsel %vm2047, %v2008, %v1083
    %v2074 = vsel %vm2047, %v2009, %v1085
    %v2075 = vsel %vm2047, %v2010, %v1087
    %v2076 = vsel %vm2047, %v2011, %v1089
    %v2077 = vsel %vm2047, %v2012, %v1091
    %v2078 = vsel %vm2047, %v2013, %v1093
    %v2079 = vsel %vm2047, %v2014, %v1095
    %v2080 = vsel %vm2047, %v2015, %v1097
    %v2081 = vsel %vm2047, %v2016, %v1099
    %v2082 = vsel %vm2047, %v2017, %v1101
    %v2083 = vsel %vm2047, %v2018, %v1103
    %v2084 = vsel %vm2047, %v2019, %v1105
    %v2085 = vsel %vm2047, %v2020, %v1107
    %v2086 = vsel %vm2047, %v2021, %v1109
    %v2087 = vsel %vm2047, %v2022, %v1111
    %v2088 = vsel %vm2047, %v2023, %v1113
    %v2089 = vsel %vm2047, %v2024, %v1115
    %v2090 = vsel %vm2047, %v2025, %v1117
    %v2091 = vsel %vm2047, %v2026, %v1119
    %v2092 = vsel %vm2047, %v2027, %v1121
    %v2093 = vsel %vm2047, %v2028, %v1123
    %v2094 = vsel %vm2047, %v2029, %v1125
    %v2095 = vsel %vm2047, %v2030, %v1127
    %v2096 = vsel %vm2047, %v2031, %v1129
    %v2097 = vsel %vm2047, %v2032, %v1131
    %v2098 = vsel %vm2047, %v2033, %v1133
    %v2099 = vsel %vm2047, %v2034, %v1135
    %v2100 = vsel %vm2047, %v2035, %v1137
    %v2101 = vsel %vm2047, %v2036, %v1139
    %v2102 = vsel %vm2047, %v2037, %v1141
    %v2103 = vsel %vm2047, %v2038, %v1143
    %v2104 = vsel %vm2047, %v2039, %v1145
    %v2105 = vsel %vm2047, %v2040, %v1147
    %v2106 = vsel %vm2047, %v2041, %v1149
    %v2107 = vsel %vm2047, %v2042, %v1151
    %v2108 = vsel %vm2047, %v2043, %v1153
    %v2109 = vsel %vm2047, %v2044, %v1155
    %v2110 = vsel %vm2047, %v2045, %v1157
    %v2111 = vsel %vm2047, %v2046, %v1159
    %vm2112 = vcmask 162816
    %v2113 = vsel %vm2112, %v2048, %v1225
    %v2114 = vsel %vm2112, %v2049, %v1227
    %v2115 = vsel %vm2112, %v2050, %v1229
    %v2116 = vsel %vm2112, %v2051, %v1231
    %v2117 = vsel %vm2112, %v2052, %v1233
    %v2118 = vsel %vm2112, %v2053, %v1235
    %v2119 = vsel %vm2112, %v2054, %v1237
    %v2120 = vsel %vm2112, %v2055, %v1239
    %v2121 = vsel %vm2112, %v2056, %v1241
    %v2122 = vsel %vm2112, %v2057, %v1243
    %v2123 = vsel %vm2112, %v2058, %v1245
    %v2124 = vsel %vm2112, %v2059, %v1247
    %v2125 = vsel %vm2112, %v2060, %v1249
    %v2126 = vsel %vm2112, %v2061, %v1251
    %v2127 = vsel %vm2112, %v2062, %v1253
    %v2128 = vsel %vm2112, %v2063, %v1239
    %v2129 = vsel %vm2112, %v2064, %v1255
    %v2130 = vsel %vm2112, %v2065, %v1257
    %v2131 = vsel %vm2112, %v2066, %v1259
    %v2132 = vsel %vm2112, %v2067, %v1261
    %v2133 = vsel %vm2112, %v2068, %v1263
    %v2134 = vsel %vm2112, %v2069, %v1265
    %v2135 = vsel %vm2112, %v2070, %v1267
    %v2136 = vsel %vm2112, %v2071, %v1239
    %v2137 = vsel %vm2112, %v2072, %v1269
    %v2138 = vsel %vm2112, %v2073, %v1271
    %v2139 = vsel %vm2112, %v2074, %v1273
    %v2140 = vsel %vm2112, %v2075, %v1275
    %v2141 = vsel %vm2112, %v2076, %v1277
    %v2142 = vsel %vm2112, %v2077, %v1279
    %v2143 = vsel %vm2112, %v2078, %v1281
    %v2144 = vsel %vm2112, %v2079, %v1239
    %v2145 = vsel %vm2112, %v2080, %v1283
    %v2146 = vsel %vm2112, %v2081, %v1285
    %v2147 = vsel %vm2112, %v2082, %v1287
    %v2148 = vsel %vm2112, %v2083, %v1289
    %v2149 = vsel %vm2112, %v2084, %v1291
    %v2150 = vsel %vm2112, %v2085, %v1293
    %v2151 = vsel %vm2112, %v2086, %v1295
    %v2152 = vsel %vm2112, %v2087, %v1239
    %v2153 = vsel %vm2112, %v2088, %v1297
    %v2154 = vsel %vm2112, %v2089, %v1299
    %v2155 = vsel %vm2112, %v2090, %v1301
    %v2156 = vsel %vm2112, %v2091, %v1303
    %v2157 = vsel %vm2112, %v2092, %v1305
    %v2158 = vsel %vm2112, %v2093, %v1307
    %v2159 = vsel %vm2112, %v2094, %v1309
    %v2160 = vsel %vm2112, %v2095, %v1239
    %v2161 = vsel %vm2112, %v2096, %v1311
    %v2162 = vsel %vm2112, %v2097, %v1313
    %v2163 = vsel %vm2112, %v2098, %v1315
    %v2164 = vsel %vm2112, %v2099, %v1317
    %v2165 = vsel %vm2112, %v2100, %v1319
    %v2166 = vsel %vm2112, %v2101, %v1321
    %v2167 = vsel %vm2112, %v2102, %v1323
    %v2168 = vsel %vm2112, %v2103, %v1239
    %v2169 = vsel %vm2112, %v2104, %v1325
    %v2170 = vsel %vm2112, %v2105, %v1327
    %v2171 = vsel %vm2112, %v2106, %v1329
    %v2172 = vsel %vm2112, %v2107, %v1331
    %v2173 = vsel %vm2112, %v2108, %v1333
    %v2174 = vsel %vm2112, %v2109, %v1335
    %v2175 = vsel %vm2112, %v2110, %v1337
    %v2176 = vsel %vm2112, %v2111, %v1239
    %vm2177 = vcmask 195584
    %v2178 = vsel %vm2177, %v2113, %v1396
    %v2179 = vsel %vm2177, %v2114, %v1398
    %v2180 = vsel %vm2177, %v2115, %v1400
    %v2181 = vsel %vm2177, %v2116, %v1402
    %v2182 = vsel %vm2177, %v2117, %v1404
    %v2183 = vsel %vm2177, %v2118, %v1406
    %v2184 = vsel %vm2177, %v2119, %v1408
    %v2185 = vsel %vm2177, %v2120, %v1410
    %v2186 = vsel %vm2177, %v2121, %v1396
    %v2187 = vsel %vm2177, %v2122, %v1412
    %v2188 = vsel %vm2177, %v2123, %v1414
    %v2189 = vsel %vm2177, %v2124, %v1416
    %v2190 = vsel %vm2177, %v2125, %v1418
    %v2191 = vsel %vm2177, %v2126, %v1420
    %v2192 = vsel %vm2177, %v2127, %v1422
    %v2193 = vsel %vm2177, %v2128, %v1424
    %v2194 = vsel %vm2177, %v2129, %v1396
    %v2195 = vsel %vm2177, %v2130, %v1426
    %v2196 = vsel %vm2177, %v2131, %v1428
    %v2197 = vsel %vm2177, %v2132, %v1430
    %v2198 = vsel %vm2177, %v2133, %v1432
    %v2199 = vsel %vm2177, %v2134, %v1434
    %v2200 = vsel %vm2177, %v2135, %v1436
    %v2201 = vsel %vm2177, %v2136, %v1438
    %v2202 = vsel %vm2177, %v2137, %v1396
    %v2203 = vsel %vm2177, %v2138, %v1440
    %v2204 = vsel %vm2177, %v2139, %v1442
    %v2205 = vsel %vm2177, %v2140, %v1444
    %v2206 = vsel %vm2177, %v2141, %v1446
    %v2207 = vsel %vm2177, %v2142, %v1448
    %v2208 = vsel %vm2177, %v2143, %v1450
    %v2209 = vsel %vm2177, %v2144, %v1452
    %v2210 = vsel %vm2177, %v2145, %v1396
    %v2211 = vsel %vm2177, %v2146, %v1454
    %v2212 = vsel %vm2177, %v2147, %v1456
    %v2213 = vsel %vm2177, %v2148, %v1458
    %v2214 = vsel %vm2177, %v2149, %v1460
    %v2215 = vsel %vm2177, %v2150, %v1462
    %v2216 = vsel %vm2177, %v2151, %v1464
    %v2217 = vsel %vm2177, %v2152, %v1466
    %v2218 = vsel %vm2177, %v2153, %v1396
    %v2219 = vsel %vm2177, %v2154, %v1468
    %v2220 = vsel %vm2177, %v2155, %v1470
    %v2221 = vsel %vm2177, %v2156, %v1472
    %v2222 = vsel %vm2177, %v2157, %v1474
    %v2223 = vsel %vm2177, %v2158, %v1476
    %v2224 = vsel %vm2177, %v2159, %v1478
    %v2225 = vsel %vm2177, %v2160, %v1480
    %v2226 = vsel %vm2177, %v2161, %v1396
    %v2227 = vsel %vm2177, %v2162, %v1482
    %v2228 = vsel %vm2177, %v2163, %v1484
    %v2229 = vsel %vm2177, %v2164, %v1486
    %v2230 = vsel %vm2177, %v2165, %v1488
    %v2231 = vsel %vm2177, %v2166, %v1490
    %v2232 = vsel %vm2177, %v2167, %v1492
    %v2233 = vsel %vm2177, %v2168, %v1494
    %v2234 = vsel %vm2177, %v2169, %v1396
    %v2235 = vsel %vm2177, %v2170, %v1396
    %v2236 = vsel %vm2177, %v2171, %v1396
    %v2237 = vsel %vm2177, %v2172, %v1396
    %v2238 = vsel %vm2177, %v2173, %v1396
    %v2239 = vsel %vm2177, %v2174, %v1396
    %v2240 = vsel %vm2177, %v2175, %v1396
    %v2241 = vsel %vm2177, %v2176, %v1396
    %vm2242 = vcmask 228352
    %v2243 = vsel %vm2242, %v2178, %v1546
    %v2244 = vsel %vm2242, %v2179, %v1548
    %v2245 = vsel %vm2242, %v2180, %v1550
    %v2246 = vsel %vm2242, %v2181, %v1552
    %v2247 = vsel %vm2242, %v2182, %v1554
    %v2248 = vsel %vm2242, %v2183, %v1556
    %v2249 = vsel %vm2242, %v2184, %v1558
    %v2250 = vsel %vm2242, %v2185, %v1560
    %v2251 = vsel %vm2242, %v2186, %v1562
    %v2252 = vsel %vm2242, %v2187, %v1564
    %v2253 = vsel %vm2242, %v2188, %v1566
    %v2254 = vsel %vm2242, %v2189, %v1568
    %v2255 = vsel %vm2242, %v2190, %v1570
    %v2256 = vsel %vm2242, %v2191, %v1572
    %v2257 = vsel %vm2242, %v2192, %v1574
    %v2258 = vsel %vm2242, %v2193, %v1576
    %v2259 = vsel %vm2242, %v2194, %v1578
    %v2260 = vsel %vm2242, %v2195, %v1580
    %v2261 = vsel %vm2242, %v2196, %v1582
    %v2262 = vsel %vm2242, %v2197, %v1584
    %v2263 = vsel %vm2242, %v2198, %v1586
    %v2264 = vsel %vm2242, %v2199, %v1588
    %v2265 = vsel %vm2242, %v2200, %v1590
    %v2266 = vsel %vm2242, %v2201, %v1592
    %v2267 = vsel %vm2242, %v2202, %v1594
    %v2268 = vsel %vm2242, %v2203, %v1596
    %v2269 = vsel %vm2242, %v2204, %v1598
    %v2270 = vsel %vm2242, %v2205, %v1600
    %v2271 = vsel %vm2242, %v2206, %v1602
    %v2272 = vsel %vm2242, %v2207, %v1604
    %v2273 = vsel %vm2242, %v2208, %v1606
    %v2274 = vsel %vm2242, %v2209, %v1608
    %v2275 = vsel %vm2242, %v2210, %v1610
    %v2276 = vsel %vm2242, %v2211, %v1612
    %v2277 = vsel %vm2242, %v2212, %v1614
    %v2278 = vsel %vm2242, %v2213, %v1616
    %v2279 = vsel %vm2242, %v2214, %v1618
    %v2280 = vsel %vm2242, %v2215, %v1620
    %v2281 = vsel %vm2242, %v2216, %v1622
    %v2282 = vsel %vm2242, %v2217, %v1624
    %v2283 = vsel %vm2242, %v2218, %v1626
    %v2284 = vsel %vm2242, %v2219, %v1628
    %v2285 = vsel %vm2242, %v2220, %v1630
    %v2286 = vsel %vm2242, %v2221, %v1632
    %v2287 = vsel %vm2242, %v2222, %v1634
    %v2288 = vsel %vm2242, %v2223, %v1636
    %v2289 = vsel %vm2242, %v2224, %v1638
    %v2290 = vsel %vm2242, %v2225, %v1640
    %v2291 = vsel %vm2242, %v2226, %v1642
    %v2292 = vsel %vm2242, %v2227, %v1644
    %v2293 = vsel %vm2242, %v2228, %v1646
    %v2294 = vsel %vm2242, %v2229, %v1648
    %v2295 = vsel %vm2242, %v2230, %v1650
    %v2296 = vsel %vm2242, %v2231, %v1652
    %v2297 = vsel %vm2242, %v2232, %v1654
    %v2298 = vsel %vm2242, %v2233, %v1656
    %v2299 = vsel %vm2242, %v2234, %v1658
    %v2300 = vsel %vm2242, %v2235, %v1658
    %v2301 = vsel %vm2242, %v2236, %v1658
    %v2302 = vsel %vm2242, %v2237, %v1658
    %v2303 = vsel %vm2242, %v2238, %v1658
    %v2304 = vsel %vm2242, %v2239, %v1658
    %v2305 = vsel %vm2242, %v2240, %v1658
    %v2306 = vsel %vm2242, %v2241, %v1658
    %vm2307 = vcmask 261120
    %v2308 = vsel %vm2307, %v2243, %v1717
    %v2309 = vsel %vm2307, %v2244, %v1719
    %v2310 = vsel %vm2307, %v2245, %v1721
    %v2311 = vsel %vm2307, %v2246, %v1723
    %v2312 = vsel %vm2307, %v2247, %v1725
    %v2313 = vsel %vm2307, %v2248, %v1727
    %v2314 = vsel %vm2307, %v2249, %v1729
    %v2315 = vsel %vm2307, %v2250, %v1731
    %v2316 = vsel %vm2307, %v2251, %v1733
    %v2317 = vsel %vm2307, %v2252, %v1735
    %v2318 = vsel %vm2307, %v2253, %v1737
    %v2319 = vsel %vm2307, %v2254, %v1739
    %v2320 = vsel %vm2307, %v2255, %v1741
    %v2321 = vsel %vm2307, %v2256, %v1743
    %v2322 = vsel %vm2307, %v2257, %v1745
    %v2323 = vsel %vm2307, %v2258, %v1731
    %v2324 = vsel %vm2307, %v2259, %v1747
    %v2325 = vsel %vm2307, %v2260, %v1749
    %v2326 = vsel %vm2307, %v2261, %v1751
    %v2327 = vsel %vm2307, %v2262, %v1753
    %v2328 = vsel %vm2307, %v2263, %v1755
    %v2329 = vsel %vm2307, %v2264, %v1757
    %v2330 = vsel %vm2307, %v2265, %v1759
    %v2331 = vsel %vm2307, %v2266, %v1731
    %v2332 = vsel %vm2307, %v2267, %v1761
    %v2333 = vsel %vm2307, %v2268, %v1763
    %v2334 = vsel %vm2307, %v2269, %v1765
    %v2335 = vsel %vm2307, %v2270, %v1767
    %v2336 = vsel %vm2307, %v2271, %v1769
    %v2337 = vsel %vm2307, %v2272, %v1771
    %v2338 = vsel %vm2307, %v2273, %v1773
    %v2339 = vsel %vm2307, %v2274, %v1731
    %v2340 = vsel %vm2307, %v2275, %v1775
    %v2341 = vsel %vm2307, %v2276, %v1777
    %v2342 = vsel %vm2307, %v2277, %v1779
    %v2343 = vsel %vm2307, %v2278, %v1781
    %v2344 = vsel %vm2307, %v2279, %v1783
    %v2345 = vsel %vm2307, %v2280, %v1785
    %v2346 = vsel %vm2307, %v2281, %v1787
    %v2347 = vsel %vm2307, %v2282, %v1731
    %v2348 = vsel %vm2307, %v2283, %v1789
    %v2349 = vsel %vm2307, %v2284, %v1791
    %v2350 = vsel %vm2307, %v2285, %v1793
    %v2351 = vsel %vm2307, %v2286, %v1795
    %v2352 = vsel %vm2307, %v2287, %v1797
    %v2353 = vsel %vm2307, %v2288, %v1799
    %v2354 = vsel %vm2307, %v2289, %v1801
    %v2355 = vsel %vm2307, %v2290, %v1731
    %v2356 = vsel %vm2307, %v2291, %v1803
    %v2357 = vsel %vm2307, %v2292, %v1805
    %v2358 = vsel %vm2307, %v2293, %v1807
    %v2359 = vsel %vm2307, %v2294, %v1809
    %v2360 = vsel %vm2307, %v2295, %v1811
    %v2361 = vsel %vm2307, %v2296, %v1813
    %v2362 = vsel %vm2307, %v2297, %v1815
    %v2363 = vsel %vm2307, %v2298, %v1731
    %v2364 = vsel %vm2307, %v2299, %v1731
    %v2365 = vsel %vm2307, %v2300, %v1731
    %v2366 = vsel %vm2307, %v2301, %v1731
    %v2367 = vsel %vm2307, %v2302, %v1731
    %v2368 = vsel %vm2307, %v2303, %v1731
    %v2369 = vsel %vm2307, %v2304, %v1731
    %v2370 = vsel %vm2307, %v2305, %v1731
    %v2371 = vsel %vm2307, %v2306, %v1731
    %v2372 = vld [vmem:[%s1] sm:$0xff]
    %v2373 = vld [vmem:[%s1 + $0x8] sm:$0xff]
    %v2374 = vld [vmem:[%s1 + $0x10] sm:$0xff]
    %v2375 = vld [vmem:[%s1 + $0x18] sm:$0xff]
    %v2376 = vld [vmem:[%s1 + $0x20] sm:$0xf]
    %v2441 = vcombine.low %v2308, %v2309
    %v2442 = vcombine.low %v2310, %v2311
    %v2444 = vunpack.c.l.s4 1983009808
    %v2445 = vunpack.c.0.s8 %v2444
    %v2446 = vlaneseq
    %v2447 = vshrl.u32 %v2446, 7
    %v2448 = vsub.s32 %v2445, %v2447
    %v2449 = vrot.slane %v2441, %v2448
    %v2451 = vunpack.c.l.s4 1983009808
    %v2452 = vunpack.c.0.s8 %v2451
    %v2453 = vlaneseq
    %v2454 = vshrl.u32 %v2453, 7
    %v2455 = vsub.s32 %v2452, %v2454
    %v2456 = vrot.slane %v2442, %v2455
    %v2457 = vcombine.low %v2449, %v2456
    %v2458 = vcombine.low %v2312, %v2313
    %v2459 = vcombine.low %v2314, %v2315
    %v2461 = vunpack.c.l.s4 1983009808
    %v2462 = vunpack.c.0.s8 %v2461
    %v2463 = vlaneseq
    %v2464 = vshrl.u32 %v2463, 7
    %v2465 = vsub.s32 %v2462, %v2464
    %v2466 = vrot.slane %v2458, %v2465
    %v2468 = vunpack.c.l.s4 1983009808
    %v2469 = vunpack.c.0.s8 %v2468
    %v2470 = vlaneseq
    %v2471 = vshrl.u32 %v2470, 7
    %v2472 = vsub.s32 %v2469, %v2471
    %v2473 = vrot.slane %v2459, %v2472
    %v2474 = vcombine.low %v2466, %v2473
    %v2475 = vcombine.low %v2316, %v2317
    %v2476 = vcombine.low %v2318, %v2319
    %v2478 = vunpack.c.l.s4 1983009808
    %v2479 = vunpack.c.0.s8 %v2478
    %v2480 = vlaneseq
    %v2481 = vshrl.u32 %v2480, 7
    %v2482 = vsub.s32 %v2479, %v2481
    %v2483 = vrot.slane %v2475, %v2482
    %v2485 = vunpack.c.l.s4 1983009808
    %v2486 = vunpack.c.0.s8 %v2485
    %v2487 = vlaneseq
    %v2488 = vshrl.u32 %v2487, 7
    %v2489 = vsub.s32 %v2486, %v2488
    %v2490 = vrot.slane %v2476, %v2489
    %v2491 = vcombine.low %v2483, %v2490
    %v2492 = vcombine.low %v2320, %v2321
    %v2493 = vcombine.low %v2322, %v2323
    %v2495 = vunpack.c.l.s4 1983009808
    %v2496 = vunpack.c.0.s8 %v2495
    %v2497 = vlaneseq
    %v2498 = vshrl.u32 %v2497, 7
    %v2499 = vsub.s32 %v2496, %v2498
    %v2500 = vrot.slane %v2492, %v2499
    %v2502 = vunpack.c.l.s4 1983009808
    %v2503 = vunpack.c.0.s8 %v2502
    %v2504 = vlaneseq
    %v2505 = vshrl.u32 %v2504, 7
    %v2506 = vsub.s32 %v2503, %v2505
    %v2507 = vrot.slane %v2493, %v2506
    %v2508 = vcombine.low %v2500, %v2507
    %v2509 = vcombine.low %v2324, %v2325
    %v2510 = vcombine.low %v2326, %v2327
    %v2512 = vunpack.c.l.s4 1983009808
    %v2513 = vunpack.c.0.s8 %v2512
    %v2514 = vlaneseq
    %v2515 = vshrl.u32 %v2514, 7
    %v2516 = vsub.s32 %v2513, %v2515
    %v2517 = vrot.slane %v2509, %v2516
    %v2519 = vunpack.c.l.s4 1983009808
    %v2520 = vunpack.c.0.s8 %v2519
    %v2521 = vlaneseq
    %v2522 = vshrl.u32 %v2521, 7
    %v2523 = vsub.s32 %v2520, %v2522
    %v2524 = vrot.slane %v2510, %v2523
    %v2525 = vcombine.low %v2517, %v2524
    %v2526 = vcombine.low %v2328, %v2329
    %v2527 = vcombine.low %v2330, %v2331
    %v2529 = vunpack.c.l.s4 1983009808
    %v2530 = vunpack.c.0.s8 %v2529
    %v2531 = vlaneseq
    %v2532 = vshrl.u32 %v2531, 7
    %v2533 = vsub.s32 %v2530, %v2532
    %v2534 = vrot.slane %v2526, %v2533
    %v2536 = vunpack.c.l.s4 1983009808
    %v2537 = vunpack.c.0.s8 %v2536
    %v2538 = vlaneseq
    %v2539 = vshrl.u32 %v2538, 7
    %v2540 = vsub.s32 %v2537, %v2539
    %v2541 = vrot.slane %v2527, %v2540
    %v2542 = vcombine.low %v2534, %v2541
    %v2543 = vcombine.low %v2332, %v2333
    %v2544 = vcombine.low %v2334, %v2335
    %v2546 = vunpack.c.l.s4 1983009808
    %v2547 = vunpack.c.0.s8 %v2546
    %v2548 = vlaneseq
    %v2549 = vshrl.u32 %v2548, 7
    %v2550 = vsub.s32 %v2547, %v2549
    %v2551 = vrot.slane %v2543, %v2550
    %v2553 = vunpack.c.l.s4 1983009808
    %v2554 = vunpack.c.0.s8 %v2553
    %v2555 = vlaneseq
    %v2556 = vshrl.u32 %v2555, 7
    %v2557 = vsub.s32 %v2554, %v2556
    %v2558 = vrot.slane %v2544, %v2557
    %v2559 = vcombine.low %v2551, %v2558
    %v2560 = vcombine.low %v2336, %v2337
    %v2561 = vcombine.low %v2338, %v2339
    %v2563 = vunpack.c.l.s4 1983009808
    %v2564 = vunpack.c.0.s8 %v2563
    %v2565 = vlaneseq
    %v2566 = vshrl.u32 %v2565, 7
    %v2567 = vsub.s32 %v2564, %v2566
    %v2568 = vrot.slane %v2560, %v2567
    %v2570 = vunpack.c.l.s4 1983009808
    %v2571 = vunpack.c.0.s8 %v2570
    %v2572 = vlaneseq
    %v2573 = vshrl.u32 %v2572, 7
    %v2574 = vsub.s32 %v2571, %v2573
    %v2575 = vrot.slane %v2561, %v2574
    %v2576 = vcombine.low %v2568, %v2575
    %v2577 = vcombine.low %v2340, %v2341
    %v2578 = vcombine.low %v2342, %v2343
    %v2580 = vunpack.c.l.s4 1983009808
    %v2581 = vunpack.c.0.s8 %v2580
    %v2582 = vlaneseq
    %v2583 = vshrl.u32 %v2582, 7
    %v2584 = vsub.s32 %v2581, %v2583
    %v2585 = vrot.slane %v2577, %v2584
    %v2587 = vunpack.c.l.s4 1983009808
    %v2588 = vunpack.c.0.s8 %v2587
    %v2589 = vlaneseq
    %v2590 = vshrl.u32 %v2589, 7
    %v2591 = vsub.s32 %v2588, %v2590
    %v2592 = vrot.slane %v2578, %v2591
    %v2593 = vcombine.low %v2585, %v2592
    %v2594 = vcombine.low %v2344, %v2345
    %v2595 = vcombine.low %v2346, %v2347
    %v2597 = vunpack.c.l.s4 1983009808
    %v2598 = vunpack.c.0.s8 %v2597
    %v2599 = vlaneseq
    %v2600 = vshrl.u32 %v2599, 7
    %v2601 = vsub.s32 %v2598, %v2600
    %v2602 = vrot.slane %v2594, %v2601
    %v2604 = vunpack.c.l.s4 1983009808
    %v2605 = vunpack.c.0.s8 %v2604
    %v2606 = vlaneseq
    %v2607 = vshrl.u32 %v2606, 7
    %v2608 = vsub.s32 %v2605, %v2607
    %v2609 = vrot.slane %v2595, %v2608
    %v2610 = vcombine.low %v2602, %v2609
    %v2611 = vcombine.low %v2348, %v2349
    %v2612 = vcombine.low %v2350, %v2351
    %v2614 = vunpack.c.l.s4 1983009808
    %v2615 = vunpack.c.0.s8 %v2614
    %v2616 = vlaneseq
    %v2617 = vshrl.u32 %v2616, 7
    %v2618 = vsub.s32 %v2615, %v2617
    %v2619 = vrot.slane %v2611, %v2618
    %v2621 = vunpack.c.l.s4 1983009808
    %v2622 = vunpack.c.0.s8 %v2621
    %v2623 = vlaneseq
    %v2624 = vshrl.u32 %v2623, 7
    %v2625 = vsub.s32 %v2622, %v2624
    %v2626 = vrot.slane %v2612, %v2625
    %v2627 = vcombine.low %v2619, %v2626
    %v2628 = vcombine.low %v2352, %v2353
    %v2629 = vcombine.low %v2354, %v2355
    %v2631 = vunpack.c.l.s4 1983009808
    %v2632 = vunpack.c.0.s8 %v2631
    %v2633 = vlaneseq
    %v2634 = vshrl.u32 %v2633, 7
    %v2635 = vsub.s32 %v2632, %v2634
    %v2636 = vrot.slane %v2628, %v2635
    %v2638 = vunpack.c.l.s4 1983009808
    %v2639 = vunpack.c.0.s8 %v2638
    %v2640 = vlaneseq
    %v2641 = vshrl.u32 %v2640, 7
    %v2642 = vsub.s32 %v2639, %v2641
    %v2643 = vrot.slane %v2629, %v2642
    %v2644 = vcombine.low %v2636, %v2643
    %v2645 = vcombine.low %v2356, %v2357
    %v2646 = vcombine.low %v2358, %v2359
    %v2648 = vunpack.c.l.s4 1983009808
    %v2649 = vunpack.c.0.s8 %v2648
    %v2650 = vlaneseq
    %v2651 = vshrl.u32 %v2650, 7
    %v2652 = vsub.s32 %v2649, %v2651
    %v2653 = vrot.slane %v2645, %v2652
    %v2655 = vunpack.c.l.s4 1983009808
    %v2656 = vunpack.c.0.s8 %v2655
    %v2657 = vlaneseq
    %v2658 = vshrl.u32 %v2657, 7
    %v2659 = vsub.s32 %v2656, %v2658
    %v2660 = vrot.slane %v2646, %v2659
    %v2661 = vcombine.low %v2653, %v2660
    %v2662 = vcombine.low %v2360, %v2361
    %v2663 = vcombine.low %v2362, %v2363
    %v2665 = vunpack.c.l.s4 1983009808
    %v2666 = vunpack.c.0.s8 %v2665
    %v2667 = vlaneseq
    %v2668 = vshrl.u32 %v2667, 7
    %v2669 = vsub.s32 %v2666, %v2668
    %v2670 = vrot.slane %v2662, %v2669
    %v2672 = vunpack.c.l.s4 1983009808
    %v2673 = vunpack.c.0.s8 %v2672
    %v2674 = vlaneseq
    %v2675 = vshrl.u32 %v2674, 7
    %v2676 = vsub.s32 %v2673, %v2675
    %v2677 = vrot.slane %v2663, %v2676
    %v2678 = vcombine.low %v2670, %v2677
    %v2679 = vcombine.low %v2364, %v2365
    %v2680 = vcombine.low %v2366, %v2367
    %v2682 = vunpack.c.l.s4 1983009808
    %v2683 = vunpack.c.0.s8 %v2682
    %v2684 = vlaneseq
    %v2685 = vshrl.u32 %v2684, 7
    %v2686 = vsub.s32 %v2683, %v2685
    %v2687 = vrot.slane %v2679, %v2686
    %v2689 = vunpack.c.l.s4 1983009808
    %v2690 = vunpack.c.0.s8 %v2689
    %v2691 = vlaneseq
    %v2692 = vshrl.u32 %v2691, 7
    %v2693 = vsub.s32 %v2690, %v2692
    %v2694 = vrot.slane %v2680, %v2693
    %v2695 = vcombine.low %v2687, %v2694
    %v2696 = vcombine.low %v2368, %v2369
    %v2697 = vcombine.low %v2370, %v2371
    %v2699 = vunpack.c.l.s4 1983009808
    %v2700 = vunpack.c.0.s8 %v2699
    %v2701 = vlaneseq
    %v2702 = vshrl.u32 %v2701, 7
    %v2703 = vsub.s32 %v2700, %v2702
    %v2704 = vrot.slane %v2696, %v2703
    %v2706 = vunpack.c.l.s4 1983009808
    %v2707 = vunpack.c.0.s8 %v2706
    %v2708 = vlaneseq
    %v2709 = vshrl.u32 %v2708, 7
    %v2710 = vsub.s32 %v2707, %v2709
    %v2711 = vrot.slane %v2697, %v2710
    %v2712 = vcombine.low %v2704, %v2711
    %vm2713 = vcmask 293888
    %v2714 = vsel %vm2713, %v2457, 0
    %v2716 = vsel %vm2713, %v2474, 0
    %v2718 = vsel %vm2713, %v2491, 0
    %v2720 = vsel %vm2713, %v2508, 0
    %v2722 = vsel %vm2713, %v2525, 0
    %v2724 = vsel %vm2713, %v2542, 0
    %v2726 = vsel %vm2713, %v2559, 0
    %v2728 = vsel %vm2713, %v2576, 0
    %v2730 = vsel %vm2713, %v2593, 0
    %v2732 = vsel %vm2713, %v2610, 0
    %v2734 = vsel %vm2713, %v2627, 0
    %v2736 = vsel %vm2713, %v2644, 0
    %v2738 = vsel %vm2713, %v2661, 0
    %v2740 = vsel %vm2713, %v2678, 0
    %v2742 = vsel %vm2713, %v2695, 0
    %v2744 = vsel %vm2713, %v2712, 0
    %vm2746 = vcmask 1043456
    %v2748 = vsel %vm2746, %v2376, 0
    %2750 = vmatprep.subr.mxu0 0.0
    %2751 = vmatpush1.msra.mxu0 %v2372
    %2752 = vmatprep.subr.mxu0 0.0
    %2753 = vmatpush1.msra.mxu0 %v2373
    %2754 = vmatprep.subr.mxu0 0.0
    %2755 = vmatpush1.msra.mxu0 %v2374
    %2756 = vmatprep.subr.mxu0 0.0
    %2757 = vmatpush1.msra.mxu0 %v2375
    %2758 = vmatprep.subr.mxu0 0.0
    %2759 = vmatpush1.msra.mxu0 %v2748
    %2760 = vmatprep.subr.mxu0 0.0
    %2761 = vmatpush1.msra.mxu0 0.0
    %2762 = vmatprep.subr.mxu0 0.0
    %2763 = vmatpush1.msra.mxu0 0.0
    %2764 = vmatprep.subr.mxu0 0.0
    %2765 = vmatpush1.msra.mxu0 0.0
    %2766 = vmatprep.subr.mxu0 0.0
    %2767 = vmatpush1.msra.mxu0 0.0
    %2768 = vmatprep.subr.mxu0 0.0
    %2769 = vmatpush1.msra.mxu0 0.0
    %2770 = vmatprep.subr.mxu0 0.0
    %2771 = vmatpush1.msra.mxu0 0.0
    %2772 = vmatprep.subr.mxu0 0.0
    %2773 = vmatpush1.msra.mxu0 0.0
    %2774 = vmatprep.subr.mxu0 0.0
    %2775 = vmatpush1.msra.mxu0 0.0
    %2776 = vmatprep.subr.mxu0 0.0
    %2777 = vmatpush1.msra.mxu0 0.0
    %2778 = vmatprep.subr.mxu0 0.0
    %2779 = vmatpush1.msra.mxu0 0.0
    %2780 = vmatprep.subr.mxu0 0.0
    %2781 = vmatpush1.msra.mxu0 0.0
    %2782 = vmatprep.subr.mxu0 0.0
    %2783 = vmatpush1.msra.mxu0 0.0
    %2784 = vmatprep.subr.mxu0 0.0
    %2785 = vmatpush1.msra.mxu0 0.0
    %2786 = vmatprep.subr.mxu0 0.0
    %2787 = vmatpush1.msra.mxu0 0.0
    %2788 = vmatprep.subr.mxu0 0.0
    %2789 = vmatpush1.msra.mxu0 0.0
    %2790 = vmatprep.subr.mxu0 0.0
    %2791 = vmatpush1.msra.mxu0 0.0
    %2792 = vmatprep.subr.mxu0 0.0
    %2793 = vmatpush1.msra.mxu0 0.0
    %2794 = vmatprep.subr.mxu0 0.0
    %2795 = vmatpush1.msra.mxu0 0.0
    %2796 = vmatprep.subr.mxu0 0.0
    %2797 = vmatpush1.msra.mxu0 0.0
    %2798 = vmatprep.subr.mxu0 0.0
    %2799 = vmatpush1.msra.mxu0 0.0
    %2800 = vmatprep.subr.mxu0 0.0
    %2801 = vmatpush1.msra.mxu0 0.0
    %2802 = vmatprep.subr.mxu0 0.0
    %2803 = vmatpush1.msra.mxu0 0.0
    %2804 = vmatprep.subr.mxu0 0.0
    %2805 = vmatpush1.msra.mxu0 0.0
    %2806 = vmatprep.subr.mxu0 0.0
    %2807 = vmatpush1.msra.mxu0 0.0
    %2808 = vmatprep.subr.mxu0 0.0
    %2809 = vmatpush1.msra.mxu0 0.0
    %2810 = vmatprep.subr.mxu0 0.0
    %2811 = vmatpush1.msra.mxu0 0.0
    %2812 = vmatprep.subr.mxu0 0.0
    %2813 = vmatpush1.msra.mxu0 0.0
    %2814 = vmatprep.mubr.f32.mxu0 0.0
    %2815 = vmatmul.mubr.f32.gmra.mrb[0].mxu0 %v2714
    %v2816 = vpop.f32.mrb[0].mxu0
    %v2817 = vadd.f32 0.0, %v2816
    %v2818 = vpop.f32.mrb[0].mxu0
    %2819 = vmatprep.mubr.f32.mxu0 0.0
    %2820 = vmatmul.mubr.f32.gmra.mrb[0].mxu0 %v2716
    %v2821 = vpop.f32.mrb[0].mxu0
    %v2822 = vadd.f32 0.0, %v2821
    %v2823 = vpop.f32.mrb[0].mxu0
    %2824 = vmatprep.mubr.f32.mxu0 0.0
    %2825 = vmatmul.mubr.f32.gmra.mrb[0].mxu0 %v2718
    %v2826 = vpop.f32.mrb[0].mxu0
    %v2827 = vadd.f32 0.0, %v2826
    %v2828 = vpop.f32.mrb[0].mxu0
    %2829 = vmatprep.mubr.f32.mxu0 0.0
    %2830 = vmatmul.mubr.f32.gmra.mrb[0].mxu0 %v2720
    %v2831 = vpop.f32.mrb[0].mxu0
    %v2832 = vadd.f32 0.0, %v2831
    %v2833 = vpop.f32.mrb[0].mxu0
    %2834 = vmatprep.mubr.f32.mxu0 0.0
    %2835 = vmatmul.mubr.f32.gmra.mrb[0].mxu0 %v2722
    %v2836 = vpop.f32.mrb[0].mxu0
    %v2837 = vadd.f32 0.0, %v2836
    %v2838 = vpop.f32.mrb[0].mxu0
    %2839 = vmatprep.mubr.f32.mxu0 0.0
    %2840 = vmatmul.mubr.f32.gmra.mrb[0].mxu0 %v2724
    %v2841 = vpop.f32.mrb[0].mxu0
    %v2842 = vadd.f32 0.0, %v2841
    %v2843 = vpop.f32.mrb[0].mxu0
    %2844 = vmatprep.mubr.f32.mxu0 0.0
    %2845 = vmatmul.mubr.f32.gmra.mrb[0].mxu0 %v2726
    %v2846 = vpop.f32.mrb[0].mxu0
    %v2847 = vadd.f32 0.0, %v2846
    %v2848 = vpop.f32.mrb[0].mxu0
    %2849 = vmatprep.mubr.f32.mxu0 0.0
    %2850 = vmatmul.mubr.f32.gmra.mrb[0].mxu0 %v2728
    %v2851 = vpop.f32.mrb[0].mxu0
    %v2852 = vadd.f32 0.0, %v2851
    %v2853 = vpop.f32.mrb[0].mxu0
    %2854 = vmatprep.mubr.f32.mxu0 0.0
    %2855 = vmatmul.mubr.f32.gmra.mrb[0].mxu0 %v2730
    %v2856 = vpop.f32.mrb[0].mxu0
    %v2857 = vadd.f32 0.0, %v2856
    %v2858 = vpop.f32.mrb[0].mxu0
    %2859 = vmatprep.mubr.f32.mxu0 0.0
    %2860 = vmatmul.mubr.f32.gmra.mrb[0].mxu0 %v2732
    %v2861 = vpop.f32.mrb[0].mxu0
    %v2862 = vadd.f32 0.0, %v2861
    %v2863 = vpop.f32.mrb[0].mxu0
    %2864 = vmatprep.mubr.f32.mxu0 0.0
    %2865 = vmatmul.mubr.f32.gmra.mrb[0].mxu0 %v2734
    %v2866 = vpop.f32.mrb[0].mxu0
    %v2867 = vadd.f32 0.0, %v2866
    %v2868 = vpop.f32.mrb[0].mxu0
    %2869 = vmatprep.mubr.f32.mxu0 0.0
    %2870 = vmatmul.mubr.f32.gmra.mrb[0].mxu0 %v2736
    %v2871 = vpop.f32.mrb[0].mxu0
    %v2872 = vadd.f32 0.0, %v2871
    %v2873 = vpop.f32.mrb[0].mxu0
    %2874 = vmatprep.mubr.f32.mxu0 0.0
    %2875 = vmatmul.mubr.f32.gmra.mrb[0].mxu0 %v2738
    %v2876 = vpop.f32.mrb[0].mxu0
    %v2877 = vadd.f32 0.0, %v2876
    %v2878 = vpop.f32.mrb[0].mxu0
    %2879 = vmatprep.mubr.f32.mxu0 0.0
    %2880 = vmatmul.mubr.f32.gmra.mrb[0].mxu0 %v2740
    %v2881 = vpop.f32.mrb[0].mxu0
    %v2882 = vadd.f32 0.0, %v2881
    %v2883 = vpop.f32.mrb[0].mxu0
    %2884 = vmatprep.mubr.f32.mxu0 0.0
    %2885 = vmatmul.mubr.f32.gmra.mrb[0].mxu0 %v2742
    %v2886 = vpop.f32.mrb[0].mxu0
    %v2887 = vadd.f32 0.0, %v2886
    %v2888 = vpop.f32.mrb[0].mxu0
    %2889 = vmatprep.mubr.f32.mxu0 0.0
    %2890 = vmatmul.mubr.f32.gmra.mrb[0].mxu0 %v2744
    %v2891 = vpop.f32.mrb[0].mxu0
    %v2892 = vadd.f32 0.0, %v2891
    %v2893 = vpop.f32.mrb[0].mxu0
    %2894 = vdwg.mxu0
    %v2895 = vsel %vm1924, %v2817, 0.0
    %v2896 = vsel %vm1924, %v2822, 0.0
    %v2897 = vadd.f32 %v2895, %v2896
    %v2898 = vsel %vm1924, %v2827, 0.0
    %v2899 = vadd.f32 %v2897, %v2898
    %v2900 = vsel %vm1924, %v2832, 0.0
    %v2901 = vadd.f32 %v2899, %v2900
    %v2902 = vsel %vm1924, %v2837, 0.0
    %v2903 = vadd.f32 %v2901, %v2902
    %v2904 = vsel %vm1924, %v2842, 0.0
    %v2905 = vadd.f32 %v2903, %v2904
    %v2906 = vsel %vm1924, %v2847, 0.0
    %v2907 = vadd.f32 %v2905, %v2906
    %v2908 = vsel %vm1924, %v2852, 0.0
    %v2909 = vadd.f32 %v2907, %v2908
    %v2910 = vsel %vm1924, %v2857, 0.0
    %v2911 = vadd.f32 %v2909, %v2910
    %v2912 = vsel %vm1924, %v2862, 0.0
    %v2913 = vadd.f32 %v2911, %v2912
    %v2914 = vsel %vm1924, %v2867, 0.0
    %v2915 = vadd.f32 %v2913, %v2914
    %v2916 = vsel %vm1924, %v2872, 0.0
    %v2917 = vadd.f32 %v2915, %v2916
    %v2918 = vsel %vm1924, %v2877, 0.0
    %v2919 = vadd.f32 %v2917, %v2918
    %v2920 = vsel %vm1924, %v2882, 0.0
    %v2921 = vadd.f32 %v2919, %v2920
    %v2922 = vsel %vm1924, %v2887, 0.0
    %v2923 = vadd.f32 %v2921, %v2922
    %v2924 = vsel %vm1924, %v2892, 0.0
    %v2925 = vadd.f32 %v2923, %v2924
    %v2926 = vrot.slane %v2925, 4
    %v2927 = vadd.f32 %v2925, %v2926
    %v2928 = vrot.slane %v2927, 2
    %v2929 = vadd.f32 %v2927, %v2928
    %v2930 = vrot.slane %v2929, 1
    %v2931 = vadd.f32 %v2929, %v2930
    %v2932 = vmul.f32 %v2817, %v2817
    %v2933 = vmul.f32 %v2822, %v2822
    %v2934 = vmul.f32 %v2827, %v2827
    %v2935 = vmul.f32 %v2832, %v2832
    %v2936 = vmul.f32 %v2837, %v2837
    %v2937 = vmul.f32 %v2842, %v2842
    %v2938 = vmul.f32 %v2847, %v2847
    %v2939 = vmul.f32 %v2852, %v2852
    %v2940 = vmul.f32 %v2857, %v2857
    %v2941 = vmul.f32 %v2862, %v2862
    %v2942 = vmul.f32 %v2867, %v2867
    %v2943 = vmul.f32 %v2872, %v2872
    %v2944 = vmul.f32 %v2877, %v2877
    %v2945 = vmul.f32 %v2882, %v2882
    %v2946 = vmul.f32 %v2887, %v2887
    %v2947 = vmul.f32 %v2892, %v2892
    %v2948 = vsel %vm1924, %v2932, 0.0
    %v2949 = vsel %vm1924, %v2933, 0.0
    %v2950 = vadd.f32 %v2948, %v2949
    %v2951 = vsel %vm1924, %v2934, 0.0
    %v2952 = vadd.f32 %v2950, %v2951
    %v2953 = vsel %vm1924, %v2935, 0.0
    %v2954 = vadd.f32 %v2952, %v2953
    %v2955 = vsel %vm1924, %v2936, 0.0
    %v2956 = vadd.f32 %v2954, %v2955
    %v2957 = vsel %vm1924, %v2937, 0.0
    %v2958 = vadd.f32 %v2956, %v2957
    %v2959 = vsel %vm1924, %v2938, 0.0
    %v2960 = vadd.f32 %v2958, %v2959
    %v2961 = vsel %vm1924, %v2939, 0.0
    %v2962 = vadd.f32 %v2960, %v2961
    %v2963 = vsel %vm1924, %v2940, 0.0
    %v2964 = vadd.f32 %v2962, %v2963
    %v2965 = vsel %vm1924, %v2941, 0.0
    %v2966 = vadd.f32 %v2964, %v2965
    %v2967 = vsel %vm1924, %v2942, 0.0
    %v2968 = vadd.f32 %v2966, %v2967
    %v2969 = vsel %vm1924, %v2943, 0.0
    %v2970 = vadd.f32 %v2968, %v2969
    %v2971 = vsel %vm1924, %v2944, 0.0
    %v2972 = vadd.f32 %v2970, %v2971
    %v2973 = vsel %vm1924, %v2945, 0.0
    %v2974 = vadd.f32 %v2972, %v2973
    %v2975 = vsel %vm1924, %v2946, 0.0
    %v2976 = vadd.f32 %v2974, %v2975
    %v2977 = vsel %vm1924, %v2947, 0.0
    %v2978 = vadd.f32 %v2976, %v2977
    %v2979 = vrot.slane %v2978, 4
    %v2980 = vadd.f32 %v2978, %v2979
    %v2981 = vrot.slane %v2980, 2
    %v2982 = vadd.f32 %v2980, %v2981
    %v2983 = vrot.slane %v2982, 1
    %v2984 = vadd.f32 %v2982, %v2983
    %v2985 = vmul.f32 %v2931, 0.0078125
    %v2986 = vmul.f32 %v2984, 0.0078125
    %v2987 = vmul.f32 %v2985, %v2985
    %v2988 = vsub.f32 %v2986, %v2987
    %v2989 = vadd.f32 %v2988, 1e-05
    %v2990 = vrsqrt.pop %v2989
    %v2991 = vld [vmem:[%s2] sm:$0x1]
    %v2992 = vmul.f32 %v2990, %v2991
    %v2993 = vsub.f32 %v2817, %v2985
    %v2994 = vsub.f32 %v2822, %v2985
    %v2995 = vsub.f32 %v2827, %v2985
    %v2996 = vsub.f32 %v2832, %v2985
    %v2997 = vsub.f32 %v2837, %v2985
    %v2998 = vsub.f32 %v2842, %v2985
    %v2999 = vsub.f32 %v2847, %v2985
    %v3000 = vsub.f32 %v2852, %v2985
    %v3001 = vsub.f32 %v2857, %v2985
    %v3002 = vsub.f32 %v2862, %v2985
    %v3003 = vsub.f32 %v2867, %v2985
    %v3004 = vsub.f32 %v2872, %v2985
    %v3005 = vsub.f32 %v2877, %v2985
    %v3006 = vsub.f32 %v2882, %v2985
    %v3007 = vsub.f32 %v2887, %v2985
    %v3008 = vsub.f32 %v2892, %v2985
    %v3009 = vlaneseq
    %v3010 = vshrl.u32 %v3009, 7
    %v3011 = vsub.s32 0, %v3010
    %v3012 = vrot.slane %v2992, %v3011
    %v3013 = vmul.f32 %v2993, %v3012
    %v3014 = vmul.f32 %v2994, %v3012
    %v3015 = vmul.f32 %v2995, %v3012
    %v3016 = vmul.f32 %v2996, %v3012
    %v3017 = vmul.f32 %v2997, %v3012
    %v3018 = vmul.f32 %v2998, %v3012
    %v3019 = vmul.f32 %v2999, %v3012
    %v3020 = vmul.f32 %v3000, %v3012
    %v3021 = vmul.f32 %v3001, %v3012
    %v3022 = vmul.f32 %v3002, %v3012
    %v3023 = vmul.f32 %v3003, %v3012
    %v3024 = vmul.f32 %v3004, %v3012
    %v3025 = vmul.f32 %v3005, %v3012
    %v3026 = vmul.f32 %v3006, %v3012
    %v3027 = vmul.f32 %v3007, %v3012
    %v3028 = vmul.f32 %v3008, %v3012
    %v3029 = vld [vmem:[%s3] sm:$0x1]
    %v3031 = vlaneseq
    %v3032 = vshrl.u32 %v3031, 7
    %v3033 = vsub.s32 0, %v3032
    %v3034 = vrot.slane %v3029, %v3033
    %v3036 = vadd.f32 %v3013, %v3034
    %v3037 = vadd.f32 %v3014, %v3034
    %v3038 = vadd.f32 %v3015, %v3034
    %v3039 = vadd.f32 %v3016, %v3034
    %v3040 = vadd.f32 %v3017, %v3034
    %v3041 = vadd.f32 %v3018, %v3034
    %v3042 = vadd.f32 %v3019, %v3034
    %v3043 = vadd.f32 %v3020, %v3034
    %v3044 = vadd.f32 %v3021, %v3034
    %v3045 = vadd.f32 %v3022, %v3034
    %v3046 = vadd.f32 %v3023, %v3034
    %v3047 = vadd.f32 %v3024, %v3034
    %v3048 = vadd.f32 %v3025, %v3034
    %v3049 = vadd.f32 %v3026, %v3034
    %v3050 = vadd.f32 %v3027, %v3034
    %v3051 = vadd.f32 %v3028, %v3034
    %v3052 = vmax.f32 %v3036, 0.0
    %v3053 = vmax.f32 %v3037, 0.0
    %v3054 = vmax.f32 %v3038, 0.0
    %v3055 = vmax.f32 %v3039, 0.0
    %v3056 = vmax.f32 %v3040, 0.0
    %v3057 = vmax.f32 %v3041, 0.0
    %v3058 = vmax.f32 %v3042, 0.0
    %v3059 = vmax.f32 %v3043, 0.0
    %v3060 = vmax.f32 %v3044, 0.0
    %v3061 = vmax.f32 %v3045, 0.0
    %v3062 = vmax.f32 %v3046, 0.0
    %v3063 = vmax.f32 %v3047, 0.0
    %v3064 = vmax.f32 %v3048, 0.0
    %v3065 = vmax.f32 %v3049, 0.0
    %v3066 = vmax.f32 %v3050, 0.0
    %v3067 = vmax.f32 %v3051, 0.0
    %v3084 = vcombine.high %v3052, %v3052
    %v3086 = vunpack.c.l.s4 1983009808
    %v3087 = vunpack.c.0.s8 %v3086
    %v3088 = vlaneseq
    %v3089 = vshrl.u32 %v3088, 7
    %v3090 = vsub.s32 %v3087, %v3089
    %v3091 = vrot.slane %v3052, %v3090
    %v3093 = vunpack.c.l.s4 1983009808
    %v3094 = vunpack.c.0.s8 %v3093
    %v3095 = vlaneseq
    %v3096 = vshrl.u32 %v3095, 7
    %v3097 = vsub.s32 %v3094, %v3096
    %v3098 = vrot.slane %v3084, %v3097
    %v3099 = vcombine.high %v3091, %v3091
    %v3100 = vcombine.high %v3098, %v3098
    %v3101 = vcombine.high %v3053, %v3053
    %v3103 = vunpack.c.l.s4 1983009808
    %v3104 = vunpack.c.0.s8 %v3103
    %v3105 = vlaneseq
    %v3106 = vshrl.u32 %v3105, 7
    %v3107 = vsub.s32 %v3104, %v3106
    %v3108 = vrot.slane %v3053, %v3107
    %v3110 = vunpack.c.l.s4 1983009808
    %v3111 = vunpack.c.0.s8 %v3110
    %v3112 = vlaneseq
    %v3113 = vshrl.u32 %v3112, 7
    %v3114 = vsub.s32 %v3111, %v3113
    %v3115 = vrot.slane %v3101, %v3114
    %v3116 = vcombine.high %v3108, %v3108
    %v3117 = vcombine.high %v3115, %v3115
    %v3118 = vcombine.high %v3054, %v3054
    %v3120 = vunpack.c.l.s4 1983009808
    %v3121 = vunpack.c.0.s8 %v3120
    %v3122 = vlaneseq
    %v3123 = vshrl.u32 %v3122, 7
    %v3124 = vsub.s32 %v3121, %v3123
    %v3125 = vrot.slane %v3054, %v3124
    %v3127 = vunpack.c.l.s4 1983009808
    %v3128 = vunpack.c.0.s8 %v3127
    %v3129 = vlaneseq
    %v3130 = vshrl.u32 %v3129, 7
    %v3131 = vsub.s32 %v3128, %v3130
    %v3132 = vrot.slane %v3118, %v3131
    %v3133 = vcombine.high %v3125, %v3125
    %v3134 = vcombine.high %v3132, %v3132
    %v3135 = vcombine.high %v3055, %v3055
    %v3137 = vunpack.c.l.s4 1983009808
    %v3138 = vunpack.c.0.s8 %v3137
    %v3139 = vlaneseq
    %v3140 = vshrl.u32 %v3139, 7
    %v3141 = vsub.s32 %v3138, %v3140
    %v3142 = vrot.slane %v3055, %v3141
    %v3144 = vunpack.c.l.s4 1983009808
    %v3145 = vunpack.c.0.s8 %v3144
    %v3146 = vlaneseq
    %v3147 = vshrl.u32 %v3146, 7
    %v3148 = vsub.s32 %v3145, %v3147
    %v3149 = vrot.slane %v3135, %v3148
    %v3150 = vcombine.high %v3142, %v3142
    %v3151 = vcombine.high %v3149, %v3149
    %v3152 = vcombine.high %v3056, %v3056
    %v3154 = vunpack.c.l.s4 1983009808
    %v3155 = vunpack.c.0.s8 %v3154
    %v3156 = vlaneseq
    %v3157 = vshrl.u32 %v3156, 7
    %v3158 = vsub.s32 %v3155, %v3157
    %v3159 = vrot.slane %v3056, %v3158
    %v3161 = vunpack.c.l.s4 1983009808
    %v3162 = vunpack.c.0.s8 %v3161
    %v3163 = vlaneseq
    %v3164 = vshrl.u32 %v3163, 7
    %v3165 = vsub.s32 %v3162, %v3164
    %v3166 = vrot.slane %v3152, %v3165
    %v3167 = vcombine.high %v3159, %v3159
    %v3168 = vcombine.high %v3166, %v3166
    %v3169 = vcombine.high %v3057, %v3057
    %v3171 = vunpack.c.l.s4 1983009808
    %v3172 = vunpack.c.0.s8 %v3171
    %v3173 = vlaneseq
    %v3174 = vshrl.u32 %v3173, 7
    %v3175 = vsub.s32 %v3172, %v3174
    %v3176 = vrot.slane %v3057, %v3175
    %v3178 = vunpack.c.l.s4 1983009808
    %v3179 = vunpack.c.0.s8 %v3178
    %v3180 = vlaneseq
    %v3181 = vshrl.u32 %v3180, 7
    %v3182 = vsub.s32 %v3179, %v3181
    %v3183 = vrot.slane %v3169, %v3182
    %v3184 = vcombine.high %v3176, %v3176
    %v3185 = vcombine.high %v3183, %v3183
    %v3186 = vcombine.high %v3058, %v3058
    %v3188 = vunpack.c.l.s4 1983009808
    %v3189 = vunpack.c.0.s8 %v3188
    %v3190 = vlaneseq
    %v3191 = vshrl.u32 %v3190, 7
    %v3192 = vsub.s32 %v3189, %v3191
    %v3193 = vrot.slane %v3058, %v3192
    %v3195 = vunpack.c.l.s4 1983009808
    %v3196 = vunpack.c.0.s8 %v3195
    %v3197 = vlaneseq
    %v3198 = vshrl.u32 %v3197, 7
    %v3199 = vsub.s32 %v3196, %v3198
    %v3200 = vrot.slane %v3186, %v3199
    %v3201 = vcombine.high %v3193, %v3193
    %v3202 = vcombine.high %v3200, %v3200
    %v3203 = vcombine.high %v3059, %v3059
    %v3205 = vunpack.c.l.s4 1983009808
    %v3206 = vunpack.c.0.s8 %v3205
    %v3207 = vlaneseq
    %v3208 = vshrl.u32 %v3207, 7
    %v3209 = vsub.s32 %v3206, %v3208
    %v3210 = vrot.slane %v3059, %v3209
    %v3212 = vunpack.c.l.s4 1983009808
    %v3213 = vunpack.c.0.s8 %v3212
    %v3214 = vlaneseq
    %v3215 = vshrl.u32 %v3214, 7
    %v3216 = vsub.s32 %v3213, %v3215
    %v3217 = vrot.slane %v3203, %v3216
    %v3218 = vcombine.high %v3210, %v3210
    %v3219 = vcombine.high %v3217, %v3217
    %v3220 = vcombine.high %v3060, %v3060
    %v3222 = vunpack.c.l.s4 1983009808
    %v3223 = vunpack.c.0.s8 %v3222
    %v3224 = vlaneseq
    %v3225 = vshrl.u32 %v3224, 7
    %v3226 = vsub.s32 %v3223, %v3225
    %v3227 = vrot.slane %v3060, %v3226
    %v3229 = vunpack.c.l.s4 1983009808
    %v3230 = vunpack.c.0.s8 %v3229
    %v3231 = vlaneseq
    %v3232 = vshrl.u32 %v3231, 7
    %v3233 = vsub.s32 %v3230, %v3232
    %v3234 = vrot.slane %v3220, %v3233
    %v3235 = vcombine.high %v3227, %v3227
    %v3236 = vcombine.high %v3234, %v3234
    %v3237 = vcombine.high %v3061, %v3061
    %v3239 = vunpack.c.l.s4 1983009808
    %v3240 = vunpack.c.0.s8 %v3239
    %v3241 = vlaneseq
    %v3242 = vshrl.u32 %v3241, 7
    %v3243 = vsub.s32 %v3240, %v3242
    %v3244 = vrot.slane %v3061, %v3243
    %v3246 = vunpack.c.l.s4 1983009808
    %v3247 = vunpack.c.0.s8 %v3246
    %v3248 = vlaneseq
    %v3249 = vshrl.u32 %v3248, 7
    %v3250 = vsub.s32 %v3247, %v3249
    %v3251 = vrot.slane %v3237, %v3250
    %v3252 = vcombine.high %v3244, %v3244
    %v3253 = vcombine.high %v3251, %v3251
    %v3254 = vcombine.high %v3062, %v3062
    %v3256 = vunpack.c.l.s4 1983009808
    %v3257 = vunpack.c.0.s8 %v3256
    %v3258 = vlaneseq
    %v3259 = vshrl.u32 %v3258, 7
    %v3260 = vsub.s32 %v3257, %v3259
    %v3261 = vrot.slane %v3062, %v3260
    %v3263 = vunpack.c.l.s4 1983009808
    %v3264 = vunpack.c.0.s8 %v3263
    %v3265 = vlaneseq
    %v3266 = vshrl.u32 %v3265, 7
    %v3267 = vsub.s32 %v3264, %v3266
    %v3268 = vrot.slane %v3254, %v3267
    %v3269 = vcombine.high %v3261, %v3261
    %v3270 = vcombine.high %v3268, %v3268
    %v3271 = vcombine.high %v3063, %v3063
    %v3273 = vunpack.c.l.s4 1983009808
    %v3274 = vunpack.c.0.s8 %v3273
    %v3275 = vlaneseq
    %v3276 = vshrl.u32 %v3275, 7
    %v3277 = vsub.s32 %v3274, %v3276
    %v3278 = vrot.slane %v3063, %v3277
    %v3280 = vunpack.c.l.s4 1983009808
    %v3281 = vunpack.c.0.s8 %v3280
    %v3282 = vlaneseq
    %v3283 = vshrl.u32 %v3282, 7
    %v3284 = vsub.s32 %v3281, %v3283
    %v3285 = vrot.slane %v3271, %v3284
    %v3286 = vcombine.high %v3278, %v3278
    %v3287 = vcombine.high %v3285, %v3285
    %v3288 = vcombine.high %v3064, %v3064
    %v3290 = vunpack.c.l.s4 1983009808
    %v3291 = vunpack.c.0.s8 %v3290
    %v3292 = vlaneseq
    %v3293 = vshrl.u32 %v3292, 7
    %v3294 = vsub.s32 %v3291, %v3293
    %v3295 = vrot.slane %v3064, %v3294
    %v3297 = vunpack.c.l.s4 1983009808
    %v3298 = vunpack.c.0.s8 %v3297
    %v3299 = vlaneseq
    %v3300 = vshrl.u32 %v3299, 7
    %v3301 = vsub.s32 %v3298, %v3300
    %v3302 = vrot.slane %v3288, %v3301
    %v3303 = vcombine.high %v3295, %v3295
    %v3304 = vcombine.high %v3302, %v3302
    %v3305 = vcombine.high %v3065, %v3065
    %v3307 = vunpack.c.l.s4 1983009808
    %v3308 = vunpack.c.0.s8 %v3307
    %v3309 = vlaneseq
    %v3310 = vshrl.u32 %v3309, 7
    %v3311 = vsub.s32 %v3308, %v3310
    %v3312 = vrot.slane %v3065, %v3311
    %v3314 = vunpack.c.l.s4 1983009808
    %v3315 = vunpack.c.0.s8 %v3314
    %v3316 = vlaneseq
    %v3317 = vshrl.u32 %v3316, 7
    %v3318 = vsub.s32 %v3315, %v3317
    %v3319 = vrot.slane %v3305, %v3318
    %v3320 = vcombine.high %v3312, %v3312
    %v3321 = vcombine.high %v3319, %v3319
    %v3322 = vcombine.high %v3066, %v3066
    %v3324 = vunpack.c.l.s4 1983009808
    %v3325 = vunpack.c.0.s8 %v3324
    %v3326 = vlaneseq
    %v3327 = vshrl.u32 %v3326, 7
    %v3328 = vsub.s32 %v3325, %v3327
    %v3329 = vrot.slane %v3066, %v3328
    %v3331 = vunpack.c.l.s4 1983009808
    %v3332 = vunpack.c.0.s8 %v3331
    %v3333 = vlaneseq
    %v3334 = vshrl.u32 %v3333, 7
    %v3335 = vsub.s32 %v3332, %v3334
    %v3336 = vrot.slane %v3322, %v3335
    %v3337 = vcombine.high %v3329, %v3329
    %v3338 = vcombine.high %v3336, %v3336
    %v3339 = vcombine.high %v3067, %v3067
    %v3341 = vunpack.c.l.s4 1983009808
    %v3342 = vunpack.c.0.s8 %v3341
    %v3343 = vlaneseq
    %v3344 = vshrl.u32 %v3343, 7
    %v3345 = vsub.s32 %v3342, %v3344
    %v3346 = vrot.slane %v3067, %v3345
    %v3348 = vunpack.c.l.s4 1983009808
    %v3349 = vunpack.c.0.s8 %v3348
    %v3350 = vlaneseq
    %v3351 = vshrl.u32 %v3350, 7
    %v3352 = vsub.s32 %v3349, %v3351
    %v3353 = vrot.slane %v3339, %v3352
    %v3354 = vcombine.high %v3346, %v3346
    %v3355 = vcombine.high %v3353, %v3353
    %3405 = vrot.lane.b32.xlu0 %v3091, 8
    %v3406 = vpop.permute.xlu0 %3405
    %3407 = vrot.lane.b32.xlu0 %v3099, 8
    %v3408 = vpop.permute.xlu0 %3407
    %3409 = vrot.lane.b32.xlu0 %v3098, 8
    %v3410 = vpop.permute.xlu0 %3409
    %3411 = vrot.lane.b32.xlu0 %v3100, 8
    %v3412 = vpop.permute.xlu0 %3411
    %3413 = vrot.lane.b32.xlu0 %v3108, 8
    %v3414 = vpop.permute.xlu0 %3413
    %3415 = vrot.lane.b32.xlu0 %v3116, 8
    %v3416 = vpop.permute.xlu0 %3415
    %3417 = vrot.lane.b32.xlu0 %v3115, 8
    %v3418 = vpop.permute.xlu0 %3417
    %3419 = vrot.lane.b32.xlu0 %v3117, 8
    %v3420 = vpop.permute.xlu0 %3419
    %3421 = vrot.lane.b32.xlu0 %v3125, 8
    %v3422 = vpop.permute.xlu0 %3421
    %3423 = vrot.lane.b32.xlu0 %v3133, 8
    %v3424 = vpop.permute.xlu0 %3423
    %3425 = vrot.lane.b32.xlu0 %v3132, 8
    %v3426 = vpop.permute.xlu0 %3425
    %3427 = vrot.lane.b32.xlu0 %v3134, 8
    %v3428 = vpop.permute.xlu0 %3427
    %3429 = vrot.lane.b32.xlu0 %v3142, 8
    %v3430 = vpop.permute.xlu0 %3429
    %3431 = vrot.lane.b32.xlu0 %v3150, 8
    %v3432 = vpop.permute.xlu0 %3431
    %3433 = vrot.lane.b32.xlu0 %v3149, 8
    %v3434 = vpop.permute.xlu0 %3433
    %3435 = vrot.lane.b32.xlu0 %v3151, 8
    %v3436 = vpop.permute.xlu0 %3435
    %3437 = vrot.lane.b32.xlu0 %v3159, 8
    %v3438 = vpop.permute.xlu0 %3437
    %3439 = vrot.lane.b32.xlu0 %v3167, 8
    %v3440 = vpop.permute.xlu0 %3439
    %3441 = vrot.lane.b32.xlu0 %v3166, 8
    %v3442 = vpop.permute.xlu0 %3441
    %3443 = vrot.lane.b32.xlu0 %v3168, 8
    %v3444 = vpop.permute.xlu0 %3443
    %3445 = vrot.lane.b32.xlu0 %v3176, 8
    %v3446 = vpop.permute.xlu0 %3445
    %3447 = vrot.lane.b32.xlu0 %v3184, 8
    %v3448 = vpop.permute.xlu0 %3447
    %3449 = vrot.lane.b32.xlu0 %v3183, 8
    %v3450 = vpop.permute.xlu0 %3449
    %3451 = vrot.lane.b32.xlu0 %v3185, 8
    %v3452 = vpop.permute.xlu0 %3451
    %3453 = vrot.lane.b32.xlu0 %v3193, 8
    %v3454 = vpop.permute.xlu0 %3453
    %3455 = vrot.lane.b32.xlu0 %v3201, 8
    %v3456 = vpop.permute.xlu0 %3455
    %3457 = vrot.lane.b32.xlu0 %v3200, 8
    %v3458 = vpop.permute.xlu0 %3457
    %3459 = vrot.lane.b32.xlu0 %v3202, 8
    %v3460 = vpop.permute.xlu0 %3459
    %3461 = vrot.lane.b32.xlu0 %v3210, 8
    %v3462 = vpop.permute.xlu0 %3461
    %3463 = vrot.lane.b32.xlu0 %v3218, 8
    %v3464 = vpop.permute.xlu0 %3463
    %3465 = vrot.lane.b32.xlu0 %v3217, 8
    %v3466 = vpop.permute.xlu0 %3465
    %3467 = vrot.lane.b32.xlu0 %v3219, 8
    %v3468 = vpop.permute.xlu0 %3467
    %3469 = vrot.lane.b32.xlu0 %v3227, 8
    %v3470 = vpop.permute.xlu0 %3469
    %3471 = vrot.lane.b32.xlu0 %v3235, 8
    %v3472 = vpop.permute.xlu0 %3471
    %3473 = vrot.lane.b32.xlu0 %v3234, 8
    %v3474 = vpop.permute.xlu0 %3473
    %3475 = vrot.lane.b32.xlu0 %v3236, 8
    %v3476 = vpop.permute.xlu0 %3475
    %3477 = vrot.lane.b32.xlu0 %v3244, 8
    %v3478 = vpop.permute.xlu0 %3477
    %3479 = vrot.lane.b32.xlu0 %v3252, 8
    %v3480 = vpop.permute.xlu0 %3479
    %3481 = vrot.lane.b32.xlu0 %v3251, 8
    %v3482 = vpop.permute.xlu0 %3481
    %3483 = vrot.lane.b32.xlu0 %v3253, 8
    %v3484 = vpop.permute.xlu0 %3483
    %3485 = vrot.lane.b32.xlu0 %v3261, 8
    %v3486 = vpop.permute.xlu0 %3485
    %3487 = vrot.lane.b32.xlu0 %v3269, 8
    %v3488 = vpop.permute.xlu0 %3487
    %3489 = vrot.lane.b32.xlu0 %v3268, 8
    %v3490 = vpop.permute.xlu0 %3489
    %3491 = vrot.lane.b32.xlu0 %v3270, 8
    %v3492 = vpop.permute.xlu0 %3491
    %3493 = vrot.lane.b32.xlu0 %v3278, 8
    %v3494 = vpop.permute.xlu0 %3493
    %3495 = vrot.lane.b32.xlu0 %v3286, 8
    %v3496 = vpop.permute.xlu0 %3495
    %3497 = vrot.lane.b32.xlu0 %v3285, 8
    %v3498 = vpop.permute.xlu0 %3497
    %3499 = vrot.lane.b32.xlu0 %v3287, 8
    %v3500 = vpop.permute.xlu0 %3499
    %3501 = vrot.lane.b32.xlu0 %v3295, 8
    %v3502 = vpop.permute.xlu0 %3501
    %3503 = vrot.lane.b32.xlu0 %v3303, 8
    %v3504 = vpop.permute.xlu0 %3503
    %3505 = vrot.lane.b32.xlu0 %v3302, 8
    %v3506 = vpop.permute.xlu0 %3505
    %3507 = vrot.lane.b32.xlu0 %v3304, 8
    %v3508 = vpop.permute.xlu0 %3507
    %3509 = vrot.lane.b32.xlu0 %v3312, 8
    %v3510 = vpop.permute.xlu0 %3509
    %3511 = vrot.lane.b32.xlu0 %v3320, 8
    %v3512 = vpop.permute.xlu0 %3511
    %3513 = vrot.lane.b32.xlu0 %v3319, 8
    %v3514 = vpop.permute.xlu0 %3513
    %3515 = vrot.lane.b32.xlu0 %v3321, 8
    %v3516 = vpop.permute.xlu0 %3515
    %3573 = vrot.lane.b32.xlu0 0.0, 16
    %v3574 = vpop.permute.xlu0 %3573
    %3575 = vrot.lane.b32.xlu0 %v3099, 16
    %v3576 = vpop.permute.xlu0 %3575
    %3577 = vrot.lane.b32.xlu0 %v3098, 16
    %v3578 = vpop.permute.xlu0 %3577
    %3579 = vrot.lane.b32.xlu0 %v3100, 16
    %v3580 = vpop.permute.xlu0 %3579
    %3581 = vrot.lane.b32.xlu0 %v3108, 16
    %v3582 = vpop.permute.xlu0 %3581
    %3583 = vrot.lane.b32.xlu0 %v3116, 16
    %v3584 = vpop.permute.xlu0 %3583
    %3585 = vrot.lane.b32.xlu0 %v3115, 16
    %v3586 = vpop.permute.xlu0 %3585
    %3587 = vrot.lane.b32.xlu0 %v3117, 16
    %v3588 = vpop.permute.xlu0 %3587
    %3589 = vrot.lane.b32.xlu0 %v3133, 16
    %v3590 = vpop.permute.xlu0 %3589
    %3591 = vrot.lane.b32.xlu0 %v3132, 16
    %v3592 = vpop.permute.xlu0 %3591
    %3593 = vrot.lane.b32.xlu0 %v3134, 16
    %v3594 = vpop.permute.xlu0 %3593
    %3595 = vrot.lane.b32.xlu0 %v3142, 16
    %v3596 = vpop.permute.xlu0 %3595
    %3597 = vrot.lane.b32.xlu0 %v3150, 16
    %v3598 = vpop.permute.xlu0 %3597
    %3599 = vrot.lane.b32.xlu0 %v3149, 16
    %v3600 = vpop.permute.xlu0 %3599
    %3601 = vrot.lane.b32.xlu0 %v3151, 16
    %v3602 = vpop.permute.xlu0 %3601
    %3603 = vrot.lane.b32.xlu0 %v3167, 16
    %v3604 = vpop.permute.xlu0 %3603
    %3605 = vrot.lane.b32.xlu0 %v3166, 16
    %v3606 = vpop.permute.xlu0 %3605
    %3607 = vrot.lane.b32.xlu0 %v3168, 16
    %v3608 = vpop.permute.xlu0 %3607
    %3609 = vrot.lane.b32.xlu0 %v3176, 16
    %v3610 = vpop.permute.xlu0 %3609
    %3611 = vrot.lane.b32.xlu0 %v3184, 16
    %v3612 = vpop.permute.xlu0 %3611
    %3613 = vrot.lane.b32.xlu0 %v3183, 16
    %v3614 = vpop.permute.xlu0 %3613
    %3615 = vrot.lane.b32.xlu0 %v3185, 16
    %v3616 = vpop.permute.xlu0 %3615
    %3617 = vrot.lane.b32.xlu0 %v3201, 16
    %v3618 = vpop.permute.xlu0 %3617
    %3619 = vrot.lane.b32.xlu0 %v3200, 16
    %v3620 = vpop.permute.xlu0 %3619
    %3621 = vrot.lane.b32.xlu0 %v3202, 16
    %v3622 = vpop.permute.xlu0 %3621
    %3623 = vrot.lane.b32.xlu0 %v3210, 16
    %v3624 = vpop.permute.xlu0 %3623
    %3625 = vrot.lane.b32.xlu0 %v3218, 16
    %v3626 = vpop.permute.xlu0 %3625
    %3627 = vrot.lane.b32.xlu0 %v3217, 16
    %v3628 = vpop.permute.xlu0 %3627
    %3629 = vrot.lane.b32.xlu0 %v3219, 16
    %v3630 = vpop.permute.xlu0 %3629
    %3631 = vrot.lane.b32.xlu0 %v3235, 16
    %v3632 = vpop.permute.xlu0 %3631
    %3633 = vrot.lane.b32.xlu0 %v3234, 16
    %v3634 = vpop.permute.xlu0 %3633
    %3635 = vrot.lane.b32.xlu0 %v3236, 16
    %v3636 = vpop.permute.xlu0 %3635
    %3637 = vrot.lane.b32.xlu0 %v3244, 16
    %v3638 = vpop.permute.xlu0 %3637
    %3639 = vrot.lane.b32.xlu0 %v3252, 16
    %v3640 = vpop.permute.xlu0 %3639
    %3641 = vrot.lane.b32.xlu0 %v3251, 16
    %v3642 = vpop.permute.xlu0 %3641
    %3643 = vrot.lane.b32.xlu0 %v3253, 16
    %v3644 = vpop.permute.xlu0 %3643
    %3645 = vrot.lane.b32.xlu0 %v3269, 16
    %v3646 = vpop.permute.xlu0 %3645
    %3647 = vrot.lane.b32.xlu0 %v3268, 16
    %v3648 = vpop.permute.xlu0 %3647
    %3649 = vrot.lane.b32.xlu0 %v3270, 16
    %v3650 = vpop.permute.xlu0 %3649
    %3651 = vrot.lane.b32.xlu0 %v3278, 16
    %v3652 = vpop.permute.xlu0 %3651
    %3653 = vrot.lane.b32.xlu0 %v3286, 16
    %v3654 = vpop.permute.xlu0 %3653
    %3655 = vrot.lane.b32.xlu0 %v3285, 16
    %v3656 = vpop.permute.xlu0 %3655
    %3657 = vrot.lane.b32.xlu0 %v3287, 16
    %v3658 = vpop.permute.xlu0 %3657
    %3659 = vrot.lane.b32.xlu0 %v3303, 16
    %v3660 = vpop.permute.xlu0 %3659
    %3661 = vrot.lane.b32.xlu0 %v3302, 16
    %v3662 = vpop.permute.xlu0 %3661
    %3663 = vrot.lane.b32.xlu0 %v3304, 16
    %v3664 = vpop.permute.xlu0 %3663
    %3665 = vrot.lane.b32.xlu0 %v3312, 16
    %v3666 = vpop.permute.xlu0 %3665
    %3667 = vrot.lane.b32.xlu0 %v3320, 16
    %v3668 = vpop.permute.xlu0 %3667
    %3669 = vrot.lane.b32.xlu0 %v3319, 16
    %v3670 = vpop.permute.xlu0 %3669
    %3671 = vrot.lane.b32.xlu0 %v3321, 16
    %v3672 = vpop.permute.xlu0 %3671
    %3723 = vrot.lane.b32.xlu0 %v3091, 24
    %v3724 = vpop.permute.xlu0 %3723
    %3725 = vrot.lane.b32.xlu0 %v3099, 24
    %v3726 = vpop.permute.xlu0 %3725
    %3727 = vrot.lane.b32.xlu0 %v3098, 24
    %v3728 = vpop.permute.xlu0 %3727
    %3729 = vrot.lane.b32.xlu0 %v3100, 24
    %v3730 = vpop.permute.xlu0 %3729
    %3731 = vrot.lane.b32.xlu0 %v3108, 24
    %v3732 = vpop.permute.xlu0 %3731
    %3733 = vrot.lane.b32.xlu0 %v3116, 24
    %v3734 = vpop.permute.xlu0 %3733
    %3735 = vrot.lane.b32.xlu0 %v3115, 24
    %v3736 = vpop.permute.xlu0 %3735
    %3737 = vrot.lane.b32.xlu0 %v3125, 24
    %v3738 = vpop.permute.xlu0 %3737
    %3739 = vrot.lane.b32.xlu0 %v3133, 24
    %v3740 = vpop.permute.xlu0 %3739
    %3741 = vrot.lane.b32.xlu0 %v3132, 24
    %v3742 = vpop.permute.xlu0 %3741
    %3743 = vrot.lane.b32.xlu0 %v3134, 24
    %v3744 = vpop.permute.xlu0 %3743
    %3745 = vrot.lane.b32.xlu0 %v3142, 24
    %v3746 = vpop.permute.xlu0 %3745
    %3747 = vrot.lane.b32.xlu0 %v3150, 24
    %v3748 = vpop.permute.xlu0 %3747
    %3749 = vrot.lane.b32.xlu0 %v3149, 24
    %v3750 = vpop.permute.xlu0 %3749
    %3751 = vrot.lane.b32.xlu0 %v3159, 24
    %v3752 = vpop.permute.xlu0 %3751
    %3753 = vrot.lane.b32.xlu0 %v3167, 24
    %v3754 = vpop.permute.xlu0 %3753
    %3755 = vrot.lane.b32.xlu0 %v3166, 24
    %v3756 = vpop.permute.xlu0 %3755
    %3757 = vrot.lane.b32.xlu0 %v3168, 24
    %v3758 = vpop.permute.xlu0 %3757
    %3759 = vrot.lane.b32.xlu0 %v3176, 24
    %v3760 = vpop.permute.xlu0 %3759
    %3761 = vrot.lane.b32.xlu0 %v3184, 24
    %v3762 = vpop.permute.xlu0 %3761
    %3763 = vrot.lane.b32.xlu0 %v3183, 24
    %v3764 = vpop.permute.xlu0 %3763
    %3765 = vrot.lane.b32.xlu0 %v3193, 24
    %v3766 = vpop.permute.xlu0 %3765
    %3767 = vrot.lane.b32.xlu0 %v3201, 24
    %v3768 = vpop.permute.xlu0 %3767
    %3769 = vrot.lane.b32.xlu0 %v3200, 24
    %v3770 = vpop.permute.xlu0 %3769
    %3771 = vrot.lane.b32.xlu0 %v3202, 24
    %v3772 = vpop.permute.xlu0 %3771
    %3773 = vrot.lane.b32.xlu0 %v3210, 24
    %v3774 = vpop.permute.xlu0 %3773
    %3775 = vrot.lane.b32.xlu0 %v3218, 24
    %v3776 = vpop.permute.xlu0 %3775
    %3777 = vrot.lane.b32.xlu0 %v3217, 24
    %v3778 = vpop.permute.xlu0 %3777
    %3779 = vrot.lane.b32.xlu0 %v3227, 24
    %v3780 = vpop.permute.xlu0 %3779
    %3781 = vrot.lane.b32.xlu0 %v3235, 24
    %v3782 = vpop.permute.xlu0 %3781
    %3783 = vrot.lane.b32.xlu0 %v3234, 24
    %v3784 = vpop.permute.xlu0 %3783
    %3785 = vrot.lane.b32.xlu0 %v3236, 24
    %v3786 = vpop.permute.xlu0 %3785
    %3787 = vrot.lane.b32.xlu0 %v3244, 24
    %v3788 = vpop.permute.xlu0 %3787
    %3789 = vrot.lane.b32.xlu0 %v3252, 24
    %v3790 = vpop.permute.xlu0 %3789
    %3791 = vrot.lane.b32.xlu0 %v3251, 24
    %v3792 = vpop.permute.xlu0 %3791
    %3793 = vrot.lane.b32.xlu0 %v3261, 24
    %v3794 = vpop.permute.xlu0 %3793
    %3795 = vrot.lane.b32.xlu0 %v3269, 24
    %v3796 = vpop.permute.xlu0 %3795
    %3797 = vrot.lane.b32.xlu0 %v3268, 24
    %v3798 = vpop.permute.xlu0 %3797
    %3799 = vrot.lane.b32.xlu0 %v3270, 24
    %v3800 = vpop.permute.xlu0 %3799
    %3801 = vrot.lane.b32.xlu0 %v3278, 24
    %v3802 = vpop.permute.xlu0 %3801
    %3803 = vrot.lane.b32.xlu0 %v3286, 24
    %v3804 = vpop.permute.xlu0 %3803
    %3805 = vrot.lane.b32.xlu0 %v3285, 24
    %v3806 = vpop.permute.xlu0 %3805
    %3807 = vrot.lane.b32.xlu0 %v3295, 24
    %v3808 = vpop.permute.xlu0 %3807
    %3809 = vrot.lane.b32.xlu0 %v3303, 24
    %v3810 = vpop.permute.xlu0 %3809
    %3811 = vrot.lane.b32.xlu0 %v3302, 24
    %v3812 = vpop.permute.xlu0 %3811
    %3813 = vrot.lane.b32.xlu0 %v3304, 24
    %v3814 = vpop.permute.xlu0 %3813
    %3815 = vrot.lane.b32.xlu0 %v3312, 24
    %v3816 = vpop.permute.xlu0 %3815
    %3817 = vrot.lane.b32.xlu0 %v3320, 24
    %v3818 = vpop.permute.xlu0 %3817
    %3819 = vrot.lane.b32.xlu0 %v3319, 24
    %v3820 = vpop.permute.xlu0 %3819
    %3821 = vrot.lane.b32.xlu0 %v3329, 24
    %v3822 = vpop.permute.xlu0 %3821
    %3823 = vrot.lane.b32.xlu0 %v3337, 24
    %v3824 = vpop.permute.xlu0 %3823
    %3825 = vrot.lane.b32.xlu0 %v3336, 24
    %v3826 = vpop.permute.xlu0 %3825
    %3827 = vrot.lane.b32.xlu0 %v3338, 24
    %v3828 = vpop.permute.xlu0 %3827
    %3829 = vrot.lane.b32.xlu0 %v3346, 24
    %v3830 = vpop.permute.xlu0 %3829
    %3831 = vrot.lane.b32.xlu0 %v3354, 24
    %v3832 = vpop.permute.xlu0 %3831
    %3833 = vrot.lane.b32.xlu0 %v3353, 24
    %v3834 = vpop.permute.xlu0 %3833
    %3891 = vrot.lane.b32.xlu0 %v3091, 32
    %v3892 = vpop.permute.xlu0 %3891
    %3893 = vrot.lane.b32.xlu0 %v3099, 32
    %v3894 = vpop.permute.xlu0 %3893
    %3895 = vrot.lane.b32.xlu0 %v3098, 32
    %v3896 = vpop.permute.xlu0 %3895
    %3897 = vrot.lane.b32.xlu0 %v3100, 32
    %v3898 = vpop.permute.xlu0 %3897
    %3899 = vrot.lane.b32.xlu0 %v3108, 32
    %v3900 = vpop.permute.xlu0 %3899
    %3901 = vrot.lane.b32.xlu0 %v3116, 32
    %v3902 = vpop.permute.xlu0 %3901
    %3903 = vrot.lane.b32.xlu0 %v3115, 32
    %v3904 = vpop.permute.xlu0 %3903
    %3905 = vrot.lane.b32.xlu0 %v3117, 32
    %v3906 = vpop.permute.xlu0 %3905
    %3907 = vrot.lane.b32.xlu0 %v3125, 32
    %v3908 = vpop.permute.xlu0 %3907
    %3909 = vrot.lane.b32.xlu0 %v3133, 32
    %v3910 = vpop.permute.xlu0 %3909
    %3911 = vrot.lane.b32.xlu0 %v3132, 32
    %v3912 = vpop.permute.xlu0 %3911
    %3913 = vrot.lane.b32.xlu0 %v3134, 32
    %v3914 = vpop.permute.xlu0 %3913
    %3915 = vrot.lane.b32.xlu0 %v3142, 32
    %v3916 = vpop.permute.xlu0 %3915
    %3917 = vrot.lane.b32.xlu0 %v3150, 32
    %v3918 = vpop.permute.xlu0 %3917
    %3919 = vrot.lane.b32.xlu0 %v3149, 32
    %v3920 = vpop.permute.xlu0 %3919
    %3921 = vrot.lane.b32.xlu0 %v3151, 32
    %v3922 = vpop.permute.xlu0 %3921
    %3923 = vrot.lane.b32.xlu0 %v3159, 32
    %v3924 = vpop.permute.xlu0 %3923
    %3925 = vrot.lane.b32.xlu0 %v3167, 32
    %v3926 = vpop.permute.xlu0 %3925
    %3927 = vrot.lane.b32.xlu0 %v3166, 32
    %v3928 = vpop.permute.xlu0 %3927
    %3929 = vrot.lane.b32.xlu0 %v3168, 32
    %v3930 = vpop.permute.xlu0 %3929
    %3931 = vrot.lane.b32.xlu0 %v3176, 32
    %v3932 = vpop.permute.xlu0 %3931
    %3933 = vrot.lane.b32.xlu0 %v3184, 32
    %v3934 = vpop.permute.xlu0 %3933
    %3935 = vrot.lane.b32.xlu0 %v3183, 32
    %v3936 = vpop.permute.xlu0 %3935
    %3937 = vrot.lane.b32.xlu0 %v3185, 32
    %v3938 = vpop.permute.xlu0 %3937
    %3939 = vrot.lane.b32.xlu0 %v3193, 32
    %v3940 = vpop.permute.xlu0 %3939
    %3941 = vrot.lane.b32.xlu0 %v3201, 32
    %v3942 = vpop.permute.xlu0 %3941
    %3943 = vrot.lane.b32.xlu0 %v3200, 32
    %v3944 = vpop.permute.xlu0 %3943
    %3945 = vrot.lane.b32.xlu0 %v3202, 32
    %v3946 = vpop.permute.xlu0 %3945
    %3947 = vrot.lane.b32.xlu0 %v3210, 32
    %v3948 = vpop.permute.xlu0 %3947
    %3949 = vrot.lane.b32.xlu0 %v3218, 32
    %v3950 = vpop.permute.xlu0 %3949
    %3951 = vrot.lane.b32.xlu0 %v3217, 32
    %v3952 = vpop.permute.xlu0 %3951
    %3953 = vrot.lane.b32.xlu0 %v3219, 32
    %v3954 = vpop.permute.xlu0 %3953
    %3955 = vrot.lane.b32.xlu0 %v3227, 32
    %v3956 = vpop.permute.xlu0 %3955
    %3957 = vrot.lane.b32.xlu0 %v3235, 32
    %v3958 = vpop.permute.xlu0 %3957
    %3959 = vrot.lane.b32.xlu0 %v3234, 32
    %v3960 = vpop.permute.xlu0 %3959
    %3961 = vrot.lane.b32.xlu0 %v3236, 32
    %v3962 = vpop.permute.xlu0 %3961
    %3963 = vrot.lane.b32.xlu0 %v3244, 32
    %v3964 = vpop.permute.xlu0 %3963
    %3965 = vrot.lane.b32.xlu0 %v3252, 32
    %v3966 = vpop.permute.xlu0 %3965
    %3967 = vrot.lane.b32.xlu0 %v3251, 32
    %v3968 = vpop.permute.xlu0 %3967
    %3969 = vrot.lane.b32.xlu0 %v3253, 32
    %v3970 = vpop.permute.xlu0 %3969
    %3971 = vrot.lane.b32.xlu0 %v3261, 32
    %v3972 = vpop.permute.xlu0 %3971
    %3973 = vrot.lane.b32.xlu0 %v3269, 32
    %v3974 = vpop.permute.xlu0 %3973
    %3975 = vrot.lane.b32.xlu0 %v3268, 32
    %v3976 = vpop.permute.xlu0 %3975
    %3977 = vrot.lane.b32.xlu0 %v3270, 32
    %v3978 = vpop.permute.xlu0 %3977
    %3979 = vrot.lane.b32.xlu0 %v3278, 32
    %v3980 = vpop.permute.xlu0 %3979
    %3981 = vrot.lane.b32.xlu0 %v3286, 32
    %v3982 = vpop.permute.xlu0 %3981
    %3983 = vrot.lane.b32.xlu0 %v3285, 32
    %v3984 = vpop.permute.xlu0 %3983
    %3985 = vrot.lane.b32.xlu0 %v3287, 32
    %v3986 = vpop.permute.xlu0 %3985
    %3987 = vrot.lane.b32.xlu0 %v3295, 32
    %v3988 = vpop.permute.xlu0 %3987
    %3989 = vrot.lane.b32.xlu0 %v3303, 32
    %v3990 = vpop.permute.xlu0 %3989
    %3991 = vrot.lane.b32.xlu0 %v3302, 32
    %v3992 = vpop.permute.xlu0 %3991
    %3993 = vrot.lane.b32.xlu0 %v3304, 32
    %v3994 = vpop.permute.xlu0 %3993
    %3995 = vrot.lane.b32.xlu0 %v3312, 32
    %v3996 = vpop.permute.xlu0 %3995
    %3997 = vrot.lane.b32.xlu0 %v3320, 32
    %v3998 = vpop.permute.xlu0 %3997
    %3999 = vrot.lane.b32.xlu0 %v3319, 32
    %v4000 = vpop.permute.xlu0 %3999
    %4001 = vrot.lane.b32.xlu0 %v3321, 32
    %v4002 = vpop.permute.xlu0 %4001
    %4003 = vrot.lane.b32.xlu0 %v3329, 32
    %v4004 = vpop.permute.xlu0 %4003
    %4005 = vrot.lane.b32.xlu0 %v3337, 32
    %v4006 = vpop.permute.xlu0 %4005
    %4007 = vrot.lane.b32.xlu0 %v3336, 32
    %v4008 = vpop.permute.xlu0 %4007
    %4009 = vrot.lane.b32.xlu0 %v3338, 32
    %v4010 = vpop.permute.xlu0 %4009
    %4011 = vrot.lane.b32.xlu0 %v3346, 32
    %v4012 = vpop.permute.xlu0 %4011
    %4013 = vrot.lane.b32.xlu0 %v3354, 32
    %v4014 = vpop.permute.xlu0 %4013
    %4015 = vrot.lane.b32.xlu0 %v3353, 32
    %v4016 = vpop.permute.xlu0 %4015
    %4017 = vrot.lane.b32.xlu0 %v3355, 32
    %v4018 = vpop.permute.xlu0 %4017
    %4083 = vrot.lane.b32.xlu0 %v3099, 40
    %v4084 = vpop.permute.xlu0 %4083
    %4085 = vrot.lane.b32.xlu0 %v3098, 40
    %v4086 = vpop.permute.xlu0 %4085
    %4087 = vrot.lane.b32.xlu0 %v3100, 40
    %v4088 = vpop.permute.xlu0 %4087
    %4089 = vrot.lane.b32.xlu0 %v3108, 40
    %v4090 = vpop.permute.xlu0 %4089
    %4091 = vrot.lane.b32.xlu0 %v3116, 40
    %v4092 = vpop.permute.xlu0 %4091
    %4093 = vrot.lane.b32.xlu0 %v3115, 40
    %v4094 = vpop.permute.xlu0 %4093
    %4095 = vrot.lane.b32.xlu0 %v3117, 40
    %v4096 = vpop.permute.xlu0 %4095
    %4097 = vrot.lane.b32.xlu0 0.0, 40
    %v4098 = vpop.permute.xlu0 %4097
    %4099 = vrot.lane.b32.xlu0 %v3133, 40
    %v4100 = vpop.permute.xlu0 %4099
    %4101 = vrot.lane.b32.xlu0 %v3132, 40
    %v4102 = vpop.permute.xlu0 %4101
    %4103 = vrot.lane.b32.xlu0 %v3134, 40
    %v4104 = vpop.permute.xlu0 %4103
    %4105 = vrot.lane.b32.xlu0 %v3142, 40
    %v4106 = vpop.permute.xlu0 %4105
    %4107 = vrot.lane.b32.xlu0 %v3150, 40
    %v4108 = vpop.permute.xlu0 %4107
    %4109 = vrot.lane.b32.xlu0 %v3149, 40
    %v4110 = vpop.permute.xlu0 %4109
    %4111 = vrot.lane.b32.xlu0 %v3151, 40
    %v4112 = vpop.permute.xlu0 %4111
    %4113 = vrot.lane.b32.xlu0 %v3167, 40
    %v4114 = vpop.permute.xlu0 %4113
    %4115 = vrot.lane.b32.xlu0 %v3166, 40
    %v4116 = vpop.permute.xlu0 %4115
    %4117 = vrot.lane.b32.xlu0 %v3168, 40
    %v4118 = vpop.permute.xlu0 %4117
    %4119 = vrot.lane.b32.xlu0 %v3176, 40
    %v4120 = vpop.permute.xlu0 %4119
    %4121 = vrot.lane.b32.xlu0 %v3184, 40
    %v4122 = vpop.permute.xlu0 %4121
    %4123 = vrot.lane.b32.xlu0 %v3183, 40
    %v4124 = vpop.permute.xlu0 %4123
    %4125 = vrot.lane.b32.xlu0 %v3185, 40
    %v4126 = vpop.permute.xlu0 %4125
    %4127 = vrot.lane.b32.xlu0 %v3201, 40
    %v4128 = vpop.permute.xlu0 %4127
    %4129 = vrot.lane.b32.xlu0 %v3200, 40
    %v4130 = vpop.permute.xlu0 %4129
    %4131 = vrot.lane.b32.xlu0 %v3202, 40
    %v4132 = vpop.permute.xlu0 %4131
    %4133 = vrot.lane.b32.xlu0 %v3210, 40
    %v4134 = vpop.permute.xlu0 %4133
    %4135 = vrot.lane.b32.xlu0 %v3218, 40
    %v4136 = vpop.permute.xlu0 %4135
    %4137 = vrot.lane.b32.xlu0 %v3217, 40
    %v4138 = vpop.permute.xlu0 %4137
    %4139 = vrot.lane.b32.xlu0 %v3219, 40
    %v4140 = vpop.permute.xlu0 %4139
    %4141 = vrot.lane.b32.xlu0 %v3235, 40
    %v4142 = vpop.permute.xlu0 %4141
    %4143 = vrot.lane.b32.xlu0 %v3234, 40
    %v4144 = vpop.permute.xlu0 %4143
    %4145 = vrot.lane.b32.xlu0 %v3236, 40
    %v4146 = vpop.permute.xlu0 %4145
    %4147 = vrot.lane.b32.xlu0 %v3244, 40
    %v4148 = vpop.permute.xlu0 %4147
    %4149 = vrot.lane.b32.xlu0 %v3252, 40
    %v4150 = vpop.permute.xlu0 %4149
    %4151 = vrot.lane.b32.xlu0 %v3251, 40
    %v4152 = vpop.permute.xlu0 %4151
    %4153 = vrot.lane.b32.xlu0 %v3253, 40
    %v4154 = vpop.permute.xlu0 %4153
    %4155 = vrot.lane.b32.xlu0 %v3269, 40
    %v4156 = vpop.permute.xlu0 %4155
    %4157 = vrot.lane.b32.xlu0 %v3268, 40
    %v4158 = vpop.permute.xlu0 %4157
    %4159 = vrot.lane.b32.xlu0 %v3270, 40
    %v4160 = vpop.permute.xlu0 %4159
    %4161 = vrot.lane.b32.xlu0 %v3278, 40
    %v4162 = vpop.permute.xlu0 %4161
    %4163 = vrot.lane.b32.xlu0 %v3286, 40
    %v4164 = vpop.permute.xlu0 %4163
    %4165 = vrot.lane.b32.xlu0 %v3285, 40
    %v4166 = vpop.permute.xlu0 %4165
    %4167 = vrot.lane.b32.xlu0 %v3287, 40
    %v4168 = vpop.permute.xlu0 %4167
    %4169 = vrot.lane.b32.xlu0 %v3303, 40
    %v4170 = vpop.permute.xlu0 %4169
    %4171 = vrot.lane.b32.xlu0 %v3302, 40
    %v4172 = vpop.permute.xlu0 %4171
    %4173 = vrot.lane.b32.xlu0 %v3304, 40
    %v4174 = vpop.permute.xlu0 %4173
    %4175 = vrot.lane.b32.xlu0 %v3312, 40
    %v4176 = vpop.permute.xlu0 %4175
    %4177 = vrot.lane.b32.xlu0 %v3320, 40
    %v4178 = vpop.permute.xlu0 %4177
    %4179 = vrot.lane.b32.xlu0 %v3319, 40
    %v4180 = vpop.permute.xlu0 %4179
    %4181 = vrot.lane.b32.xlu0 %v3321, 40
    %v4182 = vpop.permute.xlu0 %4181
    %4183 = vrot.lane.b32.xlu0 %v3337, 40
    %v4184 = vpop.permute.xlu0 %4183
    %4185 = vrot.lane.b32.xlu0 %v3336, 40
    %v4186 = vpop.permute.xlu0 %4185
    %4187 = vrot.lane.b32.xlu0 %v3338, 40
    %v4188 = vpop.permute.xlu0 %4187
    %4189 = vrot.lane.b32.xlu0 %v3346, 40
    %v4190 = vpop.permute.xlu0 %4189
    %4191 = vrot.lane.b32.xlu0 %v3354, 40
    %v4192 = vpop.permute.xlu0 %4191
    %4193 = vrot.lane.b32.xlu0 %v3353, 40
    %v4194 = vpop.permute.xlu0 %4193
    %4195 = vrot.lane.b32.xlu0 %v3355, 40
    %v4196 = vpop.permute.xlu0 %4195
    %4254 = vrot.lane.b32.xlu0 0.0, 48
    %v4255 = vpop.permute.xlu0 %4254
    %4256 = vrot.lane.b32.xlu0 %v3125, 48
    %v4257 = vpop.permute.xlu0 %4256
    %4258 = vrot.lane.b32.xlu0 %v3133, 48
    %v4259 = vpop.permute.xlu0 %4258
    %4260 = vrot.lane.b32.xlu0 %v3132, 48
    %v4261 = vpop.permute.xlu0 %4260
    %4262 = vrot.lane.b32.xlu0 %v3134, 48
    %v4263 = vpop.permute.xlu0 %4262
    %4264 = vrot.lane.b32.xlu0 %v3142, 48
    %v4265 = vpop.permute.xlu0 %4264
    %4266 = vrot.lane.b32.xlu0 %v3150, 48
    %v4267 = vpop.permute.xlu0 %4266
    %4268 = vrot.lane.b32.xlu0 %v3149, 48
    %v4269 = vpop.permute.xlu0 %4268
    %4270 = vrot.lane.b32.xlu0 %v3159, 48
    %v4271 = vpop.permute.xlu0 %4270
    %4272 = vrot.lane.b32.xlu0 %v3167, 48
    %v4273 = vpop.permute.xlu0 %4272
    %4274 = vrot.lane.b32.xlu0 %v3166, 48
    %v4275 = vpop.permute.xlu0 %4274
    %4276 = vrot.lane.b32.xlu0 %v3168, 48
    %v4277 = vpop.permute.xlu0 %4276
    %4278 = vrot.lane.b32.xlu0 %v3176, 48
    %v4279 = vpop.permute.xlu0 %4278
    %4280 = vrot.lane.b32.xlu0 %v3184, 48
    %v4281 = vpop.permute.xlu0 %4280
    %4282 = vrot.lane.b32.xlu0 %v3183, 48
    %v4283 = vpop.permute.xlu0 %4282
    %4284 = vrot.lane.b32.xlu0 %v3193, 48
    %v4285 = vpop.permute.xlu0 %4284
    %4286 = vrot.lane.b32.xlu0 %v3201, 48
    %v4287 = vpop.permute.xlu0 %4286
    %4288 = vrot.lane.b32.xlu0 %v3200, 48
    %v4289 = vpop.permute.xlu0 %4288
    %4290 = vrot.lane.b32.xlu0 %v3202, 48
    %v4291 = vpop.permute.xlu0 %4290
    %4292 = vrot.lane.b32.xlu0 %v3210, 48
    %v4293 = vpop.permute.xlu0 %4292
    %4294 = vrot.lane.b32.xlu0 %v3218, 48
    %v4295 = vpop.permute.xlu0 %4294
    %4296 = vrot.lane.b32.xlu0 %v3217, 48
    %v4297 = vpop.permute.xlu0 %4296
    %4298 = vrot.lane.b32.xlu0 %v3227, 48
    %v4299 = vpop.permute.xlu0 %4298
    %4300 = vrot.lane.b32.xlu0 %v3235, 48
    %v4301 = vpop.permute.xlu0 %4300
    %4302 = vrot.lane.b32.xlu0 %v3234, 48
    %v4303 = vpop.permute.xlu0 %4302
    %4304 = vrot.lane.b32.xlu0 %v3236, 48
    %v4305 = vpop.permute.xlu0 %4304
    %4306 = vrot.lane.b32.xlu0 %v3244, 48
    %v4307 = vpop.permute.xlu0 %4306
    %4308 = vrot.lane.b32.xlu0 %v3252, 48
    %v4309 = vpop.permute.xlu0 %4308
    %4310 = vrot.lane.b32.xlu0 %v3251, 48
    %v4311 = vpop.permute.xlu0 %4310
    %4312 = vrot.lane.b32.xlu0 %v3261, 48
    %v4313 = vpop.permute.xlu0 %4312
    %4314 = vrot.lane.b32.xlu0 %v3269, 48
    %v4315 = vpop.permute.xlu0 %4314
    %4316 = vrot.lane.b32.xlu0 %v3268, 48
    %v4317 = vpop.permute.xlu0 %4316
    %4318 = vrot.lane.b32.xlu0 %v3270, 48
    %v4319 = vpop.permute.xlu0 %4318
    %4320 = vrot.lane.b32.xlu0 %v3278, 48
    %v4321 = vpop.permute.xlu0 %4320
    %4322 = vrot.lane.b32.xlu0 %v3286, 48
    %v4323 = vpop.permute.xlu0 %4322
    %4324 = vrot.lane.b32.xlu0 %v3285, 48
    %v4325 = vpop.permute.xlu0 %4324
    %4326 = vrot.lane.b32.xlu0 %v3295, 48
    %v4327 = vpop.permute.xlu0 %4326
    %4328 = vrot.lane.b32.xlu0 %v3303, 48
    %v4329 = vpop.permute.xlu0 %4328
    %4330 = vrot.lane.b32.xlu0 %v3302, 48
    %v4331 = vpop.permute.xlu0 %4330
    %4332 = vrot.lane.b32.xlu0 %v3304, 48
    %v4333 = vpop.permute.xlu0 %4332
    %4334 = vrot.lane.b32.xlu0 %v3312, 48
    %v4335 = vpop.permute.xlu0 %4334
    %4336 = vrot.lane.b32.xlu0 %v3320, 48
    %v4337 = vpop.permute.xlu0 %4336
    %4338 = vrot.lane.b32.xlu0 %v3319, 48
    %v4339 = vpop.permute.xlu0 %4338
    %4340 = vrot.lane.b32.xlu0 %v3329, 48
    %v4341 = vpop.permute.xlu0 %4340
    %4342 = vrot.lane.b32.xlu0 %v3337, 48
    %v4343 = vpop.permute.xlu0 %4342
    %4344 = vrot.lane.b32.xlu0 %v3336, 48
    %v4345 = vpop.permute.xlu0 %4344
    %4346 = vrot.lane.b32.xlu0 %v3338, 48
    %v4347 = vpop.permute.xlu0 %4346
    %4348 = vrot.lane.b32.xlu0 %v3346, 48
    %v4349 = vpop.permute.xlu0 %4348
    %4350 = vrot.lane.b32.xlu0 %v3354, 48
    %v4351 = vpop.permute.xlu0 %4350
    %4352 = vrot.lane.b32.xlu0 %v3353, 48
    %v4353 = vpop.permute.xlu0 %4352
    %4404 = vrot.lane.b32.xlu0 %v3125, 56
    %v4405 = vpop.permute.xlu0 %4404
    %4406 = vrot.lane.b32.xlu0 %v3133, 56
    %v4407 = vpop.permute.xlu0 %4406
    %4408 = vrot.lane.b32.xlu0 %v3132, 56
    %v4409 = vpop.permute.xlu0 %4408
    %4410 = vrot.lane.b32.xlu0 %v3134, 56
    %v4411 = vpop.permute.xlu0 %4410
    %4412 = vrot.lane.b32.xlu0 %v3142, 56
    %v4413 = vpop.permute.xlu0 %4412
    %4414 = vrot.lane.b32.xlu0 %v3150, 56
    %v4415 = vpop.permute.xlu0 %4414
    %4416 = vrot.lane.b32.xlu0 %v3149, 56
    %v4417 = vpop.permute.xlu0 %4416
    %4418 = vrot.lane.b32.xlu0 %v3151, 56
    %v4419 = vpop.permute.xlu0 %4418
    %4420 = vrot.lane.b32.xlu0 %v3159, 56
    %v4421 = vpop.permute.xlu0 %4420
    %4422 = vrot.lane.b32.xlu0 %v3167, 56
    %v4423 = vpop.permute.xlu0 %4422
    %4424 = vrot.lane.b32.xlu0 %v3166, 56
    %v4425 = vpop.permute.xlu0 %4424
    %4426 = vrot.lane.b32.xlu0 %v3168, 56
    %v4427 = vpop.permute.xlu0 %4426
    %4428 = vrot.lane.b32.xlu0 %v3176, 56
    %v4429 = vpop.permute.xlu0 %4428
    %4430 = vrot.lane.b32.xlu0 %v3184, 56
    %v4431 = vpop.permute.xlu0 %4430
    %4432 = vrot.lane.b32.xlu0 %v3183, 56
    %v4433 = vpop.permute.xlu0 %4432
    %4434 = vrot.lane.b32.xlu0 %v3185, 56
    %v4435 = vpop.permute.xlu0 %4434
    %4436 = vrot.lane.b32.xlu0 %v3193, 56
    %v4437 = vpop.permute.xlu0 %4436
    %4438 = vrot.lane.b32.xlu0 %v3201, 56
    %v4439 = vpop.permute.xlu0 %4438
    %4440 = vrot.lane.b32.xlu0 %v3200, 56
    %v4441 = vpop.permute.xlu0 %4440
    %4442 = vrot.lane.b32.xlu0 %v3202, 56
    %v4443 = vpop.permute.xlu0 %4442
    %4444 = vrot.lane.b32.xlu0 %v3210, 56
    %v4445 = vpop.permute.xlu0 %4444
    %4446 = vrot.lane.b32.xlu0 %v3218, 56
    %v4447 = vpop.permute.xlu0 %4446
    %4448 = vrot.lane.b32.xlu0 %v3217, 56
    %v4449 = vpop.permute.xlu0 %4448
    %4450 = vrot.lane.b32.xlu0 %v3219, 56
    %v4451 = vpop.permute.xlu0 %4450
    %4452 = vrot.lane.b32.xlu0 %v3227, 56
    %v4453 = vpop.permute.xlu0 %4452
    %4454 = vrot.lane.b32.xlu0 %v3235, 56
    %v4455 = vpop.permute.xlu0 %4454
    %4456 = vrot.lane.b32.xlu0 %v3234, 56
    %v4457 = vpop.permute.xlu0 %4456
    %4458 = vrot.lane.b32.xlu0 %v3236, 56
    %v4459 = vpop.permute.xlu0 %4458
    %4460 = vrot.lane.b32.xlu0 %v3244, 56
    %v4461 = vpop.permute.xlu0 %4460
    %4462 = vrot.lane.b32.xlu0 %v3252, 56
    %v4463 = vpop.permute.xlu0 %4462
    %4464 = vrot.lane.b32.xlu0 %v3251, 56
    %v4465 = vpop.permute.xlu0 %4464
    %4466 = vrot.lane.b32.xlu0 %v3253, 56
    %v4467 = vpop.permute.xlu0 %4466
    %4468 = vrot.lane.b32.xlu0 %v3261, 56
    %v4469 = vpop.permute.xlu0 %4468
    %4470 = vrot.lane.b32.xlu0 %v3269, 56
    %v4471 = vpop.permute.xlu0 %4470
    %4472 = vrot.lane.b32.xlu0 %v3268, 56
    %v4473 = vpop.permute.xlu0 %4472
    %4474 = vrot.lane.b32.xlu0 %v3270, 56
    %v4475 = vpop.permute.xlu0 %4474
    %4476 = vrot.lane.b32.xlu0 %v3278, 56
    %v4477 = vpop.permute.xlu0 %4476
    %4478 = vrot.lane.b32.xlu0 %v3286, 56
    %v4479 = vpop.permute.xlu0 %4478
    %4480 = vrot.lane.b32.xlu0 %v3285, 56
    %v4481 = vpop.permute.xlu0 %4480
    %4482 = vrot.lane.b32.xlu0 %v3287, 56
    %v4483 = vpop.permute.xlu0 %4482
    %4484 = vrot.lane.b32.xlu0 %v3295, 56
    %v4485 = vpop.permute.xlu0 %4484
    %4486 = vrot.lane.b32.xlu0 %v3303, 56
    %v4487 = vpop.permute.xlu0 %4486
    %4488 = vrot.lane.b32.xlu0 %v3302, 56
    %v4489 = vpop.permute.xlu0 %4488
    %4490 = vrot.lane.b32.xlu0 %v3304, 56
    %v4491 = vpop.permute.xlu0 %4490
    %4492 = vrot.lane.b32.xlu0 %v3312, 56
    %v4493 = vpop.permute.xlu0 %4492
    %4494 = vrot.lane.b32.xlu0 %v3320, 56
    %v4495 = vpop.permute.xlu0 %4494
    %4496 = vrot.lane.b32.xlu0 %v3319, 56
    %v4497 = vpop.permute.xlu0 %4496
    %4498 = vrot.lane.b32.xlu0 %v3321, 56
    %v4499 = vpop.permute.xlu0 %4498
    %4500 = vrot.lane.b32.xlu0 %v3329, 56
    %v4501 = vpop.permute.xlu0 %4500
    %4502 = vrot.lane.b32.xlu0 %v3337, 56
    %v4503 = vpop.permute.xlu0 %4502
    %4504 = vrot.lane.b32.xlu0 %v3336, 56
    %v4505 = vpop.permute.xlu0 %4504
    %4506 = vrot.lane.b32.xlu0 %v3338, 56
    %v4507 = vpop.permute.xlu0 %4506
    %4508 = vrot.lane.b32.xlu0 %v3346, 56
    %v4509 = vpop.permute.xlu0 %4508
    %4510 = vrot.lane.b32.xlu0 %v3354, 56
    %v4511 = vpop.permute.xlu0 %4510
    %4512 = vrot.lane.b32.xlu0 %v3353, 56
    %v4513 = vpop.permute.xlu0 %4512
    %4514 = vrot.lane.b32.xlu0 %v3355, 56
    %v4515 = vpop.permute.xlu0 %4514
    %4516 = vrot.lane.b32.xlu0 0.0, 56
    %v4517 = vpop.permute.xlu0 %4516
    %4575 = vrot.lane.b32.xlu0 %v3133, 64
    %v4576 = vpop.permute.xlu0 %4575
    %4577 = vrot.lane.b32.xlu0 %v3132, 64
    %v4578 = vpop.permute.xlu0 %4577
    %4579 = vrot.lane.b32.xlu0 %v3134, 64
    %v4580 = vpop.permute.xlu0 %4579
    %4581 = vrot.lane.b32.xlu0 %v3142, 64
    %v4582 = vpop.permute.xlu0 %4581
    %4583 = vrot.lane.b32.xlu0 %v3150, 64
    %v4584 = vpop.permute.xlu0 %4583
    %4585 = vrot.lane.b32.xlu0 %v3149, 64
    %v4586 = vpop.permute.xlu0 %4585
    %4587 = vrot.lane.b32.xlu0 %v3151, 64
    %v4588 = vpop.permute.xlu0 %4587
    %4589 = vrot.lane.b32.xlu0 0.0, 64
    %v4590 = vpop.permute.xlu0 %4589
    %4591 = vrot.lane.b32.xlu0 %v3167, 64
    %v4592 = vpop.permute.xlu0 %4591
    %4593 = vrot.lane.b32.xlu0 %v3166, 64
    %v4594 = vpop.permute.xlu0 %4593
    %4595 = vrot.lane.b32.xlu0 %v3168, 64
    %v4596 = vpop.permute.xlu0 %4595
    %4597 = vrot.lane.b32.xlu0 %v3176, 64
    %v4598 = vpop.permute.xlu0 %4597
    %4599 = vrot.lane.b32.xlu0 %v3184, 64
    %v4600 = vpop.permute.xlu0 %4599
    %4601 = vrot.lane.b32.xlu0 %v3183, 64
    %v4602 = vpop.permute.xlu0 %4601
    %4603 = vrot.lane.b32.xlu0 %v3185, 64
    %v4604 = vpop.permute.xlu0 %4603
    %4605 = vrot.lane.b32.xlu0 %v3201, 64
    %v4606 = vpop.permute.xlu0 %4605
    %4607 = vrot.lane.b32.xlu0 %v3200, 64
    %v4608 = vpop.permute.xlu0 %4607
    %4609 = vrot.lane.b32.xlu0 %v3202, 64
    %v4610 = vpop.permute.xlu0 %4609
    %4611 = vrot.lane.b32.xlu0 %v3210, 64
    %v4612 = vpop.permute.xlu0 %4611
    %4613 = vrot.lane.b32.xlu0 %v3218, 64
    %v4614 = vpop.permute.xlu0 %4613
    %4615 = vrot.lane.b32.xlu0 %v3217, 64
    %v4616 = vpop.permute.xlu0 %4615
    %4617 = vrot.lane.b32.xlu0 %v3219, 64
    %v4618 = vpop.permute.xlu0 %4617
    %4619 = vrot.lane.b32.xlu0 %v3235, 64
    %v4620 = vpop.permute.xlu0 %4619
    %4621 = vrot.lane.b32.xlu0 %v3234, 64
    %v4622 = vpop.permute.xlu0 %4621
    %4623 = vrot.lane.b32.xlu0 %v3236, 64
    %v4624 = vpop.permute.xlu0 %4623
    %4625 = vrot.lane.b32.xlu0 %v3244, 64
    %v4626 = vpop.permute.xlu0 %4625
    %4627 = vrot.lane.b32.xlu0 %v3252, 64
    %v4628 = vpop.permute.xlu0 %4627
    %4629 = vrot.lane.b32.xlu0 %v3251, 64
    %v4630 = vpop.permute.xlu0 %4629
    %4631 = vrot.lane.b32.xlu0 %v3253, 64
    %v4632 = vpop.permute.xlu0 %4631
    %4633 = vrot.lane.b32.xlu0 %v3269, 64
    %v4634 = vpop.permute.xlu0 %4633
    %4635 = vrot.lane.b32.xlu0 %v3268, 64
    %v4636 = vpop.permute.xlu0 %4635
    %4637 = vrot.lane.b32.xlu0 %v3270, 64
    %v4638 = vpop.permute.xlu0 %4637
    %4639 = vrot.lane.b32.xlu0 %v3278, 64
    %v4640 = vpop.permute.xlu0 %4639
    %4641 = vrot.lane.b32.xlu0 %v3286, 64
    %v4642 = vpop.permute.xlu0 %4641
    %4643 = vrot.lane.b32.xlu0 %v3285, 64
    %v4644 = vpop.permute.xlu0 %4643
    %4645 = vrot.lane.b32.xlu0 %v3287, 64
    %v4646 = vpop.permute.xlu0 %4645
    %4647 = vrot.lane.b32.xlu0 %v3303, 64
    %v4648 = vpop.permute.xlu0 %4647
    %4649 = vrot.lane.b32.xlu0 %v3302, 64
    %v4650 = vpop.permute.xlu0 %4649
    %4651 = vrot.lane.b32.xlu0 %v3304, 64
    %v4652 = vpop.permute.xlu0 %4651
    %4653 = vrot.lane.b32.xlu0 %v3312, 64
    %v4654 = vpop.permute.xlu0 %4653
    %4655 = vrot.lane.b32.xlu0 %v3320, 64
    %v4656 = vpop.permute.xlu0 %4655
    %4657 = vrot.lane.b32.xlu0 %v3319, 64
    %v4658 = vpop.permute.xlu0 %4657
    %4659 = vrot.lane.b32.xlu0 %v3321, 64
    %v4660 = vpop.permute.xlu0 %4659
    %4661 = vrot.lane.b32.xlu0 %v3337, 64
    %v4662 = vpop.permute.xlu0 %4661
    %4663 = vrot.lane.b32.xlu0 %v3336, 64
    %v4664 = vpop.permute.xlu0 %4663
    %4665 = vrot.lane.b32.xlu0 %v3338, 64
    %v4666 = vpop.permute.xlu0 %4665
    %4667 = vrot.lane.b32.xlu0 %v3346, 64
    %v4668 = vpop.permute.xlu0 %4667
    %4669 = vrot.lane.b32.xlu0 %v3354, 64
    %v4670 = vpop.permute.xlu0 %4669
    %4671 = vrot.lane.b32.xlu0 %v3353, 64
    %v4672 = vpop.permute.xlu0 %4671
    %4673 = vrot.lane.b32.xlu0 %v3355, 64
    %v4674 = vpop.permute.xlu0 %4673
    %v4725 = vsel %vm1924, 0.0, %v704
    %v4726 = vsel %vm1924, 0.0, %v3406
    %v4727 = vsel %vm1924, %v3091, %v3408
    %v4728 = vsel %vm1924, %v3099, %v3410
    %v4729 = vsel %vm1924, %v3098, %v3412
    %v4730 = vsel %vm1924, %v3100, %v3414
    %v4731 = vsel %vm1924, %v3108, %v3416
    %v4732 = vsel %vm1924, %v3116, %v3418
    %v4733 = vsel %vm1924, %v3115, %v3420
    %v4734 = vsel %vm1924, 0.0, %v3422
    %v4735 = vsel %vm1924, %v3125, %v3424
    %v4736 = vsel %vm1924, %v3133, %v3426
    %v4737 = vsel %vm1924, %v3132, %v3428
    %v4738 = vsel %vm1924, %v3134, %v3430
    %v4739 = vsel %vm1924, %v3142, %v3432
    %v4740 = vsel %vm1924, %v3150, %v3434
    %v4741 = vsel %vm1924, %v3149, %v3436
    %v4742 = vsel %vm1924, 0.0, %v3438
    %v4743 = vsel %vm1924, %v3159, %v3440
    %v4744 = vsel %vm1924, %v3167, %v3442
    %v4745 = vsel %vm1924, %v3166, %v3444
    %v4746 = vsel %vm1924, %v3168, %v3446
    %v4747 = vsel %vm1924, %v3176, %v3448
    %v4748 = vsel %vm1924, %v3184, %v3450
    %v4749 = vsel %vm1924, %v3183, %v3452
    %v4750 = vsel %vm1924, 0.0, %v3454
    %v4751 = vsel %vm1924, %v3193, %v3456
    %v4752 = vsel %vm1924, %v3201, %v3458
    %v4753 = vsel %vm1924, %v3200, %v3460
    %v4754 = vsel %vm1924, %v3202, %v3462
    %v4755 = vsel %vm1924, %v3210, %v3464
    %v4756 = vsel %vm1924, %v3218, %v3466
    %v4757 = vsel %vm1924, %v3217, %v3468
    %v4758 = vsel %vm1924, 0.0, %v3470
    %v4759 = vsel %vm1924, %v3227, %v3472
    %v4760 = vsel %vm1924, %v3235, %v3474
    %v4761 = vsel %vm1924, %v3234, %v3476
    %v4762 = vsel %vm1924, %v3236, %v3478
    %v4763 = vsel %vm1924, %v3244, %v3480
    %v4764 = vsel %vm1924, %v3252, %v3482
    %v4765 = vsel %vm1924, %v3251, %v3484
    %v4766 = vsel %vm1924, 0.0, %v3486
    %v4767 = vsel %vm1924, %v3261, %v3488
    %v4768 = vsel %vm1924, %v3269, %v3490
    %v4769 = vsel %vm1924, %v3268, %v3492
    %v4770 = vsel %vm1924, %v3270, %v3494
    %v4771 = vsel %vm1924, %v3278, %v3496
    %v4772 = vsel %vm1924, %v3286, %v3498
    %v4773 = vsel %vm1924, %v3285, %v3500
    %v4774 = vsel %vm1924, 0.0, %v3502
    %v4775 = vsel %vm1924, %v3295, %v3504
    %v4776 = vsel %vm1924, %v3303, %v3506
    %v4777 = vsel %vm1924, %v3302, %v3508
    %v4778 = vsel %vm1924, %v3304, %v3510
    %v4779 = vsel %vm1924, %v3312, %v3512
    %v4780 = vsel %vm1924, %v3320, %v3514
    %v4781 = vsel %vm1924, %v3319, %v3516
    %v4782 = vsel %vm2047, %v4725, %v3574
    %v4783 = vsel %vm2047, %v4726, %v3576
    %v4784 = vsel %vm2047, %v4727, %v3578
    %v4785 = vsel %vm2047, %v4728, %v3580
    %v4786 = vsel %vm2047, %v4729, %v3582
    %v4787 = vsel %vm2047, %v4730, %v3584
    %v4788 = vsel %vm2047, %v4731, %v3586
    %v4789 = vsel %vm2047, %v4732, %v3588
    %v4790 = vsel %vm2047, %v4733, %v3574
    %v4791 = vsel %vm2047, %v4734, %v3590
    %v4792 = vsel %vm2047, %v4735, %v3592
    %v4793 = vsel %vm2047, %v4736, %v3594
    %v4794 = vsel %vm2047, %v4737, %v3596
    %v4795 = vsel %vm2047, %v4738, %v3598
    %v4796 = vsel %vm2047, %v4739, %v3600
    %v4797 = vsel %vm2047, %v4740, %v3602
    %v4798 = vsel %vm2047, %v4741, %v3574
    %v4799 = vsel %vm2047, %v4742, %v3604
    %v4800 = vsel %vm2047, %v4743, %v3606
    %v4801 = vsel %vm2047, %v4744, %v3608
    %v4802 = vsel %vm2047, %v4745, %v3610
    %v4803 = vsel %vm2047, %v4746, %v3612
    %v4804 = vsel %vm2047, %v4747, %v3614
    %v4805 = vsel %vm2047, %v4748, %v3616
    %v4806 = vsel %vm2047, %v4749, %v3574
    %v4807 = vsel %vm2047, %v4750, %v3618
    %v4808 = vsel %vm2047, %v4751, %v3620
    %v4809 = vsel %vm2047, %v4752, %v3622
    %v4810 = vsel %vm2047, %v4753, %v3624
    %v4811 = vsel %vm2047, %v4754, %v3626
    %v4812 = vsel %vm2047, %v4755, %v3628
    %v4813 = vsel %vm2047, %v4756, %v3630
    %v4814 = vsel %vm2047, %v4757, %v3574
    %v4815 = vsel %vm2047, %v4758, %v3632
    %v4816 = vsel %vm2047, %v4759, %v3634
    %v4817 = vsel %vm2047, %v4760, %v3636
    %v4818 = vsel %vm2047, %v4761, %v3638
    %v4819 = vsel %vm2047, %v4762, %v3640
    %v4820 = vsel %vm2047, %v4763, %v3642
    %v4821 = vsel %vm2047, %v4764, %v3644
    %v4822 = vsel %vm2047, %v4765, %v3574
    %v4823 = vsel %vm2047, %v4766, %v3646
    %v4824 = vsel %vm2047, %v4767, %v3648
    %v4825 = vsel %vm2047, %v4768, %v3650
    %v4826 = vsel %vm2047, %v4769, %v3652
    %v4827 = vsel %vm2047, %v4770, %v3654
    %v4828 = vsel %vm2047, %v4771, %v3656
    %v4829 = vsel %vm2047, %v4772, %v3658
    %v4830 = vsel %vm2047, %v4773, %v3574
    %v4831 = vsel %vm2047, %v4774, %v3660
    %v4832 = vsel %vm2047, %v4775, %v3662
    %v4833 = vsel %vm2047, %v4776, %v3664
    %v4834 = vsel %vm2047, %v4777, %v3666
    %v4835 = vsel %vm2047, %v4778, %v3668
    %v4836 = vsel %vm2047, %v4779, %v3670
    %v4837 = vsel %vm2047, %v4780, %v3672
    %v4838 = vsel %vm2047, %v4781, %v3574
    %v4839 = vsel %vm2177, %v4782, %v1396
    %v4840 = vsel %vm2177, %v4782, %v3724
    %v4841 = vsel %vm2177, %v4782, %v3726
    %v4842 = vsel %vm2177, %v4782, %v3728
    %v4843 = vsel %vm2177, %v4782, %v3730
    %v4844 = vsel %vm2177, %v4782, %v3732
    %v4845 = vsel %vm2177, %v4782, %v3734
    %v4846 = vsel %vm2177, %v4782, %v3736
    %v4847 = vsel %vm2177, %v4783, %v1396
    %v4848 = vsel %vm2177, %v4784, %v3738
    %v4849 = vsel %vm2177, %v4785, %v3740
    %v4850 = vsel %vm2177, %v4786, %v3742
    %v4851 = vsel %vm2177, %v4787, %v3744
    %v4852 = vsel %vm2177, %v4788, %v3746
    %v4853 = vsel %vm2177, %v4789, %v3748
    %v4854 = vsel %vm2177, %v4790, %v3750
    %v4855 = vsel %vm2177, %v4791, %v1396
    %v4856 = vsel %vm2177, %v4792, %v3752
    %v4857 = vsel %vm2177, %v4793, %v3754
    %v4858 = vsel %vm2177, %v4794, %v3756
    %v4859 = vsel %vm2177, %v4795, %v3758
    %v4860 = vsel %vm2177, %v4796, %v3760
    %v4861 = vsel %vm2177, %v4797, %v3762
    %v4862 = vsel %vm2177, %v4798, %v3764
    %v4863 = vsel %vm2177, %v4799, %v1396
    %v4864 = vsel %vm2177, %v4800, %v3766
    %v4865 = vsel %vm2177, %v4801, %v3768
    %v4866 = vsel %vm2177, %v4802, %v3770
    %v4867 = vsel %vm2177, %v4803, %v3772
    %v4868 = vsel %vm2177, %v4804, %v3774
    %v4869 = vsel %vm2177, %v4805, %v3776
    %v4870 = vsel %vm2177, %v4806, %v3778
    %v4871 = vsel %vm2177, %v4807, %v1396
    %v4872 = vsel %vm2177, %v4808, %v3780
    %v4873 = vsel %vm2177, %v4809, %v3782
    %v4874 = vsel %vm2177, %v4810, %v3784
    %v4875 = vsel %vm2177, %v4811, %v3786
    %v4876 = vsel %vm2177, %v4812, %v3788
    %v4877 = vsel %vm2177, %v4813, %v3790
    %v4878 = vsel %vm2177, %v4814, %v3792
    %v4879 = vsel %vm2177, %v4815, %v1396
    %v4880 = vsel %vm2177, %v4816, %v3794
    %v4881 = vsel %vm2177, %v4817, %v3796
    %v4882 = vsel %vm2177, %v4818, %v3798
    %v4883 = vsel %vm2177, %v4819, %v3800
    %v4884 = vsel %vm2177, %v4820, %v3802
    %v4885 = vsel %vm2177, %v4821, %v3804
    %v4886 = vsel %vm2177, %v4822, %v3806
    %v4887 = vsel %vm2177, %v4823, %v1396
    %v4888 = vsel %vm2177, %v4824, %v3808
    %v4889 = vsel %vm2177, %v4825, %v3810
    %v4890 = vsel %vm2177, %v4826, %v3812
    %v4891 = vsel %vm2177, %v4827, %v3814
    %v4892 = vsel %vm2177, %v4828, %v3816
    %v4893 = vsel %vm2177, %v4829, %v3818
    %v4894 = vsel %vm2177, %v4830, %v3820
    %v4895 = vsel %vm2177, %v4831, %v1396
    %v4896 = vsel %vm2177, %v4832, %v3822
    %v4897 = vsel %vm2177, %v4833, %v3824
    %v4898 = vsel %vm2177, %v4834, %v3826
    %v4899 = vsel %vm2177, %v4835, %v3828
    %v4900 = vsel %vm2177, %v4836, %v3830
    %v4901 = vsel %vm2177, %v4837, %v3832
    %v4902 = vsel %vm2177, %v4838, %v3834
    %v4903 = vsel %vm2307, %v4839, %v3892
    %v4904 = vsel %vm2307, %v4840, %v3894
    %v4905 = vsel %vm2307, %v4841, %v3896
    %v4906 = vsel %vm2307, %v4842, %v3898
    %v4907 = vsel %vm2307, %v4843, %v3900
    %v4908 = vsel %vm2307, %v4844, %v3902
    %v4909 = vsel %vm2307, %v4845, %v3904
    %v4910 = vsel %vm2307, %v4846, %v3906
    %v4911 = vsel %vm2307, %v4847, %v3908
    %v4912 = vsel %vm2307, %v4848, %v3910
    %v4913 = vsel %vm2307, %v4849, %v3912
    %v4914 = vsel %vm2307, %v4850, %v3914
    %v4915 = vsel %vm2307, %v4851, %v3916
    %v4916 = vsel %vm2307, %v4852, %v3918
    %v4917 = vsel %vm2307, %v4853, %v3920
    %v4918 = vsel %vm2307, %v4854, %v3922
    %v4919 = vsel %vm2307, %v4855, %v3924
    %v4920 = vsel %vm2307, %v4856, %v3926
    %v4921 = vsel %vm2307, %v4857, %v3928
    %v4922 = vsel %vm2307, %v4858, %v3930
    %v4923 = vsel %vm2307, %v4859, %v3932
    %v4924 = vsel %vm2307, %v4860, %v3934
    %v4925 = vsel %vm2307, %v4861, %v3936
    %v4926 = vsel %vm2307, %v4862, %v3938
    %v4927 = vsel %vm2307, %v4863, %v3940
    %v4928 = vsel %vm2307, %v4864, %v3942
    %v4929 = vsel %vm2307, %v4865, %v3944
    %v4930 = vsel %vm2307, %v4866, %v3946
    %v4931 = vsel %vm2307, %v4867, %v3948
    %v4932 = vsel %vm2307, %v4868, %v3950
    %v4933 = vsel %vm2307, %v4869, %v3952
    %v4934 = vsel %vm2307, %v4870, %v3954
    %v4935 = vsel %vm2307, %v4871, %v3956
    %v4936 = vsel %vm2307, %v4872, %v3958
    %v4937 = vsel %vm2307, %v4873, %v3960
    %v4938 = vsel %vm2307, %v4874, %v3962
    %v4939 = vsel %vm2307, %v4875, %v3964
    %v4940 = vsel %vm2307, %v4876, %v3966
    %v4941 = vsel %vm2307, %v4877, %v3968
    %v4942 = vsel %vm2307, %v4878, %v3970
    %v4943 = vsel %vm2307, %v4879, %v3972
    %v4944 = vsel %vm2307, %v4880, %v3974
    %v4945 = vsel %vm2307, %v4881, %v3976
    %v4946 = vsel %vm2307, %v4882, %v3978
    %v4947 = vsel %vm2307, %v4883, %v3980
    %v4948 = vsel %vm2307, %v4884, %v3982
    %v4949 = vsel %vm2307, %v4885, %v3984
    %v4950 = vsel %vm2307, %v4886, %v3986
    %v4951 = vsel %vm2307, %v4887, %v3988
    %v4952 = vsel %vm2307, %v4888, %v3990
    %v4953 = vsel %vm2307, %v4889, %v3992
    %v4954 = vsel %vm2307, %v4890, %v3994
    %v4955 = vsel %vm2307, %v4891, %v3996
    %v4956 = vsel %vm2307, %v4892, %v3998
    %v4957 = vsel %vm2307, %v4893, %v4000
    %v4958 = vsel %vm2307, %v4894, %v4002
    %v4959 = vsel %vm2307, %v4895, %v4004
    %v4960 = vsel %vm2307, %v4896, %v4006
    %v4961 = vsel %vm2307, %v4897, %v4008
    %v4962 = vsel %vm2307, %v4898, %v4010
    %v4963 = vsel %vm2307, %v4899, %v4012
    %v4964 = vsel %vm2307, %v4900, %v4014
    %v4965 = vsel %vm2307, %v4901, %v4016
    %v4966 = vsel %vm2307, %v4902, %v4018
    %vm4967 = vcmask 326656
    %v4968 = vsel %vm4967, %v4903, %v4084
    %v4969 = vsel %vm4967, %v4904, %v4086
    %v4970 = vsel %vm4967, %v4905, %v4088
    %v4971 = vsel %vm4967, %v4906, %v4090
    %v4972 = vsel %vm4967, %v4907, %v4092
    %v4973 = vsel %vm4967, %v4908, %v4094
    %v4974 = vsel %vm4967, %v4909, %v4096
    %v4975 = vsel %vm4967, %v4910, %v4098
    %v4976 = vsel %vm4967, %v4911, %v4100
    %v4977 = vsel %vm4967, %v4912, %v4102
    %v4978 = vsel %vm4967, %v4913, %v4104
    %v4979 = vsel %vm4967, %v4914, %v4106
    %v4980 = vsel %vm4967, %v4915, %v4108
    %v4981 = vsel %vm4967, %v4916, %v4110
    %v4982 = vsel %vm4967, %v4917, %v4112
    %v4983 = vsel %vm4967, %v4918, %v4098
    %v4984 = vsel %vm4967, %v4919, %v4114
    %v4985 = vsel %vm4967, %v4920, %v4116
    %v4986 = vsel %vm4967, %v4921, %v4118
    %v4987 = vsel %vm4967, %v4922, %v4120
    %v4988 = vsel %vm4967, %v4923, %v4122
    %v4989 = vsel %vm4967, %v4924, %v4124
    %v4990 = vsel %vm4967, %v4925, %v4126
    %v4991 = vsel %vm4967, %v4926, %v4098
    %v4992 = vsel %vm4967, %v4927, %v4128
    %v4993 = vsel %vm4967, %v4928, %v4130
    %v4994 = vsel %vm4967, %v4929, %v4132
    %v4995 = vsel %vm4967, %v4930, %v4134
    %v4996 = vsel %vm4967, %v4931, %v4136
    %v4997 = vsel %vm4967, %v4932, %v4138
    %v4998 = vsel %vm4967, %v4933, %v4140
    %v4999 = vsel %vm4967, %v4934, %v4098
    %v5000 = vsel %vm4967, %v4935, %v4142
    %v5001 = vsel %vm4967, %v4936, %v4144
    %v5002 = vsel %vm4967, %v4937, %v4146
    %v5003 = vsel %vm4967, %v4938, %v4148
    %v5004 = vsel %vm4967, %v4939, %v4150
    %v5005 = vsel %vm4967, %v4940, %v4152
    %v5006 = vsel %vm4967, %v4941, %v4154
    %v5007 = vsel %vm4967, %v4942, %v4098
    %v5008 = vsel %vm4967, %v4943, %v4156
    %v5009 = vsel %vm4967, %v4944, %v4158
    %v5010 = vsel %vm4967, %v4945, %v4160
    %v5011 = vsel %vm4967, %v4946, %v4162
    %v5012 = vsel %vm4967, %v4947, %v4164
    %v5013 = vsel %vm4967, %v4948, %v4166
    %v5014 = vsel %vm4967, %v4949, %v4168
    %v5015 = vsel %vm4967, %v4950, %v4098
    %v5016 = vsel %vm4967, %v4951, %v4170
    %v5017 = vsel %vm4967, %v4952, %v4172
    %v5018 = vsel %vm4967, %v4953, %v4174
    %v5019 = vsel %vm4967, %v4954, %v4176
    %v5020 = vsel %vm4967, %v4955, %v4178
    %v5021 = vsel %vm4967, %v4956, %v4180
    %v5022 = vsel %vm4967, %v4957, %v4182
    %v5023 = vsel %vm4967, %v4958, %v4098
    %v5024 = vsel %vm4967, %v4959, %v4184
    %v5025 = vsel %vm4967, %v4960, %v4186
    %v5026 = vsel %vm4967, %v4961, %v4188
    %v5027 = vsel %vm4967, %v4962, %v4190
    %v5028 = vsel %vm4967, %v4963, %v4192
    %v5029 = vsel %vm4967, %v4964, %v4194
    %v5030 = vsel %vm4967, %v4965, %v4196
    %v5031 = vsel %vm4967, %v4966, %v4098
    %vm5032 = vcmask 392192
    %v5033 = vsel %vm5032, %v4968, %v4255
    %v5034 = vsel %vm5032, %v4969, %v4257
    %v5035 = vsel %vm5032, %v4970, %v4259
    %v5036 = vsel %vm5032, %v4971, %v4261
    %v5037 = vsel %vm5032, %v4972, %v4263
    %v5038 = vsel %vm5032, %v4973, %v4265
    %v5039 = vsel %vm5032, %v4974, %v4267
    %v5040 = vsel %vm5032, %v4975, %v4269
    %v5041 = vsel %vm5032, %v4976, %v4255
    %v5042 = vsel %vm5032, %v4977, %v4271
    %v5043 = vsel %vm5032, %v4978, %v4273
    %v5044 = vsel %vm5032, %v4979, %v4275
    %v5045 = vsel %vm5032, %v4980, %v4277
    %v5046 = vsel %vm5032, %v4981, %v4279
    %v5047 = vsel %vm5032, %v4982, %v4281
    %v5048 = vsel %vm5032, %v4983, %v4283
    %v5049 = vsel %vm5032, %v4984, %v4255
    %v5050 = vsel %vm5032, %v4985, %v4285
    %v5051 = vsel %vm5032, %v4986, %v4287
    %v5052 = vsel %vm5032, %v4987, %v4289
    %v5053 = vsel %vm5032, %v4988, %v4291
    %v5054 = vsel %vm5032, %v4989, %v4293
    %v5055 = vsel %vm5032, %v4990, %v4295
    %v5056 = vsel %vm5032, %v4991, %v4297
    %v5057 = vsel %vm5032, %v4992, %v4255
    %v5058 = vsel %vm5032, %v4993, %v4299
    %v5059 = vsel %vm5032, %v4994, %v4301
    %v5060 = vsel %vm5032, %v4995, %v4303
    %v5061 = vsel %vm5032, %v4996, %v4305
    %v5062 = vsel %vm5032, %v4997, %v4307
    %v5063 = vsel %vm5032, %v4998, %v4309
    %v5064 = vsel %vm5032, %v4999, %v4311
    %v5065 = vsel %vm5032, %v5000, %v4255
    %v5066 = vsel %vm5032, %v5001, %v4313
    %v5067 = vsel %vm5032, %v5002, %v4315
    %v5068 = vsel %vm5032, %v5003, %v4317
    %v5069 = vsel %vm5032, %v5004, %v4319
    %v5070 = vsel %vm5032, %v5005, %v4321
    %v5071 = vsel %vm5032, %v5006, %v4323
    %v5072 = vsel %vm5032, %v5007, %v4325
    %v5073 = vsel %vm5032, %v5008, %v4255
    %v5074 = vsel %vm5032, %v5009, %v4327
    %v5075 = vsel %vm5032, %v5010, %v4329
    %v5076 = vsel %vm5032, %v5011, %v4331
    %v5077 = vsel %vm5032, %v5012, %v4333
    %v5078 = vsel %vm5032, %v5013, %v4335
    %v5079 = vsel %vm5032, %v5014, %v4337
    %v5080 = vsel %vm5032, %v5015, %v4339
    %v5081 = vsel %vm5032, %v5016, %v4255
    %v5082 = vsel %vm5032, %v5017, %v4341
    %v5083 = vsel %vm5032, %v5018, %v4343
    %v5084 = vsel %vm5032, %v5019, %v4345
    %v5085 = vsel %vm5032, %v5020, %v4347
    %v5086 = vsel %vm5032, %v5021, %v4349
    %v5087 = vsel %vm5032, %v5022, %v4351
    %v5088 = vsel %vm5032, %v5023, %v4353
    %v5089 = vsel %vm5032, %v5024, %v4255
    %v5090 = vsel %vm5032, %v5025, %v4255
    %v5091 = vsel %vm5032, %v5026, %v4255
    %v5092 = vsel %vm5032, %v5027, %v4255
    %v5093 = vsel %vm5032, %v5028, %v4255
    %v5094 = vsel %vm5032, %v5029, %v4255
    %v5095 = vsel %vm5032, %v5030, %v4255
    %v5096 = vsel %vm5032, %v5031, %v4255
    %vm5097 = vcmask 457728
    %v5098 = vsel %vm5097, %v5033, %v4405
    %v5099 = vsel %vm5097, %v5034, %v4407
    %v5100 = vsel %vm5097, %v5035, %v4409
    %v5101 = vsel %vm5097, %v5036, %v4411
    %v5102 = vsel %vm5097, %v5037, %v4413
    %v5103 = vsel %vm5097, %v5038, %v4415
    %v5104 = vsel %vm5097, %v5039, %v4417
    %v5105 = vsel %vm5097, %v5040, %v4419
    %v5106 = vsel %vm5097, %v5041, %v4421
    %v5107 = vsel %vm5097, %v5042, %v4423
    %v5108 = vsel %vm5097, %v5043, %v4425
    %v5109 = vsel %vm5097, %v5044, %v4427
    %v5110 = vsel %vm5097, %v5045, %v4429
    %v5111 = vsel %vm5097, %v5046, %v4431
    %v5112 = vsel %vm5097, %v5047, %v4433
    %v5113 = vsel %vm5097, %v5048, %v4435
    %v5114 = vsel %vm5097, %v5049, %v4437
    %v5115 = vsel %vm5097, %v5050, %v4439
    %v5116 = vsel %vm5097, %v5051, %v4441
    %v5117 = vsel %vm5097, %v5052, %v4443
    %v5118 = vsel %vm5097, %v5053, %v4445
    %v5119 = vsel %vm5097, %v5054, %v4447
    %v5120 = vsel %vm5097, %v5055, %v4449
    %v5121 = vsel %vm5097, %v5056, %v4451
    %v5122 = vsel %vm5097, %v5057, %v4453
    %v5123 = vsel %vm5097, %v5058, %v4455
    %v5124 = vsel %vm5097, %v5059, %v4457
    %v5125 = vsel %vm5097, %v5060, %v4459
    %v5126 = vsel %vm5097, %v5061, %v4461
    %v5127 = vsel %vm5097, %v5062, %v4463
    %v5128 = vsel %vm5097, %v5063, %v4465
    %v5129 = vsel %vm5097, %v5064, %v4467
    %v5130 = vsel %vm5097, %v5065, %v4469
    %v5131 = vsel %vm5097, %v5066, %v4471
    %v5132 = vsel %vm5097, %v5067, %v4473
    %v5133 = vsel %vm5097, %v5068, %v4475
    %v5134 = vsel %vm5097, %v5069, %v4477
    %v5135 = vsel %vm5097, %v5070, %v4479
    %v5136 = vsel %vm5097, %v5071, %v4481
    %v5137 = vsel %vm5097, %v5072, %v4483
    %v5138 = vsel %vm5097, %v5073, %v4485
    %v5139 = vsel %vm5097, %v5074, %v4487
    %v5140 = vsel %vm5097, %v5075, %v4489
    %v5141 = vsel %vm5097, %v5076, %v4491
    %v5142 = vsel %vm5097, %v5077, %v4493
    %v5143 = vsel %vm5097, %v5078, %v4495
    %v5144 = vsel %vm5097, %v5079, %v4497
    %v5145 = vsel %vm5097, %v5080, %v4499
    %v5146 = vsel %vm5097, %v5081, %v4501
    %v5147 = vsel %vm5097, %v5082, %v4503
    %v5148 = vsel %vm5097, %v5083, %v4505
    %v5149 = vsel %vm5097, %v5084, %v4507
    %v5150 = vsel %vm5097, %v5085, %v4509
    %v5151 = vsel %vm5097, %v5086, %v4511
    %v5152 = vsel %vm5097, %v5087, %v4513
    %v5153 = vsel %vm5097, %v5088, %v4515
    %v5154 = vsel %vm5097, %v5089, %v4517
    %v5155 = vsel %vm5097, %v5090, %v4517
    %v5156 = vsel %vm5097, %v5091, %v4517
    %v5157 = vsel %vm5097, %v5092, %v4517
    %v5158 = vsel %vm5097, %v5093, %v4517
    %v5159 = vsel %vm5097, %v5094, %v4517
    %v5160 = vsel %vm5097, %v5095, %v4517
    %v5161 = vsel %vm5097, %v5096, %v4517
    %vm5162 = vcmask 523264
    %v5163 = vsel %vm5162, %v5098, %v4576
    %v5164 = vsel %vm5162, %v5099, %v4578
    %v5165 = vsel %vm5162, %v5100, %v4580
    %v5166 = vsel %vm5162, %v5101, %v4582
    %v5167 = vsel %vm5162, %v5102, %v4584
    %v5168 = vsel %vm5162, %v5103, %v4586
    %v5169 = vsel %vm5162, %v5104, %v4588
    %v5170 = vsel %vm5162, %v5105, %v4590
    %v5171 = vsel %vm5162, %v5106, %v4592
    %v5172 = vsel %vm5162, %v5107, %v4594
    %v5173 = vsel %vm5162, %v5108, %v4596
    %v5174 = vsel %vm5162, %v5109, %v4598
    %v5175 = vsel %vm5162, %v5110, %v4600
    %v5176 = vsel %vm5162, %v5111, %v4602
    %v5177 = vsel %vm5162, %v5112, %v4604
    %v5178 = vsel %vm5162, %v5113, %v4590
    %v5179 = vsel %vm5162, %v5114, %v4606
    %v5180 = vsel %vm5162, %v5115, %v4608
    %v5181 = vsel %vm5162, %v5116, %v4610
    %v5182 = vsel %vm5162, %v5117, %v4612
    %v5183 = vsel %vm5162, %v5118, %v4614
    %v5184 = vsel %vm5162, %v5119, %v4616
    %v5185 = vsel %vm5162, %v5120, %v4618
    %v5186 = vsel %vm5162, %v5121, %v4590
    %v5187 = vsel %vm5162, %v5122, %v4620
    %v5188 = vsel %vm5162, %v5123, %v4622
    %v5189 = vsel %vm5162, %v5124, %v4624
    %v5190 = vsel %vm5162, %v5125, %v4626
    %v5191 = vsel %vm5162, %v5126, %v4628
    %v5192 = vsel %vm5162, %v5127, %v4630
    %v5193 = vsel %vm5162, %v5128, %v4632
    %v5194 = vsel %vm5162, %v5129, %v4590
    %v5195 = vsel %vm5162, %v5130, %v4634
    %v5196 = vsel %vm5162, %v5131, %v4636
    %v5197 = vsel %vm5162, %v5132, %v4638
    %v5198 = vsel %vm5162, %v5133, %v4640
    %v5199 = vsel %vm5162, %v5134, %v4642
    %v5200 = vsel %vm5162, %v5135, %v4644
    %v5201 = vsel %vm5162, %v5136, %v4646
    %v5202 = vsel %vm5162, %v5137, %v4590
    %v5203 = vsel %vm5162, %v5138, %v4648
    %v5204 = vsel %vm5162, %v5139, %v4650
    %v5205 = vsel %vm5162, %v5140, %v4652
    %v5206 = vsel %vm5162, %v5141, %v4654
    %v5207 = vsel %vm5162, %v5142, %v4656
    %v5208 = vsel %vm5162, %v5143, %v4658
    %v5209 = vsel %vm5162, %v5144, %v4660
    %v5210 = vsel %vm5162, %v5145, %v4590
    %v5211 = vsel %vm5162, %v5146, %v4662
    %v5212 = vsel %vm5162, %v5147, %v4664
    %v5213 = vsel %vm5162, %v5148, %v4666
    %v5214 = vsel %vm5162, %v5149, %v4668
    %v5215 = vsel %vm5162, %v5150, %v4670
    %v5216 = vsel %vm5162, %v5151, %v4672
    %v5217 = vsel %vm5162, %v5152, %v4674
    %v5218 = vsel %vm5162, %v5153, %v4590
    %v5219 = vsel %vm5162, %v5154, %v4590
    %v5220 = vsel %vm5162, %v5155, %v4590
    %v5221 = vsel %vm5162, %v5156, %v4590
    %v5222 = vsel %vm5162, %v5157, %v4590
    %v5223 = vsel %vm5162, %v5158, %v4590
    %v5224 = vsel %vm5162, %v5159, %v4590
    %v5225 = vsel %vm5162, %v5160, %v4590
    %v5226 = vsel %vm5162, %v5161, %v4590
    %v5227 = vld [vmem:[%s4] sm:$0xff]
    %v5228 = vld [vmem:[%s4 + $0x8] sm:$0xff]
    %v5229 = vld [vmem:[%s4 + $0x10] sm:$0xff]
    %v5230 = vld [vmem:[%s4 + $0x18] sm:$0xff]
    %v5231 = vld [vmem:[%s4 + $0x20] sm:$0xff]
    %v5232 = vld [vmem:[%s4 + $0x28] sm:$0xff]
    %v5233 = vld [vmem:[%s4 + $0x30] sm:$0xff]
    %v5234 = vld [vmem:[%s4 + $0x38] sm:$0xff]
    %v5235 = vld [vmem:[%s4 + $0x40] sm:$0xff]
    %v5300 = vcombine.low %v5163, %v5164
    %v5301 = vcombine.low %v5165, %v5166
    %v5303 = vunpack.c.l.s4 1983009808
    %v5304 = vunpack.c.0.s8 %v5303
    %v5305 = vlaneseq
    %v5306 = vshrl.u32 %v5305, 7
    %v5307 = vsub.s32 %v5304, %v5306
    %v5308 = vrot.slane %v5300, %v5307
    %v5310 = vunpack.c.l.s4 1983009808
    %v5311 = vunpack.c.0.s8 %v5310
    %v5312 = vlaneseq
    %v5313 = vshrl.u32 %v5312, 7
    %v5314 = vsub.s32 %v5311, %v5313
    %v5315 = vrot.slane %v5301, %v5314
    %v5316 = vcombine.low %v5308, %v5315
    %v5317 = vcombine.low %v5167, %v5168
    %v5318 = vcombine.low %v5169, %v5170
    %v5320 = vunpack.c.l.s4 1983009808
    %v5321 = vunpack.c.0.s8 %v5320
    %v5322 = vlaneseq
    %v5323 = vshrl.u32 %v5322, 7
    %v5324 = vsub.s32 %v5321, %v5323
    %v5325 = vrot.slane %v5317, %v5324
    %v5327 = vunpack.c.l.s4 1983009808
    %v5328 = vunpack.c.0.s8 %v5327
    %v5329 = vlaneseq
    %v5330 = vshrl.u32 %v5329, 7
    %v5331 = vsub.s32 %v5328, %v5330
    %v5332 = vrot.slane %v5318, %v5331
    %v5333 = vcombine.low %v5325, %v5332
    %v5334 = vcombine.low %v5171, %v5172
    %v5335 = vcombine.low %v5173, %v5174
    %v5337 = vunpack.c.l.s4 1983009808
    %v5338 = vunpack.c.0.s8 %v5337
    %v5339 = vlaneseq
    %v5340 = vshrl.u32 %v5339, 7
    %v5341 = vsub.s32 %v5338, %v5340
    %v5342 = vrot.slane %v5334, %v5341
    %v5344 = vunpack.c.l.s4 1983009808
    %v5345 = vunpack.c.0.s8 %v5344
    %v5346 = vlaneseq
    %v5347 = vshrl.u32 %v5346, 7
    %v5348 = vsub.s32 %v5345, %v5347
    %v5349 = vrot.slane %v5335, %v5348
    %v5350 = vcombine.low %v5342, %v5349
    %v5351 = vcombine.low %v5175, %v5176
    %v5352 = vcombine.low %v5177, %v5178
    %v5354 = vunpack.c.l.s4 1983009808
    %v5355 = vunpack.c.0.s8 %v5354
    %v5356 = vlaneseq
    %v5357 = vshrl.u32 %v5356, 7
    %v5358 = vsub.s32 %v5355, %v5357
    %v5359 = vrot.slane %v5351, %v5358
    %v5361 = vunpack.c.l.s4 1983009808
    %v5362 = vunpack.c.0.s8 %v5361
    %v5363 = vlaneseq
    %v5364 = vshrl.u32 %v5363, 7
    %v5365 = vsub.s32 %v5362, %v5364
    %v5366 = vrot.slane %v5352, %v5365
    %v5367 = vcombine.low %v5359, %v5366
    %v5368 = vcombine.low %v5179, %v5180
    %v5369 = vcombine.low %v5181, %v5182
    %v5371 = vunpack.c.l.s4 1983009808
    %v5372 = vunpack.c.0.s8 %v5371
    %v5373 = vlaneseq
    %v5374 = vshrl.u32 %v5373, 7
    %v5375 = vsub.s32 %v5372, %v5374
    %v5376 = vrot.slane %v5368, %v5375
    %v5378 = vunpack.c.l.s4 1983009808
    %v5379 = vunpack.c.0.s8 %v5378
    %v5380 = vlaneseq
    %v5381 = vshrl.u32 %v5380, 7
    %v5382 = vsub.s32 %v5379, %v5381
    %v5383 = vrot.slane %v5369, %v5382
    %v5384 = vcombine.low %v5376, %v5383
    %v5385 = vcombine.low %v5183, %v5184
    %v5386 = vcombine.low %v5185, %v5186
    %v5388 = vunpack.c.l.s4 1983009808
    %v5389 = vunpack.c.0.s8 %v5388
    %v5390 = vlaneseq
    %v5391 = vshrl.u32 %v5390, 7
    %v5392 = vsub.s32 %v5389, %v5391
    %v5393 = vrot.slane %v5385, %v5392
    %v5395 = vunpack.c.l.s4 1983009808
    %v5396 = vunpack.c.0.s8 %v5395
    %v5397 = vlaneseq
    %v5398 = vshrl.u32 %v5397, 7
    %v5399 = vsub.s32 %v5396, %v5398
    %v5400 = vrot.slane %v5386, %v5399
    %v5401 = vcombine.low %v5393, %v5400
    %v5402 = vcombine.low %v5187, %v5188
    %v5403 = vcombine.low %v5189, %v5190
    %v5405 = vunpack.c.l.s4 1983009808
    %v5406 = vunpack.c.0.s8 %v5405
    %v5407 = vlaneseq
    %v5408 = vshrl.u32 %v5407, 7
    %v5409 = vsub.s32 %v5406, %v5408
    %v5410 = vrot.slane %v5402, %v5409
    %v5412 = vunpack.c.l.s4 1983009808
    %v5413 = vunpack.c.0.s8 %v5412
    %v5414 = vlaneseq
    %v5415 = vshrl.u32 %v5414, 7
    %v5416 = vsub.s32 %v5413, %v5415
    %v5417 = vrot.slane %v5403, %v5416
    %v5418 = vcombine.low %v5410, %v5417
    %v5419 = vcombine.low %v5191, %v5192
    %v5420 = vcombine.low %v5193, %v5194
    %v5422 = vunpack.c.l.s4 1983009808
    %v5423 = vunpack.c.0.s8 %v5422
    %v5424 = vlaneseq
    %v5425 = vshrl.u32 %v5424, 7
    %v5426 = vsub.s32 %v5423, %v5425
    %v5427 = vrot.slane %v5419, %v5426
    %v5429 = vunpack.c.l.s4 1983009808
    %v5430 = vunpack.c.0.s8 %v5429
    %v5431 = vlaneseq
    %v5432 = vshrl.u32 %v5431, 7
    %v5433 = vsub.s32 %v5430, %v5432
    %v5434 = vrot.slane %v5420, %v5433
    %v5435 = vcombine.low %v5427, %v5434
    %v5436 = vcombine.low %v5195, %v5196
    %v5437 = vcombine.low %v5197, %v5198
    %v5439 = vunpack.c.l.s4 1983009808
    %v5440 = vunpack.c.0.s8 %v5439
    %v5441 = vlaneseq
    %v5442 = vshrl.u32 %v5441, 7
    %v5443 = vsub.s32 %v5440, %v5442
    %v5444 = vrot.slane %v5436, %v5443
    %v5446 = vunpack.c.l.s4 1983009808
    %v5447 = vunpack.c.0.s8 %v5446
    %v5448 = vlaneseq
    %v5449 = vshrl.u32 %v5448, 7
    %v5450 = vsub.s32 %v5447, %v5449
    %v5451 = vrot.slane %v5437, %v5450
    %v5452 = vcombine.low %v5444, %v5451
    %v5453 = vcombine.low %v5199, %v5200
    %v5454 = vcombine.low %v5201, %v5202
    %v5456 = vunpack.c.l.s4 1983009808
    %v5457 = vunpack.c.0.s8 %v5456
    %v5458 = vlaneseq
    %v5459 = vshrl.u32 %v5458, 7
    %v5460 = vsub.s32 %v5457, %v5459
    %v5461 = vrot.slane %v5453, %v5460
    %v5463 = vunpack.c.l.s4 1983009808
    %v5464 = vunpack.c.0.s8 %v5463
    %v5465 = vlaneseq
    %v5466 = vshrl.u32 %v5465, 7
    %v5467 = vsub.s32 %v5464, %v5466
    %v5468 = vrot.slane %v5454, %v5467
    %v5469 = vcombine.low %v5461, %v5468
    %v5470 = vcombine.low %v5203, %v5204
    %v5471 = vcombine.low %v5205, %v5206
    %v5473 = vunpack.c.l.s4 1983009808
    %v5474 = vunpack.c.0.s8 %v5473
    %v5475 = vlaneseq
    %v5476 = vshrl.u32 %v5475, 7
    %v5477 = vsub.s32 %v5474, %v5476
    %v5478 = vrot.slane %v5470, %v5477
    %v5480 = vunpack.c.l.s4 1983009808
    %v5481 = vunpack.c.0.s8 %v5480
    %v5482 = vlaneseq
    %v5483 = vshrl.u32 %v5482, 7
    %v5484 = vsub.s32 %v5481, %v5483
    %v5485 = vrot.slane %v5471, %v5484
    %v5486 = vcombine.low %v5478, %v5485
    %v5487 = vcombine.low %v5207, %v5208
    %v5488 = vcombine.low %v5209, %v5210
    %v5490 = vunpack.c.l.s4 1983009808
    %v5491 = vunpack.c.0.s8 %v5490
    %v5492 = vlaneseq
    %v5493 = vshrl.u32 %v5492, 7
    %v5494 = vsub.s32 %v5491, %v5493
    %v5495 = vrot.slane %v5487, %v5494
    %v5497 = vunpack.c.l.s4 1983009808
    %v5498 = vunpack.c.0.s8 %v5497
    %v5499 = vlaneseq
    %v5500 = vshrl.u32 %v5499, 7
    %v5501 = vsub.s32 %v5498, %v5500
    %v5502 = vrot.slane %v5488, %v5501
    %v5503 = vcombine.low %v5495, %v5502
    %v5504 = vcombine.low %v5211, %v5212
    %v5505 = vcombine.low %v5213, %v5214
    %v5507 = vunpack.c.l.s4 1983009808
    %v5508 = vunpack.c.0.s8 %v5507
    %v5509 = vlaneseq
    %v5510 = vshrl.u32 %v5509, 7
    %v5511 = vsub.s32 %v5508, %v5510
    %v5512 = vrot.slane %v5504, %v5511
    %v5514 = vunpack.c.l.s4 1983009808
    %v5515 = vunpack.c.0.s8 %v5514
    %v5516 = vlaneseq
    %v5517 = vshrl.u32 %v5516, 7
    %v5518 = vsub.s32 %v5515, %v5517
    %v5519 = vrot.slane %v5505, %v5518
    %v5520 = vcombine.low %v5512, %v5519
    %v5521 = vcombine.low %v5215, %v5216
    %v5522 = vcombine.low %v5217, %v5218
    %v5524 = vunpack.c.l.s4 1983009808
    %v5525 = vunpack.c.0.s8 %v5524
    %v5526 = vlaneseq
    %v5527 = vshrl.u32 %v5526, 7
    %v5528 = vsub.s32 %v5525, %v5527
    %v5529 = vrot.slane %v5521, %v5528
    %v5531 = vunpack.c.l.s4 1983009808
    %v5532 = vunpack.c.0.s8 %v5531
    %v5533 = vlaneseq
    %v5534 = vshrl.u32 %v5533, 7
    %v5535 = vsub.s32 %v5532, %v5534
    %v5536 = vrot.slane %v5522, %v5535
    %v5537 = vcombine.low %v5529, %v5536
    %v5538 = vcombine.low %v5219, %v5220
    %v5539 = vcombine.low %v5221, %v5222
    %v5541 = vunpack.c.l.s4 1983009808
    %v5542 = vunpack.c.0.s8 %v5541
    %v5543 = vlaneseq
    %v5544 = vshrl.u32 %v5543, 7
    %v5545 = vsub.s32 %v5542, %v5544
    %v5546 = vrot.slane %v5538, %v5545
    %v5548 = vunpack.c.l.s4 1983009808
    %v5549 = vunpack.c.0.s8 %v5548
    %v5550 = vlaneseq
    %v5551 = vshrl.u32 %v5550, 7
    %v5552 = vsub.s32 %v5549, %v5551
    %v5553 = vrot.slane %v5539, %v5552
    %v5554 = vcombine.low %v5546, %v5553
    %v5555 = vcombine.low %v5223, %v5224
    %v5556 = vcombine.low %v5225, %v5226
    %v5558 = vunpack.c.l.s4 1983009808
    %v5559 = vunpack.c.0.s8 %v5558
    %v5560 = vlaneseq
    %v5561 = vshrl.u32 %v5560, 7
    %v5562 = vsub.s32 %v5559, %v5561
    %v5563 = vrot.slane %v5555, %v5562
    %v5565 = vunpack.c.l.s4 1983009808
    %v5566 = vunpack.c.0.s8 %v5565
    %v5567 = vlaneseq
    %v5568 = vshrl.u32 %v5567, 7
    %v5569 = vsub.s32 %v5566, %v5568
    %v5570 = vrot.slane %v5556, %v5569
    %v5571 = vcombine.low %v5563, %v5570
    %vm5572 = vcmask 588800
    %v5573 = vsel %vm5572, %v5316, 0
    %v5575 = vsel %vm5572, %v5333, 0
    %v5577 = vsel %vm5572, %v5350, 0
    %v5579 = vsel %vm5572, %v5367, 0
    %v5581 = vsel %vm5572, %v5384, 0
    %v5583 = vsel %vm5572, %v5401, 0
    %v5585 = vsel %vm5572, %v5418, 0
    %v5587 = vsel %vm5572, %v5435, 0
    %v5589 = vsel %vm5572, %v5452, 0
    %v5591 = vsel %vm5572, %v5469, 0
    %v5593 = vsel %vm5572, %v5486, 0
    %v5595 = vsel %vm5572, %v5503, 0
    %v5597 = vsel %vm5572, %v5520, 0
    %v5599 = vsel %vm5572, %v5537, 0
    %v5601 = vsel %vm5572, %v5554, 0
    %v5603 = vsel %vm5572, %v5571, 0
    %5605 = vmatprep.subr.mxu0 0.0
    %5606 = vmatpush1.msra.mxu0 %v5227
    %5607 = vmatprep.subr.mxu0 0.0
    %5608 = vmatpush1.msra.mxu0 %v5228
    %5609 = vmatprep.subr.mxu0 0.0
    %5610 = vmatpush1.msra.mxu0 %v5229
    %5611 = vmatprep.subr.mxu0 0.0
    %5612 = vmatpush1.msra.mxu0 %v5230
    %5613 = vmatprep.subr.mxu0 0.0
    %5614 = vmatpush1.msra.mxu0 %v5231
    %5615 = vmatprep.subr.mxu0 0.0
    %5616 = vmatpush1.msra.mxu0 %v5232
    %5617 = vmatprep.subr.mxu0 0.0
    %5618 = vmatpush1.msra.mxu0 %v5233
    %5619 = vmatprep.subr.mxu0 0.0
    %5620 = vmatpush1.msra.mxu0 %v5234
    %5621 = vmatprep.subr.mxu0 0.0
    %5622 = vmatpush1.msra.mxu0 %v5235
    %5623 = vmatprep.subr.mxu0 0.0
    %5624 = vmatpush1.msra.mxu0 0.0
    %5625 = vmatprep.subr.mxu0 0.0
    %5626 = vmatpush1.msra.mxu0 0.0
    %5627 = vmatprep.subr.mxu0 0.0
    %5628 = vmatpush1.msra.mxu0 0.0
    %5629 = vmatprep.subr.mxu0 0.0
    %5630 = vmatpush1.msra.mxu0 0.0
    %5631 = vmatprep.subr.mxu0 0.0
    %5632 = vmatpush1.msra.mxu0 0.0
    %5633 = vmatprep.subr.mxu0 0.0
    %5634 = vmatpush1.msra.mxu0 0.0
    %5635 = vmatprep.subr.mxu0 0.0
    %5636 = vmatpush1.msra.mxu0 0.0
    %5637 = vmatprep.subr.mxu0 0.0
    %5638 = vmatpush1.msra.mxu0 0.0
    %5639 = vmatprep.subr.mxu0 0.0
    %5640 = vmatpush1.msra.mxu0 0.0
    %5641 = vmatprep.subr.mxu0 0.0
    %5642 = vmatpush1.msra.mxu0 0.0
    %5643 = vmatprep.subr.mxu0 0.0
    %5644 = vmatpush1.msra.mxu0 0.0
    %5645 = vmatprep.subr.mxu0 0.0
    %5646 = vmatpush1.msra.mxu0 0.0
    %5647 = vmatprep.subr.mxu0 0.0
    %5648 = vmatpush1.msra.mxu0 0.0
    %5649 = vmatprep.subr.mxu0 0.0
    %5650 = vmatpush1.msra.mxu0 0.0
    %5651 = vmatprep.subr.mxu0 0.0
    %5652 = vmatpush1.msra.mxu0 0.0
    %5653 = vmatprep.subr.mxu0 0.0
    %5654 = vmatpush1.msra.mxu0 0.0
    %5655 = vmatprep.subr.mxu0 0.0
    %5656 = vmatpush1.msra.mxu0 0.0
    %5657 = vmatprep.subr.mxu0 0.0
    %5658 = vmatpush1.msra.mxu0 0.0
    %5659 = vmatprep.subr.mxu0 0.0
    %5660 = vmatpush1.msra.mxu0 0.0
    %5661 = vmatprep.subr.mxu0 0.0
    %5662 = vmatpush1.msra.mxu0 0.0
    %5663 = vmatprep.subr.mxu0 0.0
    %5664 = vmatpush1.msra.mxu0 0.0
    %5665 = vmatprep.subr.mxu0 0.0
    %5666 = vmatpush1.msra.mxu0 0.0
    %5667 = vmatprep.subr.mxu0 0.0
    %5668 = vmatpush1.msra.mxu0 0.0
    %5669 = vmatprep.mubr.f32.mxu0 0.0
    %5670 = vmatmul.mubr.f32.gmra.mrb[0].mxu0 %v5573
    %v5671 = vpop.f32.mrb[0].mxu0
    %v5672 = vadd.f32 0.0, %v5671
    %v5673 = vpop.f32.mrb[0].mxu0
    %5674 = vmatprep.mubr.f32.mxu0 0.0
    %5675 = vmatmul.mubr.f32.gmra.mrb[0].mxu0 %v5575
    %v5676 = vpop.f32.mrb[0].mxu0
    %v5677 = vadd.f32 0.0, %v5676
    %v5678 = vpop.f32.mrb[0].mxu0
    %5679 = vmatprep.mubr.f32.mxu0 0.0
    %5680 = vmatmul.mubr.f32.gmra.mrb[0].mxu0 %v5577
    %v5681 = vpop.f32.mrb[0].mxu0
    %v5682 = vadd.f32 0.0, %v5681
    %v5683 = vpop.f32.mrb[0].mxu0
    %5684 = vmatprep.mubr.f32.mxu0 0.0
    %5685 = vmatmul.mubr.f32.gmra.mrb[0].mxu0 %v5579
    %v5686 = vpop.f32.mrb[0].mxu0
    %v5687 = vadd.f32 0.0, %v5686
    %v5688 = vpop.f32.mrb[0].mxu0
    %5689 = vmatprep.mubr.f32.mxu0 0.0
    %5690 = vmatmul.mubr.f32.gmra.mrb[0].mxu0 %v5581
    %v5691 = vpop.f32.mrb[0].mxu0
    %v5692 = vadd.f32 0.0, %v5691
    %v5693 = vpop.f32.mrb[0].mxu0
    %5694 = vmatprep.mubr.f32.mxu0 0.0
    %5695 = vmatmul.mubr.f32.gmra.mrb[0].mxu0 %v5583
    %v5696 = vpop.f32.mrb[0].mxu0
    %v5697 = vadd.f32 0.0, %v5696
    %v5698 = vpop.f32.mrb[0].mxu0
    %5699 = vmatprep.mubr.f32.mxu0 0.0
    %5700 = vmatmul.mubr.f32.gmra.mrb[0].mxu0 %v5585
    %v5701 = vpop.f32.mrb[0].mxu0
    %v5702 = vadd.f32 0.0, %v5701
    %v5703 = vpop.f32.mrb[0].mxu0
    %5704 = vmatprep.mubr.f32.mxu0 0.0
    %5705 = vmatmul.mubr.f32.gmra.mrb[0].mxu0 %v5587
    %v5706 = vpop.f32.mrb[0].mxu0
    %v5707 = vadd.f32 0.0, %v5706
    %v5708 = vpop.f32.mrb[0].mxu0
    %5709 = vmatprep.mubr.f32.mxu0 0.0
    %5710 = vmatmul.mubr.f32.gmra.mrb[0].mxu0 %v5589
    %v5711 = vpop.f32.mrb[0].mxu0
    %v5712 = vadd.f32 0.0, %v5711
    %v5713 = vpop.f32.mrb[0].mxu0
    %5714 = vmatprep.mubr.f32.mxu0 0.0
    %5715 = vmatmul.mubr.f32.gmra.mrb[0].mxu0 %v5591
    %v5716 = vpop.f32.mrb[0].mxu0
    %v5717 = vadd.f32 0.0, %v5716
    %v5718 = vpop.f32.mrb[0].mxu0
    %5719 = vmatprep.mubr.f32.mxu0 0.0
    %5720 = vmatmul.mubr.f32.gmra.mrb[0].mxu0 %v5593
    %v5721 = vpop.f32.mrb[0].mxu0
    %v5722 = vadd.f32 0.0, %v5721
    %v5723 = vpop.f32.mrb[0].mxu0
    %5724 = vmatprep.mubr.f32.mxu0 0.0
    %5725 = vmatmul.mubr.f32.gmra.mrb[0].mxu0 %v5595
    %v5726 = vpop.f32.mrb[0].mxu0
    %v5727 = vadd.f32 0.0, %v5726
    %v5728 = vpop.f32.mrb[0].mxu0
    %5729 = vmatprep.mubr.f32.mxu0 0.0
    %5730 = vmatmul.mubr.f32.gmra.mrb[0].mxu0 %v5597
    %v5731 = vpop.f32.mrb[0].mxu0
    %v5732 = vadd.f32 0.0, %v5731
    %v5733 = vpop.f32.mrb[0].mxu0
    %5734 = vmatprep.mubr.f32.mxu0 0.0
    %5735 = vmatmul.mubr.f32.gmra.mrb[0].mxu0 %v5599
    %v5736 = vpop.f32.mrb[0].mxu0
    %v5737 = vadd.f32 0.0, %v5736
    %v5738 = vpop.f32.mrb[0].mxu0
    %5739 = vmatprep.mubr.f32.mxu0 0.0
    %5740 = vmatmul.mubr.f32.gmra.mrb[0].mxu0 %v5601
    %v5741 = vpop.f32.mrb[0].mxu0
    %v5742 = vadd.f32 0.0, %v5741
    %v5743 = vpop.f32.mrb[0].mxu0
    %5744 = vmatprep.mubr.f32.mxu0 0.0
    %5745 = vmatmul.mubr.f32.gmra.mrb[0].mxu0 %v5603
    %v5746 = vpop.f32.mrb[0].mxu0
    %v5747 = vadd.f32 0.0, %v5746
    %v5748 = vpop.f32.mrb[0].mxu0
    %5749 = vdwg.mxu0
    %v5750 = vsel %vm1924, %v5672, 0.0
    %v5751 = vsel %vm1924, %v5677, 0.0
    %v5752 = vadd.f32 %v5750, %v5751
    %v5753 = vsel %vm1924, %v5682, 0.0
    %v5754 = vadd.f32 %v5752, %v5753
    %v5755 = vsel %vm1924, %v5687, 0.0
    %v5756 = vadd.f32 %v5754, %v5755
    %v5757 = vsel %vm1924, %v5692, 0.0
    %v5758 = vadd.f32 %v5756, %v5757
    %v5759 = vsel %vm1924, %v5697, 0.0
    %v5760 = vadd.f32 %v5758, %v5759
    %v5761 = vsel %vm1924, %v5702, 0.0
    %v5762 = vadd.f32 %v5760, %v5761
    %v5763 = vsel %vm1924, %v5707, 0.0
    %v5764 = vadd.f32 %v5762, %v5763
    %v5765 = vsel %vm1924, %v5712, 0.0
    %v5766 = vadd.f32 %v5764, %v5765
    %v5767 = vsel %vm1924, %v5717, 0.0
    %v5768 = vadd.f32 %v5766, %v5767
    %v5769 = vsel %vm1924, %v5722, 0.0
    %v5770 = vadd.f32 %v5768, %v5769
    %v5771 = vsel %vm1924, %v5727, 0.0
    %v5772 = vadd.f32 %v5770, %v5771
    %v5773 = vsel %vm1924, %v5732, 0.0
    %v5774 = vadd.f32 %v5772, %v5773
    %v5775 = vsel %vm1924, %v5737, 0.0
    %v5776 = vadd.f32 %v5774, %v5775
    %v5777 = vsel %vm1924, %v5742, 0.0
    %v5778 = vadd.f32 %v5776, %v5777
    %v5779 = vsel %vm1924, %v5747, 0.0
    %v5780 = vadd.f32 %v5778, %v5779
    %v5781 = vrot.slane %v5780, 4
    %v5782 = vadd.f32 %v5780, %v5781
    %v5783 = vrot.slane %v5782, 2
    %v5784 = vadd.f32 %v5782, %v5783
    %v5785 = vrot.slane %v5784, 1
    %v5786 = vadd.f32 %v5784, %v5785
    %v5787 = vmul.f32 %v5672, %v5672
    %v5788 = vmul.f32 %v5677, %v5677
    %v5789 = vmul.f32 %v5682, %v5682
    %v5790 = vmul.f32 %v5687, %v5687
    %v5791 = vmul.f32 %v5692, %v5692
    %v5792 = vmul.f32 %v5697, %v5697
    %v5793 = vmul.f32 %v5702, %v5702
    %v5794 = vmul.f32 %v5707, %v5707
    %v5795 = vmul.f32 %v5712, %v5712
    %v5796 = vmul.f32 %v5717, %v5717
    %v5797 = vmul.f32 %v5722, %v5722
    %v5798 = vmul.f32 %v5727, %v5727
    %v5799 = vmul.f32 %v5732, %v5732
    %v5800 = vmul.f32 %v5737, %v5737
    %v5801 = vmul.f32 %v5742, %v5742
    %v5802 = vmul.f32 %v5747, %v5747
    %v5803 = vsel %vm1924, %v5787, 0.0
    %v5804 = vsel %vm1924, %v5788, 0.0
    %v5805 = vadd.f32 %v5803, %v5804
    %v5806 = vsel %vm1924, %v5789, 0.0
    %v5807 = vadd.f32 %v5805, %v5806
    %v5808 = vsel %vm1924, %v5790, 0.0
    %v5809 = vadd.f32 %v5807, %v5808
    %v5810 = vsel %vm1924, %v5791, 0.0
    %v5811 = vadd.f32 %v5809, %v5810
    %v5812 = vsel %vm1924, %v5792, 0.0
    %v5813 = vadd.f32 %v5811, %v5812
    %v5814 = vsel %vm1924, %v5793, 0.0
    %v5815 = vadd.f32 %v5813, %v5814
    %v5816 = vsel %vm1924, %v5794, 0.0
    %v5817 = vadd.f32 %v5815, %v5816
    %v5818 = vsel %vm1924, %v5795, 0.0
    %v5819 = vadd.f32 %v5817, %v5818
    %v5820 = vsel %vm1924, %v5796, 0.0
    %v5821 = vadd.f32 %v5819, %v5820
    %v5822 = vsel %vm1924, %v5797, 0.0
    %v5823 = vadd.f32 %v5821, %v5822
    %v5824 = vsel %vm1924, %v5798, 0.0
    %v5825 = vadd.f32 %v5823, %v5824
    %v5826 = vsel %vm1924, %v5799, 0.0
    %v5827 = vadd.f32 %v5825, %v5826
    %v5828 = vsel %vm1924, %v5800, 0.0
    %v5829 = vadd.f32 %v5827, %v5828
    %v5830 = vsel %vm1924, %v5801, 0.0
    %v5831 = vadd.f32 %v5829, %v5830
    %v5832 = vsel %vm1924, %v5802, 0.0
    %v5833 = vadd.f32 %v5831, %v5832
    %v5834 = vrot.slane %v5833, 4
    %v5835 = vadd.f32 %v5833, %v5834
    %v5836 = vrot.slane %v5835, 2
    %v5837 = vadd.f32 %v5835, %v5836
    %v5838 = vrot.slane %v5837, 1
    %v5839 = vadd.f32 %v5837, %v5838
    %v5840 = vmul.f32 %v5786, 0.0078125
    %v5841 = vmul.f32 %v5839, 0.0078125
    %v5842 = vmul.f32 %v5840, %v5840
    %v5843 = vsub.f32 %v5841, %v5842
    %v5844 = vadd.f32 %v5843, 1e-05
    %v5845 = vrsqrt.pop %v5844
    %v5846 = vld [vmem:[%s5] sm:$0x1]
    %v5847 = vmul.f32 %v5845, %v5846
    %v5848 = vsub.f32 %v5672, %v5840
    %v5849 = vsub.f32 %v5677, %v5840
    %v5850 = vsub.f32 %v5682, %v5840
    %v5851 = vsub.f32 %v5687, %v5840
    %v5852 = vsub.f32 %v5692, %v5840
    %v5853 = vsub.f32 %v5697, %v5840
    %v5854 = vsub.f32 %v5702, %v5840
    %v5855 = vsub.f32 %v5707, %v5840
    %v5856 = vsub.f32 %v5712, %v5840
    %v5857 = vsub.f32 %v5717, %v5840
    %v5858 = vsub.f32 %v5722, %v5840
    %v5859 = vsub.f32 %v5727, %v5840
    %v5860 = vsub.f32 %v5732, %v5840
    %v5861 = vsub.f32 %v5737, %v5840
    %v5862 = vsub.f32 %v5742, %v5840
    %v5863 = vsub.f32 %v5747, %v5840
    %v5864 = vlaneseq
    %v5865 = vshrl.u32 %v5864, 7
    %v5866 = vsub.s32 0, %v5865
    %v5867 = vrot.slane %v5847, %v5866
    %v5868 = vmul.f32 %v5848, %v5867
    %v5869 = vmul.f32 %v5849, %v5867
    %v5870 = vmul.f32 %v5850, %v5867
    %v5871 = vmul.f32 %v5851, %v5867
    %v5872 = vmul.f32 %v5852, %v5867
    %v5873 = vmul.f32 %v5853, %v5867
    %v5874 = vmul.f32 %v5854, %v5867
    %v5875 = vmul.f32 %v5855, %v5867
    %v5876 = vmul.f32 %v5856, %v5867
    %v5877 = vmul.f32 %v5857, %v5867
    %v5878 = vmul.f32 %v5858, %v5867
    %v5879 = vmul.f32 %v5859, %v5867
    %v5880 = vmul.f32 %v5860, %v5867
    %v5881 = vmul.f32 %v5861, %v5867
    %v5882 = vmul.f32 %v5862, %v5867
    %v5883 = vmul.f32 %v5863, %v5867
    %v5884 = vld [vmem:[%s6] sm:$0x1]
    %v5886 = vlaneseq
    %v5887 = vshrl.u32 %v5886, 7
    %v5888 = vsub.s32 0, %v5887
    %v5889 = vrot.slane %v5884, %v5888
    %v5891 = vadd.f32 %v5868, %v5889
    %v5892 = vadd.f32 %v5869, %v5889
    %v5893 = vadd.f32 %v5870, %v5889
    %v5894 = vadd.f32 %v5871, %v5889
    %v5895 = vadd.f32 %v5872, %v5889
    %v5896 = vadd.f32 %v5873, %v5889
    %v5897 = vadd.f32 %v5874, %v5889
    %v5898 = vadd.f32 %v5875, %v5889
    %v5899 = vadd.f32 %v5876, %v5889
    %v5900 = vadd.f32 %v5877, %v5889
    %v5901 = vadd.f32 %v5878, %v5889
    %v5902 = vadd.f32 %v5879, %v5889
    %v5903 = vadd.f32 %v5880, %v5889
    %v5904 = vadd.f32 %v5881, %v5889
    %v5905 = vadd.f32 %v5882, %v5889
    %v5906 = vadd.f32 %v5883, %v5889
    %v5907 = vmax.f32 %v5891, 0.0
    %v5908 = vmax.f32 %v5892, 0.0
    %v5909 = vmax.f32 %v5893, 0.0
    %v5910 = vmax.f32 %v5894, 0.0
    %v5911 = vmax.f32 %v5895, 0.0
    %v5912 = vmax.f32 %v5896, 0.0
    %v5913 = vmax.f32 %v5897, 0.0
    %v5914 = vmax.f32 %v5898, 0.0
    %v5915 = vmax.f32 %v5899, 0.0
    %v5916 = vmax.f32 %v5900, 0.0
    %v5917 = vmax.f32 %v5901, 0.0
    %v5918 = vmax.f32 %v5902, 0.0
    %v5919 = vmax.f32 %v5903, 0.0
    %v5920 = vmax.f32 %v5904, 0.0
    %v5921 = vmax.f32 %v5905, 0.0
    %v5922 = vmax.f32 %v5906, 0.0
    %5923 = vxpose.xlu0.b32.start [1/16] %v5907, 128
    %5924 = vxpose.xlu0.b32.cont [2/16] %v5908, 128
    %5925 = vxpose.xlu0.b32.cont [3/16] %v5909, 128
    %5926 = vxpose.xlu0.b32.cont [4/16] %v5910, 128
    %5927 = vxpose.xlu0.b32.cont [5/16] %v5911, 128
    %5928 = vxpose.xlu0.b32.cont [6/16] %v5912, 128
    %5929 = vxpose.xlu0.b32.cont [7/16] %v5913, 128
    %5930 = vxpose.xlu0.b32.cont [8/16] %v5914, 128
    %5931 = vxpose.xlu0.b32.cont [9/16] %v5915, 128
    %5932 = vxpose.xlu0.b32.cont [10/16] %v5916, 128
    %5933 = vxpose.xlu0.b32.cont [11/16] %v5917, 128
    %5934 = vxpose.xlu0.b32.cont [12/16] %v5918, 128
    %5935 = vxpose.xlu0.b32.cont [13/16] %v5919, 128
    %5936 = vxpose.xlu0.b32.cont [14/16] %v5920, 128
    %5937 = vxpose.xlu0.b32.cont [15/16] %v5921, 128
    %5938 = vxpose.xlu0.b32.end [16/16] %v5922, 128
    %v5939 = vpop.trf.xlu0
    %v5940 = vpop.trf.xlu0
    %v5941 = vpop.trf.xlu0
    %v5942 = vpop.trf.xlu0
    %v5943 = vpop.trf.xlu0
    %v5944 = vpop.trf.xlu0
    %v5945 = vpop.trf.xlu0
    %v5946 = vpop.trf.xlu0
    %v5947 = vpop.trf.xlu0
    %v5948 = vpop.trf.xlu0
    %v5949 = vpop.trf.xlu0
    %v5950 = vpop.trf.xlu0
    %v5951 = vpop.trf.xlu0
    %v5952 = vpop.trf.xlu0
    %v5953 = vpop.trf.xlu0
    %v5954 = vpop.trf.xlu0
    %5955 = vst [vmem:[#allocation2] sm:$0xff] %v5939
    // Predicated region
    $region30: #{tpu_custom_call.1} parent=1 // pred_check
      _
    $region31: #{tpu_custom_call.1} parent=1 // pred_check_branch
      %5957 = sbr.rel (0) target = $region33
    $region32: #{tpu_custom_call.1} parent=1 // pred_region
      %s5959 = ssub.s32 128, 128
      %5960 = vsyncadd [#allocation3], %s5959
      %s5962 = sshll.u32 [#allocation2], 4
      %s5963 = int_to_ptr.vmem [resolvable:$true] %s5962
      %5965 = dma.vmem_to_hbm [thread:$0]  %s5963, 128, %s7, [#allocation3]
    $region33: #{tpu_custom_call.1} parent=1 // pred_fallthru
      _
    // Predicated region
    $region34: #{tpu_custom_call.1} parent=1 // pred_check
      _
    $region35: #{tpu_custom_call.1} parent=1 // pred_check_branch
      %5967 = sbr.rel (0) target = $region37
    $region36: #{tpu_custom_call.1} parent=1 // pred_region
      %5968 = dma.done [#allocation3], 128
    $region37: #{tpu_custom_call.1} parent=1 // pred_fallthru
      _
    %5969 = vsyncpa [#allocation3], 1

</llo_original>
